<compile_context>
chip_gen: v5e
topology: v5e:2x2
jax: 0.10.0
libtpu: 0.0.40
codegen_flags: <defaults>
</compile_context>

<pallas_src>
import jax
import jax.numpy as jnp
import numpy as np
from jax.experimental import pallas as pl
from jax.experimental.pallas import tpu as pltpu

# ---------------- model sizes ----------------
RNN_SIZE = 32          # H
MLP_HIDDEN = 500       # hardcoded in the torch module (linear_1 / linear_2)
VOCAB = 50

MASK_MEAN_VAL = -999.0
MASK_STD_VAL = 0.001

MAX_TILE_ROWS = 2048               # (tgt rows per grid step) * S, sized for v7x VMEM
VMEM_LIMIT_BYTES = 40 * 1024 * 1024


def _round_up(x, m):
    return ((x + m - 1) // m) * m


def _pick_act_dtype():
    """bf16 softplus path on v6e/v7x (bf16 VPU/EUP); f32 on v5e and older."""
    try:
        kind = jax.devices()[0].device_kind.lower()
    except Exception:
        return jnp.float32
    if "v6" in kind or "v7" in kind:
        return jnp.bfloat16
    return jnp.float32


ACT_DTYPE = _pick_act_dtype()


def _softplus(x):
    # matches torch.nn.Softplus(beta=1, threshold=20); dtype preserving
    return jnp.where(x > 20.0, x, jnp.log1p(jnp.exp(jnp.minimum(x, 20.0))))


def _choose_row_tile(T, S):
    """Target rows per grid step; TT*S rows feed the 512x512 layer-2 matmul."""
    tt = max(1, MAX_TILE_ROWS // max(S, 1))
    if tt >= T:
        return T                                   # single tile (block == full dim)
    return min(max(8, (tt // 8) * 8), T)           # keep sublane (x8) alignment


# ---------------- Pallas kernel (grid = (B, T_pad // TT)) ----------------
def _infnet_kernel(lens_ref, scal_ref,             # SMEM: [B] i32 lengths, [6] f32 scalars
                   h_t_ref, h_s_ref,               # VMEM: [TT,H], [S,H] bf16
                   w1t_ref, w1s_ref, b1_ref,       # [H,FP] bf16, [H,FP] bf16, [1,FP] f32
                   w2_ref, b2_ref,                 # [FP,FP] bf16, [1,FP] f32
                   wh_ref,                         # [2,FP]  f32  (w_mean ; w_std)
                   out_ref):                       # [2, TT, S_PAD] f32 (mean, std)
    TT, H = h_t_ref.shape
    S = h_s_ref.shape[0]
    FP = w2_ref.shape[0]
    S_PAD = out_ref.shape[-1]
    b = pl.program_id(0)

    # ---- layer 1: concat(h_t, h_s) @ W1^T + b1 == h_t@W1t + h_s@W1s + b1
    a = (jnp.dot(h_t_ref[...], w1t_ref[...],
                 preferred_element_type=jnp.float32) + b1_ref[...]).astype(ACT_DTYPE)
    c = jnp.dot(h_s_ref[...], w1s_ref[...],
                preferred_element_type=jnp.float32).astype(ACT_DTYPE)
    h1 = _softplus(a[:, None, :] + c[None, :, :]).reshape(TT * S, FP)   # (TT*S, FP)

    # ---- layer 2 (bf16 MXU operands, f32 accumulation)
    pre2 = (jnp.dot(h1.astype(jnp.bfloat16), w2_ref[...],
                    preferred_element_type=jnp.float32) + b2_ref[...])
    h2 = _softplus(pre2.astype(ACT_DTYPE)).astype(jnp.float32).reshape(TT, S, FP)

    # ---- mean/std heads: VPU multiply + lane reduce, lands directly in (TT, S)
    #      layout (avoids the [FP,2] MXU pass and the column-slice relayout)
    wm = wh_ref[0:1, :].reshape(1, 1, FP)
    ws = wh_ref[1:2, :].reshape(1, 1, FP)
    h_mean = jnp.sum(h2 * wm, axis=-1) + scal_ref[4]                    # (TT, S) f32
    h_std = jnp.sum(h2 * ws, axis=-1) + scal_ref[5]

    # ---- 'ln' normalization over src dim (torch.std is unbiased, ddof=1).
    #      NOTE: no epsilon, mirroring the torch code -> requires S >= 2 and
    #      non-constant rows (documented precondition).
    def _row_norm(x, alpha, beta):
        mu = jnp.mean(x, axis=-1, keepdims=True)
        var = jnp.sum((x - mu) ** 2, axis=-1, keepdims=True) / (S - 1)
        return alpha * (x - mu) * jax.lax.rsqrt(var) + beta

    h_mean = _row_norm(h_mean, scal_ref[0], scal_ref[1])
    h_std = _softplus(_row_norm(h_std, scal_ref[2], scal_ref[3]))

    # ---- src-length masking from SMEM lengths; lanes S..S_PAD (padding) have
    #      col >= S >= length so they also receive the mask values.
    if S_PAD > S:
        zpad = jnp.zeros((TT, S_PAD - S), jnp.float32)
        h_mean = jnp.concatenate([h_mean, zpad], axis=-1)
        h_std = jnp.concatenate([h_std, zpad], axis=-1)
    col = jax.lax.broadcasted_iota(jnp.int32, (TT, S_PAD), 1)
    valid = col < lens_ref[b]
    h_mean = jnp.where(valid, h_mean, MASK_MEAN_VAL)
    h_std = jnp.where(valid, h_std, MASK_STD_VAL)

    # single lane-dense store (S_PAD is a multiple of 128)
    out_ref[...] = jnp.concatenate([h_mean[None], h_std[None]], axis=0)


# ---------------- wrapper around pallas_call ----------------
def inference_network_scores(h_t, h_s, src_lengths, packed):
    """h_t: [B,T,H] bf16, h_s: [B,S,H] bf16, src_lengths: [B] -> [mean, std]."""
    B, T, H = h_t.shape
    S = h_s.shape[1]
    FP = packed["w2"].shape[0]
    TT = _choose_row_tile(T, S)
    T_pad = _round_up(T, TT)
    S_PAD = _round_up(S, 128)
    if T_pad > T:
        h_t = jnp.pad(h_t, ((0, 0), (0, T_pad - T), (0, 0)))

    rows = B * T_pad * S
    cost = pl.CostEstimate(
        flops=int(2 * (B * T_pad + B * S) * H * FP + 2 * rows * FP * FP + 4 * rows * FP),
        transcendentals=int(4 * rows * FP + 2 * rows),
        bytes_accessed=int(h_t.size * 2 + h_s.size * 2
                           + (packed["w1t"].size + packed["w1s"].size
                              + packed["w2"].size) * 2
                           + (packed["b1"].size + packed["b2"].size
                              + packed["wh"].size) * 4
                           + 2 * B * T_pad * S_PAD * 4),
    )

    grid_spec = pltpu.PrefetchScalarGridSpec(
        num_scalar_prefetch=1,                                            # src_lengths
        grid=(B, T_pad // TT),
        in_specs=[
            pl.BlockSpec(memory_space=pltpu.MemorySpace.SMEM),            # scal (6,)
            pl.BlockSpec((None, TT, H), lambda b, t, lens: (b, t, 0)),    # h_t tile
            pl.BlockSpec((None, S, H), lambda b, t, lens: (b, 0, 0)),     # h_s (per batch)
            pl.BlockSpec((H, FP), lambda b, t, lens: (0, 0)),             # W1t  (resident)
            pl.BlockSpec((H, FP), lambda b, t, lens: (0, 0)),             # W1s  (resident)
            pl.BlockSpec((1, FP), lambda b, t, lens: (0, 0)),             # b1
            pl.BlockSpec((FP, FP), lambda b, t, lens: (0, 0)),            # W2   (resident)
            pl.BlockSpec((1, FP), lambda b, t, lens: (0, 0)),             # b2
            pl.BlockSpec((2, FP), lambda b, t, lens: (0, 0)),             # [w_mean; w_std]
        ],
        out_specs=pl.BlockSpec((2, None, TT, S_PAD),
                               lambda b, t, lens: (0, b, t, 0)),
    )

    out = pl.pallas_call(
        _infnet_kernel,
        grid_spec=grid_spec,
        out_shape=jax.ShapeDtypeStruct((2, B, T_pad, S_PAD), jnp.float32),
        compiler_params=pltpu.CompilerParams(
            dimension_semantics=("parallel", "parallel"),
            vmem_limit_bytes=VMEM_LIMIT_BYTES),
        cost_estimate=cost,
    )(src_lengths.astype(jnp.int32), packed["scal"],
      h_t, h_s,
      packed["w1t"], packed["w1s"], packed["b1"],
      packed["w2"], packed["b2"], packed["wh"])

    return [out[0, :, :T, :S], out[1, :, :T, :S]]


@jax.jit
def inference_network_forward(tgt, memory_bank, src_lengths, packed):
    """tgt: [T,B] int32 tokens, memory_bank: [S,B,H] f32, src_lengths: [B]."""
    h_t = jnp.transpose(packed["emb"][tgt], (1, 0, 2))                    # [B,T,H] bf16
    h_s = jnp.transpose(memory_bank, (1, 0, 2)).astype(jnp.bfloat16)      # [B,S,H] bf16
    return inference_network_scores(h_t, h_s, src_lengths, packed)


# ---------------- one-time weight packing (hoisted out of the call path) -------
def prepare_params(raw):
    """torch [out,in] -> [in,out], pad F 500->512, bf16 MXU operands, fused heads."""
    H, F = RNN_SIZE, MLP_HIDDEN
    FP = _round_up(F, 128)
    W1, b1, W2, b2 = raw["W1"], raw["b1"], raw["W2"], raw["b2"]
    return {
        "emb": raw["embedding"].astype(jnp.bfloat16),
        "w1t": jnp.pad(W1[:, :H].T, ((0, 0), (0, FP - F))).astype(jnp.bfloat16),
        "w1s": jnp.pad(W1[:, H:].T, ((0, 0), (0, FP - F))).astype(jnp.bfloat16),
        "b1": jnp.pad(b1, (0, FP - F)).reshape(1, FP).astype(jnp.float32),
        "w2": jnp.pad(W2.T, ((0, FP - F), (0, FP - F))).astype(jnp.bfloat16),
        "b2": jnp.pad(b2, (0, FP - F)).reshape(1, FP).astype(jnp.float32),
        "wh": jnp.pad(jnp.concatenate([raw["w_mean"], raw["w_std"]], axis=0),
                      ((0, 0), (0, FP - F))).astype(jnp.float32),          # [2, FP]
        # [mean_alpha, mean_beta, std_alpha, std_beta, b_mean, b_std]
        "scal": jnp.concatenate([raw["ln_params"], raw["b_mean"],
                                 raw["b_std"]]).astype(jnp.float32),
    }


# ---------------- pure-JAX reference (mirrors the kernel's precision policy) ---
# NOTE: this check validates the Pallas plumbing (tiling, DMA, masking, layout),
#       not true f32/torch numerics (same bf16-MXU / split layer-1 policy).
def reference_forward(tgt, memory_bank, src_lengths, packed):
    h_t = jnp.transpose(packed["emb"][tgt], (1, 0, 2))
    h_s = jnp.transpose(memory_bank, (1, 0, 2)).astype(jnp.bfloat16)
    B, S, H = h_s.shape
    T = h_t.shape[1]
    FP = packed["w2"].shape[0]
    scal = packed["scal"]

    a = (jnp.dot(h_t.reshape(B * T, H), packed["w1t"],
                 preferred_element_type=jnp.float32)
         + packed["b1"]).astype(ACT_DTYPE).reshape(B, T, 1, FP)
    c = jnp.dot(h_s.reshape(B * S, H), packed["w1s"],
                preferred_element_type=jnp.float32).astype(ACT_DTYPE).reshape(B, 1, S, FP)
    h1 = _softplus(a + c).reshape(B * T * S, FP)
    pre2 = jnp.dot(h1.astype(jnp.bfloat16), packed["w2"],
                   preferred_element_type=jnp.float32) + packed["b2"]
    h2 = _softplus(pre2.astype(ACT_DTYPE)).astype(jnp.float32).reshape(B, T, S, FP)

    h_mean = jnp.sum(h2 * packed["wh"][0].reshape(1, 1, 1, FP), axis=-1) + scal[4]
    h_std = jnp.sum(h2 * packed["wh"][1].reshape(1, 1, 1, FP), axis=-1) + scal[5]

    def _row_norm(x, alpha, beta):
        mu = jnp.mean(x, axis=-1, keepdims=True)
        var = jnp.sum((x - mu) ** 2, axis=-1, keepdims=True) / (S - 1)
        return alpha * (x - mu) * jax.lax.rsqrt(var) + beta

    h_mean = _row_norm(h_mean, scal[0], scal[1])
    h_std = _softplus(_row_norm(h_std, scal[2], scal[3]))
    valid = (jnp.arange(S)[None, :] < src_lengths[:, None])[:, None, :]
    return [jnp.where(valid, h_mean, MASK_MEAN_VAL),
            jnp.where(valid, h_std, MASK_STD_VAL)]


def init_params(key):
    H, F = RNN_SIZE, MLP_HIDDEN
    ks = jax.random.split(key, 9)
    u = lambda k, shp, fan_in: jax.random.uniform(
        k, shp, jnp.float32, -1.0 / np.sqrt(fan_in), 1.0 / np.sqrt(fan_in))
    return {
        "embedding": jax.random.normal(ks[0], (VOCAB, H), jnp.float32) * 0.1,
        "W1": u(ks[1], (F, 2 * H), 2 * H),
        "b1": u(ks[2], (F,), 2 * H),
        "W2": u(ks[3], (F, F), F),
        "b2": u(ks[4], (F,), F),
        "w_mean": u(ks[5], (1, F), F),
        "b_mean": u(ks[6], (1,), F),
        "w_std": u(ks[7], (1, F), F),
        "b_std": u(ks[8], (1,), F),
        # [mean_norm_alpha, mean_norm_beta, std_norm_alpha, std_norm_beta]
        "ln_params": jnp.array([1.0, 0.0, 1.0, 0.0], jnp.float32),
    }


if __name__ == "__main__":
    B, S, T = 2, 8, 8
    key = jax.random.PRNGKey(0)
    k1, k2, k3 = jax.random.split(key, 3)

    raw = init_params(k1)
    packed = prepare_params(raw)          # one-time packing, outside the call path

    tgt = jax.random.randint(k2, (T, B), 0, VOCAB, dtype=jnp.int32)       # [tgt_len, batch]
    memory_bank = jax.random.normal(k3, (S, B, RNN_SIZE), jnp.float32)    # [src_len, batch, H]
    src_lengths = jnp.array([S, 5], dtype=jnp.int32)

    h_mean, h_std = inference_network_forward(tgt, memory_bank, src_lengths, packed)
    jax.block_until_ready((h_mean, h_std))

    r_mean, r_std = reference_forward(tgt, memory_bank, src_lengths, packed)
    # Looser tolerance on v6e/v7x: softplus runs in bf16 and the LN step amplifies
    # the (implementation-level) transcendental differences.
    tol = 2e-3 if ACT_DTYPE == jnp.float32 else 5e-2
    np.testing.assert_allclose(np.asarray(h_mean), np.asarray(r_mean), rtol=tol, atol=tol)
    np.testing.assert_allclose(np.asarray(h_std), np.asarray(r_std), rtol=tol, atol=tol)

    print("KERNEL_OK")
</pallas_src>

<mosaic_0001>
module attributes {stable_mosaic.version = 11 : i64} {
  func.func @_infnet_kernel(%arg0: i32, %arg1: i32, %arg2: memref<2xi32, #tpu.memory_space<smem>>, %arg3: memref<6xf32, #tpu.memory_space<smem>>, %arg4: memref<1x8x32xbf16, #tpu.memory_space<vmem>>, %arg5: memref<1x8x32xbf16, #tpu.memory_space<vmem>>, %arg6: memref<32x512xbf16, #tpu.memory_space<vmem>>, %arg7: memref<32x512xbf16, #tpu.memory_space<vmem>>, %arg8: memref<1x512xf32, #tpu.memory_space<vmem>>, %arg9: memref<512x512xbf16, #tpu.memory_space<vmem>>, %arg10: memref<1x512xf32, #tpu.memory_space<vmem>>, %arg11: memref<2x512xf32, #tpu.memory_space<vmem>>, %arg12: memref<2x1x8x128xf32, #tpu.memory_space<vmem>>) attributes {dimension_semantics = [#tpu.dimension_semantics<parallel>, #tpu.dimension_semantics<parallel>], iteration_bounds = array<i64: 2, 1>, scalar_prefetch = 1 : i64, scratch_operands = 0 : i64, tpu.core_type = #tpu.core_type<tc>, window_params = [{transform_indices = @transform_0, window_bounds = array<i64: 6>}, {transform_indices = @transform_1, window_bounds = array<i64: 1, 8, 32>}, {transform_indices = @transform_2, window_bounds = array<i64: 1, 8, 32>}, {pipeline_mode = #tpu.pipeline_mode<synchronous>, transform_indices = @transform_3, window_bounds = array<i64: 32, 512>}, {pipeline_mode = #tpu.pipeline_mode<synchronous>, transform_indices = @transform_4, window_bounds = array<i64: 32, 512>}, {pipeline_mode = #tpu.pipeline_mode<synchronous>, transform_indices = @transform_5, window_bounds = array<i64: 1, 512>}, {pipeline_mode = #tpu.pipeline_mode<synchronous>, transform_indices = @transform_6, window_bounds = array<i64: 512, 512>}, {pipeline_mode = #tpu.pipeline_mode<synchronous>, transform_indices = @transform_7, window_bounds = array<i64: 1, 512>}, {pipeline_mode = #tpu.pipeline_mode<synchronous>, transform_indices = @transform_8, window_bounds = array<i64: 2, 512>}, {transform_indices = @transform_9, window_bounds = array<i64: 2, 1, 8, 128>}]} {
    %c0 = arith.constant 0 : index
    %c0_0 = arith.constant 0 : index
    %c0_1 = arith.constant 0 : index
    %0 = vector.load %arg4[%c0, %c0_0, %c0_1] : memref<1x8x32xbf16, #tpu.memory_space<vmem>>, vector<1x8x32xbf16>
    %1 = vector.shape_cast %0 : vector<1x8x32xbf16> to vector<8x32xbf16>
    %c0_2 = arith.constant 0 : index
    %c0_3 = arith.constant 0 : index
    %2 = vector.load %arg6[%c0_2, %c0_3] : memref<32x512xbf16, #tpu.memory_space<vmem>>, vector<32x512xbf16>
    %cst = arith.constant dense<0.000000e+00> : vector<8x512xf32>
    %3 = tpu.matmul %1, %2, %cst {dimension_numbers = #tpu.dot_dimension_numbers<[1], [0], [0], [1], [0, 0, 1, 1], [], []>} : vector<8x32xbf16>, vector<32x512xbf16>, vector<8x512xf32> -> vector<8x512xf32>
    %c0_4 = arith.constant 0 : index
    %c0_5 = arith.constant 0 : index
    %4 = vector.load %arg8[%c0_4, %c0_5] : memref<1x512xf32, #tpu.memory_space<vmem>>, vector<1x512xf32>
    %5 = vector.broadcast %4 : vector<1x512xf32> to vector<8x512xf32>
    %6 = arith.addf %3, %5 : vector<8x512xf32>
    %c0_6 = arith.constant 0 : index
    %c0_7 = arith.constant 0 : index
    %c0_8 = arith.constant 0 : index
    %7 = vector.load %arg5[%c0_6, %c0_7, %c0_8] : memref<1x8x32xbf16, #tpu.memory_space<vmem>>, vector<1x8x32xbf16>
    %8 = vector.shape_cast %7 : vector<1x8x32xbf16> to vector<8x32xbf16>
    %c0_9 = arith.constant 0 : index
    %c0_10 = arith.constant 0 : index
    %9 = vector.load %arg7[%c0_9, %c0_10] : memref<32x512xbf16, #tpu.memory_space<vmem>>, vector<32x512xbf16>
    %cst_11 = arith.constant dense<0.000000e+00> : vector<8x512xf32>
    %10 = tpu.matmul %8, %9, %cst_11 {dimension_numbers = #tpu.dot_dimension_numbers<[1], [0], [0], [1], [0, 0, 1, 1], [], []>} : vector<8x32xbf16>, vector<32x512xbf16>, vector<8x512xf32> -> vector<8x512xf32>
    %11 = vector.shape_cast %6 : vector<8x512xf32> to vector<8x1x512xf32>
    %12 = vector.shape_cast %10 : vector<8x512xf32> to vector<1x8x512xf32>
    %13 = vector.broadcast %11 : vector<8x1x512xf32> to vector<8x8x512xf32>
    %14 = vector.broadcast %12 : vector<1x8x512xf32> to vector<8x8x512xf32>
    %15 = arith.addf %13, %14 : vector<8x8x512xf32>
    %cst_12 = arith.constant 2.000000e+01 : f32
    %16 = vector.broadcast %cst_12 : f32 to vector<8x8x512xf32>
    %17 = arith.cmpf ogt, %15, %16 : vector<8x8x512xf32>
    %cst_13 = arith.constant 2.000000e+01 : f32
    %18 = vector.broadcast %cst_13 : f32 to vector<8x8x512xf32>
    %19 = arith.minimumf %15, %18 : vector<8x8x512xf32>
    %20 = math.exp %19 : vector<8x8x512xf32>
    %21 = math.log1p %20 : vector<8x8x512xf32>
    %22 = arith.select %17, %15, %21 : vector<8x8x512xi1>, vector<8x8x512xf32>
    %23 = vector.shape_cast %22 : vector<8x8x512xf32> to vector<64x512xf32>
    %24 = arith.truncf %23 : vector<64x512xf32> to vector<64x512xbf16>
    %c0_14 = arith.constant 0 : index
    %c0_15 = arith.constant 0 : index
    %25 = vector.load %arg9[%c0_14, %c0_15] : memref<512x512xbf16, #tpu.memory_space<vmem>>, vector<512x512xbf16>
    %cst_16 = arith.constant dense<0.000000e+00> : vector<64x512xf32>
    %26 = tpu.matmul %24, %25, %cst_16 {dimension_numbers = #tpu.dot_dimension_numbers<[1], [0], [0], [1], [0, 0, 1, 1], [], []>} : vector<64x512xbf16>, vector<512x512xbf16>, vector<64x512xf32> -> vector<64x512xf32>
    %c0_17 = arith.constant 0 : index
    %c0_18 = arith.constant 0 : index
    %27 = vector.load %arg10[%c0_17, %c0_18] : memref<1x512xf32, #tpu.memory_space<vmem>>, vector<1x512xf32>
    %28 = vector.broadcast %27 : vector<1x512xf32> to vector<64x512xf32>
    %29 = arith.addf %26, %28 : vector<64x512xf32>
    %cst_19 = arith.constant 2.000000e+01 : f32
    %30 = vector.broadcast %cst_19 : f32 to vector<64x512xf32>
    %31 = arith.cmpf ogt, %29, %30 : vector<64x512xf32>
    %cst_20 = arith.constant 2.000000e+01 : f32
    %32 = vector.broadcast %cst_20 : f32 to vector<64x512xf32>
    %33 = arith.minimumf %29, %32 : vector<64x512xf32>
    %34 = math.exp %33 : vector<64x512xf32>
    %35 = math.log1p %34 : vector<64x512xf32>
    %36 = arith.select %31, %29, %35 : vector<64x512xi1>, vector<64x512xf32>
    %37 = vector.shape_cast %36 : vector<64x512xf32> to vector<8x8x512xf32>
    %c0_21 = arith.constant 0 : index
    %c0_22 = arith.constant 0 : index
    %38 = vector.load %arg11[%c0_21, %c0_22] : memref<2x512xf32, #tpu.memory_space<vmem>>, vector<1x512xf32>
    %39 = vector.shape_cast %38 : vector<1x512xf32> to vector<1x1x512xf32>
    %c1 = arith.constant 1 : index
    %c0_23 = arith.constant 0 : index
    %40 = vector.load %arg11[%c1, %c0_23] : memref<2x512xf32, #tpu.memory_space<vmem>>, vector<1x512xf32>
    %41 = vector.shape_cast %40 : vector<1x512xf32> to vector<1x1x512xf32>
    %42 = vector.broadcast %39 : vector<1x1x512xf32> to vector<8x8x512xf32>
    %43 = arith.mulf %37, %42 : vector<8x8x512xf32>
    %cst_24 = arith.constant dense<0.000000e+00> : vector<8x8xf32>
    %44 = vector.multi_reduction <add>, %43, %cst_24 [2] : vector<8x8x512xf32> to vector<8x8xf32>
    %c4 = arith.constant 4 : index
    %45 = memref.load %arg3[%c4] : memref<6xf32, #tpu.memory_space<smem>>
    %46 = vector.broadcast %45 : f32 to vector<8x8xf32>
    %47 = arith.addf %44, %46 : vector<8x8xf32>
    %48 = vector.broadcast %41 : vector<1x1x512xf32> to vector<8x8x512xf32>
    %49 = arith.mulf %37, %48 : vector<8x8x512xf32>
    %cst_25 = arith.constant dense<0.000000e+00> : vector<8x8xf32>
    %50 = vector.multi_reduction <add>, %49, %cst_25 [2] : vector<8x8x512xf32> to vector<8x8xf32>
    %c5 = arith.constant 5 : index
    %51 = memref.load %arg3[%c5] : memref<6xf32, #tpu.memory_space<smem>>
    %52 = vector.broadcast %51 : f32 to vector<8x8xf32>
    %53 = arith.addf %50, %52 : vector<8x8xf32>
    %c0_26 = arith.constant 0 : index
    %54 = memref.load %arg3[%c0_26] : memref<6xf32, #tpu.memory_space<smem>>
    %c1_27 = arith.constant 1 : index
    %55 = memref.load %arg3[%c1_27] : memref<6xf32, #tpu.memory_space<smem>>
    %cst_28 = arith.constant dense<0.000000e+00> : vector<8xf32>
    %56 = vector.multi_reduction <add>, %47, %cst_28 [1] : vector<8x8xf32> to vector<8xf32>
    %57 = vector.shape_cast %56 : vector<8xf32> to vector<8x1xf32>
    %cst_29 = arith.constant 8.000000e+00 : f32
    %58 = vector.broadcast %cst_29 : f32 to vector<8x1xf32>
    %59 = arith.divf %57, %58 : vector<8x1xf32>
    %60 = vector.broadcast %59 : vector<8x1xf32> to vector<8x8xf32>
    %61 = arith.subf %47, %60 : vector<8x8xf32>
    %62 = arith.mulf %61, %61 : vector<8x8xf32>
    %cst_30 = arith.constant dense<0.000000e+00> : vector<8xf32>
    %63 = vector.multi_reduction <add>, %62, %cst_30 [1] : vector<8x8xf32> to vector<8xf32>
    %64 = vector.shape_cast %63 : vector<8xf32> to vector<8x1xf32>
    %cst_31 = arith.constant 7.000000e+00 : f32
    %65 = vector.broadcast %cst_31 : f32 to vector<8x1xf32>
    %66 = arith.divf %64, %65 : vector<8x1xf32>
    %67 = vector.broadcast %59 : vector<8x1xf32> to vector<8x8xf32>
    %68 = arith.subf %47, %67 : vector<8x8xf32>
    %69 = vector.broadcast %54 : f32 to vector<8x8xf32>
    %70 = arith.mulf %69, %68 : vector<8x8xf32>
    %71 = math.rsqrt %66 : vector<8x1xf32>
    %72 = vector.broadcast %71 : vector<8x1xf32> to vector<8x8xf32>
    %73 = arith.mulf %70, %72 : vector<8x8xf32>
    %74 = vector.broadcast %55 : f32 to vector<8x8xf32>
    %75 = arith.addf %73, %74 : vector<8x8xf32>
    %c2 = arith.constant 2 : index
    %76 = memref.load %arg3[%c2] : memref<6xf32, #tpu.memory_space<smem>>
    %c3 = arith.constant 3 : index
    %77 = memref.load %arg3[%c3] : memref<6xf32, #tpu.memory_space<smem>>
    %cst_32 = arith.constant dense<0.000000e+00> : vector<8xf32>
    %78 = vector.multi_reduction <add>, %53, %cst_32 [1] : vector<8x8xf32> to vector<8xf32>
    %79 = vector.shape_cast %78 : vector<8xf32> to vector<8x1xf32>
    %cst_33 = arith.constant 8.000000e+00 : f32
    %80 = vector.broadcast %cst_33 : f32 to vector<8x1xf32>
    %81 = arith.divf %79, %80 : vector<8x1xf32>
    %82 = vector.broadcast %81 : vector<8x1xf32> to vector<8x8xf32>
    %83 = arith.subf %53, %82 : vector<8x8xf32>
    %84 = arith.mulf %83, %83 : vector<8x8xf32>
    %cst_34 = arith.constant dense<0.000000e+00> : vector<8xf32>
    %85 = vector.multi_reduction <add>, %84, %cst_34 [1] : vector<8x8xf32> to vector<8xf32>
    %86 = vector.shape_cast %85 : vector<8xf32> to vector<8x1xf32>
    %cst_35 = arith.constant 7.000000e+00 : f32
    %87 = vector.broadcast %cst_35 : f32 to vector<8x1xf32>
    %88 = arith.divf %86, %87 : vector<8x1xf32>
    %89 = vector.broadcast %81 : vector<8x1xf32> to vector<8x8xf32>
    %90 = arith.subf %53, %89 : vector<8x8xf32>
    %91 = vector.broadcast %76 : f32 to vector<8x8xf32>
    %92 = arith.mulf %91, %90 : vector<8x8xf32>
    %93 = math.rsqrt %88 : vector<8x1xf32>
    %94 = vector.broadcast %93 : vector<8x1xf32> to vector<8x8xf32>
    %95 = arith.mulf %92, %94 : vector<8x8xf32>
    %96 = vector.broadcast %77 : f32 to vector<8x8xf32>
    %97 = arith.addf %95, %96 : vector<8x8xf32>
    %cst_36 = arith.constant 2.000000e+01 : f32
    %98 = vector.broadcast %cst_36 : f32 to vector<8x8xf32>
    %99 = arith.cmpf ogt, %97, %98 : vector<8x8xf32>
    %cst_37 = arith.constant 2.000000e+01 : f32
    %100 = vector.broadcast %cst_37 : f32 to vector<8x8xf32>
    %101 = arith.minimumf %97, %100 : vector<8x8xf32>
    %102 = math.exp %101 : vector<8x8xf32>
    %103 = math.log1p %102 : vector<8x8xf32>
    %104 = arith.select %99, %97, %103 : vector<8x8xi1>, vector<8x8xf32>
    %cst_38 = arith.constant 0.000000e+00 : f32
    %105 = vector.broadcast %cst_38 : f32 to vector<8x120xf32>
    %106 = tpu.concatenate %75, %105 in 1 : vector<8x8xf32>, vector<8x120xf32> -> vector<8x128xf32>
    %107 = tpu.concatenate %104, %105 in 1 : vector<8x8xf32>, vector<8x120xf32> -> vector<8x128xf32>
    %108 = tpu.iota {dimensions = array<i32: 1>} : vector<8x128xi32>
    %109 = arith.index_cast %arg0 : i32 to index
    %110 = memref.load %arg2[%109] : memref<2xi32, #tpu.memory_space<smem>>
    %111 = vector.broadcast %110 : i32 to vector<8x128xi32>
    %112 = arith.cmpi slt, %108, %111 : vector<8x128xi32>
    %cst_39 = arith.constant -9.990000e+02 : f32
    %113 = vector.broadcast %cst_39 : f32 to vector<8x128xf32>
    %114 = arith.select %112, %106, %113 : vector<8x128xi1>, vector<8x128xf32>
    %cst_40 = arith.constant 1.000000e-03 : f32
    %115 = vector.broadcast %cst_40 : f32 to vector<8x128xf32>
    %116 = arith.select %112, %107, %115 : vector<8x128xi1>, vector<8x128xf32>
    %117 = vector.shape_cast %114 : vector<8x128xf32> to vector<1x8x128xf32>
    %118 = vector.shape_cast %116 : vector<8x128xf32> to vector<1x8x128xf32>
    %119 = tpu.concatenate %117, %118 in 0 : vector<1x8x128xf32>, vector<1x8x128xf32> -> vector<2x8x128xf32>
    %c0_41 = arith.constant 0 : index
    %c0_42 = arith.constant 0 : index
    %c0_43 = arith.constant 0 : index
    %c0_44 = arith.constant 0 : index
    %120 = vector.load %arg12[%c0_41, %c0_42, %c0_43, %c0_44] : memref<2x1x8x128xf32, #tpu.memory_space<vmem>>, vector<2x1x8x128xf32>
    %121 = vector.shape_cast %120 : vector<2x1x8x128xf32> to vector<2x8x128xf32>
    %122 = vector.shape_cast %119 : vector<2x8x128xf32> to vector<2x1x8x128xf32>
    tpu.vector_store %arg12[%c0_41, %c0_42, %c0_43, %c0_44], %122 {strides = array<i32>} : memref<2x1x8x128xf32, #tpu.memory_space<vmem>>, vector<2x1x8x128xf32>,
    return
  }
  func.func @transform_0(%arg0: i32, %arg1: i32, %arg2: memref<2xi32, #tpu.memory_space<smem>>) -> i32 {
    %c0_i32 = arith.constant 0 : i32
    %c0_i32_0 = arith.constant 0 : i32
    return %c0_i32 : i32
  }
  func.func @transform_1(%arg0: i32, %arg1: i32, %arg2: memref<2xi32, #tpu.memory_space<smem>>) -> (i32, i32, i32) {
    %c0_i32 = arith.constant 0 : i32
    %c0_i32_0 = arith.constant 0 : i32
    return %arg0, %arg1, %c0_i32 : i32, i32, i32
  }
  func.func @transform_2(%arg0: i32, %arg1: i32, %arg2: memref<2xi32, #tpu.memory_space<smem>>) -> (i32, i32, i32) {
    %c0_i32 = arith.constant 0 : i32
    %c0_i32_0 = arith.constant 0 : i32
    %c0_i32_1 = arith.constant 0 : i32
    return %arg0, %c0_i32, %c0_i32_0 : i32, i32, i32
  }
  func.func @transform_3(%arg0: i32, %arg1: i32, %arg2: memref<2xi32, #tpu.memory_space<smem>>) -> (i32, i32) {
    %c0_i32 = arith.constant 0 : i32
    %c0_i32_0 = arith.constant 0 : i32
    %c0_i32_1 = arith.constant 0 : i32
    return %c0_i32, %c0_i32_0 : i32, i32
  }
  func.func @transform_4(%arg0: i32, %arg1: i32, %arg2: memref<2xi32, #tpu.memory_space<smem>>) -> (i32, i32) {
    %c0_i32 = arith.constant 0 : i32
    %c0_i32_0 = arith.constant 0 : i32
    %c0_i32_1 = arith.constant 0 : i32
    return %c0_i32, %c0_i32_0 : i32, i32
  }
  func.func @transform_5(%arg0: i32, %arg1: i32, %arg2: memref<2xi32, #tpu.memory_space<smem>>) -> (i32, i32) {
    %c0_i32 = arith.constant 0 : i32
    %c0_i32_0 = arith.constant 0 : i32
    %c0_i32_1 = arith.constant 0 : i32
    return %c0_i32, %c0_i32_0 : i32, i32
  }
  func.func @transform_6(%arg0: i32, %arg1: i32, %arg2: memref<2xi32, #tpu.memory_space<smem>>) -> (i32, i32) {
    %c0_i32 = arith.constant 0 : i32
    %c0_i32_0 = arith.constant 0 : i32
    %c0_i32_1 = arith.constant 0 : i32
    return %c0_i32, %c0_i32_0 : i32, i32
  }
  func.func @transform_7(%arg0: i32, %arg1: i32, %arg2: memref<2xi32, #tpu.memory_space<smem>>) -> (i32, i32) {
    %c0_i32 = arith.constant 0 : i32
    %c0_i32_0 = arith.constant 0 : i32
    %c0_i32_1 = arith.constant 0 : i32
    return %c0_i32, %c0_i32_0 : i32, i32
  }
  func.func @transform_8(%arg0: i32, %arg1: i32, %arg2: memref<2xi32, #tpu.memory_space<smem>>) -> (i32, i32) {
    %c0_i32 = arith.constant 0 : i32
    %c0_i32_0 = arith.constant 0 : i32
    %c0_i32_1 = arith.constant 0 : i32
    return %c0_i32, %c0_i32_0 : i32, i32
  }
  func.func @transform_9(%arg0: i32, %arg1: i32, %arg2: memref<2xi32, #tpu.memory_space<smem>>) -> (i32, i32, i32, i32) {
    %c0_i32 = arith.constant 0 : i32
    %c0_i32_0 = arith.constant 0 : i32
    %c0_i32_1 = arith.constant 0 : i32
    return %c0_i32, %arg0, %arg1, %c0_i32_0 : i32, i32, i32, i32
  }
}

</mosaic_0001>

<llo_original>
// kernel: inference_network_forward.1
$region0: #{inference_network_forward.1}
  #allocation0 [shape = 'u32[]', space=smem, size = 0x4, offset = 0x4, fixed_abs, tag = 'smem constant byte address 0x4 - core index']
  #allocation1 [shape = 'u32[72,128]{1,0:T(1,128)}', space=vmem, size = 0x9000, scoped, tag = 'internal scratch']
  #allocation2 [shape = 's32[1]{0}', space=sflag, size = 0x4, scoped, tag = 'scoped memory for inference_network_forward.1']
  #allocation3 [shape = 'u8[512]{0}', space=smem, size = 0x200, scoped, tag = 'prefetched SMEM operand 0']
  %s0 = inlined_call_operand.vmem [shape: s32[2], index: 0, kind: input, shape index: {}]
  %s1 = inlined_call_operand.vmem [shape: f32[6], index: 1, kind: input, shape index: {}]
  %s2 = inlined_call_operand.vmem [shape: bf16[2,8,32], index: 2, kind: input, shape index: {}]
  %s3 = inlined_call_operand.vmem [shape: bf16[2,8,32], index: 3, kind: input, shape index: {}]
  %s4 = inlined_call_operand.vmem [shape: bf16[32,512], index: 4, kind: input, shape index: {}]
  %s5 = inlined_call_operand.vmem [shape: bf16[32,512], index: 5, kind: input, shape index: {}]
  %s6 = inlined_call_operand.vmem [shape: f32[1,512], index: 6, kind: input, shape index: {}]
  %s7 = inlined_call_operand.hbm [shape: bf16[512,512], index: 7, kind: input, shape index: {}]
  %s8 = inlined_call_operand.vmem [shape: f32[1,512], index: 8, kind: input, shape index: {}]
  %s9 = inlined_call_operand.vmem [shape: f32[2,512], index: 9, kind: input, shape index: {}]
  %s10 = inlined_call_operand.vmem [shape: f32[2,2,8,128], index: 10, kind: output, shape index: {}]
  %s11 = sld [smem:[#allocation0]]
  $region111: #{inference_network_forward.1} parent=0
    _
  %s13 = ssub.s32 1, %s11
  %s14 = scalar_select 0, %s13, %s11
  %s16 = sshll.u32 %s0, 4
  %s17 = int_to_ptr.vmem [resolvable:$true] %s16
  %19 = dma.vmem_to_smem %s17, 16, [#allocation3], [#allocation2]
  %21 = dma.done [#allocation2], 16
  %22 = sfence
  $region1: #{inference_network_forward.1} parent=0
    #allocation4 [shape = 'u8[512]{0}', space=smem, size = 0x200, scoped, tag = 'input window, operand 1, single buffered']
    #allocation5 [shape = 's32[2]{0}', space=sflag, size = 0x8, scoped, tag = 'scoped memory for inference_network_forward.1']
    #allocation6 [shape = 's32[2]{0}', space=sflag, size = 0x8, scoped, tag = 'scoped memory for inference_network_forward.1']
    #allocation7 [shape = 'u8[524288]{0}', space=vmem, size = 0x80000, scoped, tag = 'input window, operand 7, single buffered']
    #allocation8 [shape = 'u8[16384]{0}', space=vmem, size = 0x4000, scoped, tag = 'output window, operand 0']
    %23 = vsyncpa [#allocation6], 0
    %24 = vsyncpa [#allocation5], 0
    loop: start=0, step=1, limit=4
    $region2: #{inference_network_forward.1} parent=1 // loop_pre_header
      _
    $region3: #{inference_network_forward.1} parent=1 // loop_header
      %s26 = sphi 0, %s30
      %p27 = scmp.ge.s32.totalorder %s26, 4
      %s33 = sphi 0, %s45
      %s34 = sphi 0, %s41
      %s35 = sphi 0, %s33
      %s36 = sphi 0, %s34
      %s37 = sphi 0, %s35
      %s38 = sphi 0, %s36
      %s46 = sphi 0, %s46
      %s48 = sphi 0, %s46
      %s49 = sphi 0, %s48
      %s63 = sphi 0, %s49
      %s71 = sphi 0, %s73
      %s74 = sphi 0, %s71
      %s75 = sphi 0, %s74
      %s91 = sphi 0, %s75
      %s97 = sphi 0, %s99
      %s100 = sphi 0, %s97
      %s101 = sphi 0, %s100
      %s117 = sphi 0, %s101
      %s121 = sphi 0, %s121
      %s123 = sphi 0, %s121
      %s124 = sphi 0, %s123
      %s138 = sphi 0, %s124
      %s142 = sphi 0, %s142
      %s144 = sphi 0, %s142
      %s145 = sphi 0, %s144
      %s159 = sphi 0, %s145
      %s163 = sphi 0, %s163
      %s165 = sphi 0, %s163
      %s166 = sphi 0, %s165
      %s180 = sphi 0, %s166
      %s184 = sphi 0, %s184
      %s186 = sphi 0, %s184
      %s187 = sphi 0, %s186
      %s201 = sphi 0, %s187
      %s205 = sphi 0, %s205
      %s207 = sphi 0, %s205
      %s208 = sphi 0, %s207
      %s222 = sphi 0, %s208
      %s226 = sphi 0, %s226
      %s228 = sphi 0, %s226
      %s229 = sphi 0, %s228
      %s243 = sphi 0, %s229
      %s251 = sphi 0, %s253
      %s254 = sphi 0, %s251
      %s255 = sphi 0, %s254
      %s271 = sphi 0, %s255
    $region4: #{inference_network_forward.1} parent=1 // loop_header_branch
      %29 = sbr.rel (%p27) target = $region8
    $region5: #{inference_network_forward.1} parent=1 // loop_body
      %s31 = ssub.s32 %s26, 1
      %s32 = ssub.s32 %s26, 2
      %s39 = sadd.s32 1, %s34
      %p40 = scmp.ge.s32.totalorder %s39, 1
      %s41 = scalar_select %p40, 0, %s39
      %s42 = sadd.s32 1, %s33
      %s43 = scalar_select %p40, %s42, %s33
      %p44 = scmp.ge.s32.totalorder %s43, 2
      %s45 = scalar_select %p44, 0, %s43
      %s47 = sadd.s32 %s46, 1
      %p50 = scmp.eq.s32.totalorder %s26, 1
      %p51 = scmp.ne.s32.totalorder %s46, %s48
      %p52 = scmp.eq.s32.totalorder %s26, 0
      %p53 = por %p51, %p52
      %p54 = scmp.ne.s32.totalorder %s46, %s48
      %p55 = scmp.eq.s32.totalorder %s31, 1
      %p56 = por %p54, %p55
      %p57 = scmp.ne.s32.totalorder %s48, %s49
      %p58 = scmp.eq.s32.totalorder %s31, 0
      %p59 = por %p57, %p58
      %p60 = scmp.ne.s32.totalorder %s48, %s49
      %p61 = scmp.eq.s32.totalorder %s32, 1
      %p62 = por %p60, %p61
      %p64 = scmp.ne.s32.totalorder %s49, %s63
      %p65 = scmp.eq.s32.totalorder %s32, 0
      %p66 = por %p64, %p65
      %s67 = ssub.s32 %s33, %s45
      %s68 = ssub.s32 %s34, %s41
      %s69 = sor.u32 %s67, %s68
      %p70 = scmp.eq.s32.totalorder %s69, 0
      %s72 = sadd.s32 %s71, 1
      %s73 = scalar_select %p70, %s71, %s72
      %p76 = pneg %p70
      %p77 = scmp.eq.s32.totalorder %s26, 1
      %p78 = por %p76, %p77
      %p79 = scmp.ne.s32.totalorder %s71, %s74
      %p80 = scmp.eq.s32.totalorder %s26, 0
      %p81 = por %p79, %p80
      %p82 = scmp.ne.s32.totalorder %s71, %s74
      %p83 = scmp.eq.s32.totalorder %s31, 1
      %p84 = por %p82, %p83
      %p85 = scmp.ne.s32.totalorder %s74, %s75
      %p86 = scmp.eq.s32.totalorder %s31, 0
      %p87 = por %p85, %p86
      %p88 = scmp.ne.s32.totalorder %s74, %s75
      %p89 = scmp.eq.s32.totalorder %s32, 1
      %p90 = por %p88, %p89
      %p92 = scmp.ne.s32.totalorder %s75, %s91
      %p93 = scmp.eq.s32.totalorder %s32, 0
      %p94 = por %p92, %p93
      %s95 = ssub.s32 %s33, %s45
      %p96 = scmp.eq.s32.totalorder %s95, 0
      %s98 = sadd.s32 %s97, 1
      %s99 = scalar_select %p96, %s97, %s98
      %p102 = pneg %p96
      %p103 = scmp.eq.s32.totalorder %s26, 1
      %p104 = por %p102, %p103
      %p105 = scmp.ne.s32.totalorder %s97, %s100
      %p106 = scmp.eq.s32.totalorder %s26, 0
      %p107 = por %p105, %p106
      %p108 = scmp.ne.s32.totalorder %s97, %s100
      %p109 = scmp.eq.s32.totalorder %s31, 1
      %p110 = por %p108, %p109
      %p111 = scmp.ne.s32.totalorder %s100, %s101
      %p112 = scmp.eq.s32.totalorder %s31, 0
      %p113 = por %p111, %p112
      %p114 = scmp.ne.s32.totalorder %s100, %s101
      %p115 = scmp.eq.s32.totalorder %s32, 1
      %p116 = por %p114, %p115
      %p118 = scmp.ne.s32.totalorder %s101, %s117
      %p119 = scmp.eq.s32.totalorder %s32, 0
      %p120 = por %p118, %p119
      %s122 = sadd.s32 %s121, 1
      %p125 = scmp.eq.s32.totalorder %s26, 1
      %p126 = scmp.ne.s32.totalorder %s121, %s123
      %p127 = scmp.eq.s32.totalorder %s26, 0
      %p128 = por %p126, %p127
      %p129 = scmp.ne.s32.totalorder %s121, %s123
      %p130 = scmp.eq.s32.totalorder %s31, 1
      %p131 = por %p129, %p130
      %p132 = scmp.ne.s32.totalorder %s123, %s124
      %p133 = scmp.eq.s32.totalorder %s31, 0
      %p134 = por %p132, %p133
      %p135 = scmp.ne.s32.totalorder %s123, %s124
      %p136 = scmp.eq.s32.totalorder %s32, 1
      %p137 = por %p135, %p136
      %p139 = scmp.ne.s32.totalorder %s124, %s138
      %p140 = scmp.eq.s32.totalorder %s32, 0
      %p141 = por %p139, %p140
      %s143 = sadd.s32 %s142, 1
      %p146 = scmp.eq.s32.totalorder %s26, 1
      %p147 = scmp.ne.s32.totalorder %s142, %s144
      %p148 = scmp.eq.s32.totalorder %s26, 0
      %p149 = por %p147, %p148
      %p150 = scmp.ne.s32.totalorder %s142, %s144
      %p151 = scmp.eq.s32.totalorder %s31, 1
      %p152 = por %p150, %p151
      %p153 = scmp.ne.s32.totalorder %s144, %s145
      %p154 = scmp.eq.s32.totalorder %s31, 0
      %p155 = por %p153, %p154
      %p156 = scmp.ne.s32.totalorder %s144, %s145
      %p157 = scmp.eq.s32.totalorder %s32, 1
      %p158 = por %p156, %p157
      %p160 = scmp.ne.s32.totalorder %s145, %s159
      %p161 = scmp.eq.s32.totalorder %s32, 0
      %p162 = por %p160, %p161
      %s164 = sadd.s32 %s163, 1
      %p167 = scmp.eq.s32.totalorder %s26, 1
      %p168 = scmp.ne.s32.totalorder %s163, %s165
      %p169 = scmp.eq.s32.totalorder %s26, 0
      %p170 = por %p168, %p169
      %p171 = scmp.ne.s32.totalorder %s163, %s165
      %p172 = scmp.eq.s32.totalorder %s31, 1
      %p173 = por %p171, %p172
      %p174 = scmp.ne.s32.totalorder %s165, %s166
      %p175 = scmp.eq.s32.totalorder %s31, 0
      %p176 = por %p174, %p175
      %p177 = scmp.ne.s32.totalorder %s165, %s166
      %p178 = scmp.eq.s32.totalorder %s32, 1
      %p179 = por %p177, %p178
      %p181 = scmp.ne.s32.totalorder %s166, %s180
      %p182 = scmp.eq.s32.totalorder %s32, 0
      %p183 = por %p181, %p182
      %s185 = sadd.s32 %s184, 1
      %p188 = scmp.eq.s32.totalorder %s26, 1
      %p189 = scmp.ne.s32.totalorder %s184, %s186
      %p190 = scmp.eq.s32.totalorder %s26, 0
      %p191 = por %p189, %p190
      %p192 = scmp.ne.s32.totalorder %s184, %s186
      %p193 = scmp.eq.s32.totalorder %s31, 1
      %p194 = por %p192, %p193
      %p195 = scmp.ne.s32.totalorder %s186, %s187
      %p196 = scmp.eq.s32.totalorder %s31, 0
      %p197 = por %p195, %p196
      %p198 = scmp.ne.s32.totalorder %s186, %s187
      %p199 = scmp.eq.s32.totalorder %s32, 1
      %p200 = por %p198, %p199
      %p202 = scmp.ne.s32.totalorder %s187, %s201
      %p203 = scmp.eq.s32.totalorder %s32, 0
      %p204 = por %p202, %p203
      %s206 = sadd.s32 %s205, 1
      %p209 = scmp.eq.s32.totalorder %s26, 1
      %p210 = scmp.ne.s32.totalorder %s205, %s207
      %p211 = scmp.eq.s32.totalorder %s26, 0
      %p212 = por %p210, %p211
      %p213 = scmp.ne.s32.totalorder %s205, %s207
      %p214 = scmp.eq.s32.totalorder %s31, 1
      %p215 = por %p213, %p214
      %p216 = scmp.ne.s32.totalorder %s207, %s208
      %p217 = scmp.eq.s32.totalorder %s31, 0
      %p218 = por %p216, %p217
      %p219 = scmp.ne.s32.totalorder %s207, %s208
      %p220 = scmp.eq.s32.totalorder %s32, 1
      %p221 = por %p219, %p220
      %p223 = scmp.ne.s32.totalorder %s208, %s222
      %p224 = scmp.eq.s32.totalorder %s32, 0
      %p225 = por %p223, %p224
      %s227 = sadd.s32 %s226, 1
      %p230 = scmp.eq.s32.totalorder %s26, 1
      %p231 = scmp.ne.s32.totalorder %s226, %s228
      %p232 = scmp.eq.s32.totalorder %s26, 0
      %p233 = por %p231, %p232
      %p234 = scmp.ne.s32.totalorder %s226, %s228
      %p235 = scmp.eq.s32.totalorder %s31, 1
      %p236 = por %p234, %p235
      %p237 = scmp.ne.s32.totalorder %s228, %s229
      %p238 = scmp.eq.s32.totalorder %s31, 0
      %p239 = por %p237, %p238
      %p240 = scmp.ne.s32.totalorder %s228, %s229
      %p241 = scmp.eq.s32.totalorder %s32, 1
      %p242 = por %p240, %p241
      %p244 = scmp.ne.s32.totalorder %s229, %s243
      %p245 = scmp.eq.s32.totalorder %s32, 0
      %p246 = por %p244, %p245
      %s247 = ssub.s32 %s33, %s45
      %s248 = ssub.s32 %s34, %s41
      %s249 = sor.u32 %s247, %s248
      %p250 = scmp.eq.s32.totalorder %s249, 0
      %s252 = sadd.s32 %s251, 1
      %s253 = scalar_select %p250, %s251, %s252
      %p256 = pneg %p250
      %p257 = scmp.eq.s32.totalorder %s26, 1
      %p258 = por %p256, %p257
      %p259 = scmp.ne.s32.totalorder %s251, %s254
      %p260 = scmp.eq.s32.totalorder %s26, 0
      %p261 = por %p259, %p260
      %p262 = scmp.ne.s32.totalorder %s251, %s254
      %p263 = scmp.eq.s32.totalorder %s31, 1
      %p264 = por %p262, %p263
      %p265 = scmp.ne.s32.totalorder %s254, %s255
      %p266 = scmp.eq.s32.totalorder %s31, 0
      %p267 = por %p265, %p266
      %p268 = scmp.ne.s32.totalorder %s254, %s255
      %p269 = scmp.eq.s32.totalorder %s32, 1
      %p270 = por %p268, %p269
      %p272 = scmp.ne.s32.totalorder %s255, %s271
      %p273 = scmp.eq.s32.totalorder %s32, 0
      %p274 = por %p272, %p273
      %p275 = scmp.le.s32.totalorder 1, %s26
      %p276 = scmp.lt.s32.totalorder %s26, 3
      %p277 = pnand %p275, %p276
      %p278 = pneg %p277
      // Predicated region
      $region9: #{inference_network_forward.1} parent=5 // pred_check
        _
      $region10: #{inference_network_forward.1} parent=5 // pred_check_branch
        %280 = sbr.rel (%p277) target = $region12
      $region11: #{inference_network_forward.1} parent=5 // pred_region
        %s281 = ssub.s32 %s26, 1
        // Predicated region
        $region13: #{inference_network_forward.1} parent=11 // pred_check
          %p282 = pneg %p59
        $region14: #{inference_network_forward.1} parent=11 // pred_check_branch
          %284 = sbr.rel (%p282) target = $region16
        $region15: #{inference_network_forward.1} parent=11 // pred_region
          %286 = vsyncadd [#allocation6], 0
          %s288 = sshll.u32 %s1, 4
          %s289 = int_to_ptr.vmem [resolvable:$true] %s288
          %291 = dma.vmem_to_smem %s289, 16, [#allocation4], [#allocation6]
        $region16: #{inference_network_forward.1} parent=11 // pred_fallthru
          _
        // Predicated region
        $region17: #{inference_network_forward.1} parent=11 // pred_check
          %p292 = pneg %p134
        $region18: #{inference_network_forward.1} parent=11 // pred_check_branch
          %294 = sbr.rel (%p292) target = $region20
        $region19: #{inference_network_forward.1} parent=11 // pred_region
          _
        $region20: #{inference_network_forward.1} parent=11 // pred_fallthru
          _
        // Predicated region
        $region21: #{inference_network_forward.1} parent=11 // pred_check
          %p295 = pneg %p155
        $region22: #{inference_network_forward.1} parent=11 // pred_check_branch
          %297 = sbr.rel (%p295) target = $region24
        $region23: #{inference_network_forward.1} parent=11 // pred_region
          _
        $region24: #{inference_network_forward.1} parent=11 // pred_fallthru
          _
        // Predicated region
        $region25: #{inference_network_forward.1} parent=11 // pred_check
          %p298 = pneg %p176
        $region26: #{inference_network_forward.1} parent=11 // pred_check_branch
          %300 = sbr.rel (%p298) target = $region28
        $region27: #{inference_network_forward.1} parent=11 // pred_region
          _
        $region28: #{inference_network_forward.1} parent=11 // pred_fallthru
          _
        // Predicated region
        $region29: #{inference_network_forward.1} parent=11 // pred_check
          %p301 = pneg %p197
        $region30: #{inference_network_forward.1} parent=11 // pred_check_branch
          %303 = sbr.rel (%p301) target = $region32
        $region31: #{inference_network_forward.1} parent=11 // pred_region
          %305 = vsyncadd [#allocation5], 0
          %s306 = sshll.u32 %s7, 4
          %s307 = int_to_ptr.hbm [resolvable:$true] %s306
          %s308 = sshll.u32 [#allocation7], 4
          %s309 = int_to_ptr.vmem [resolvable:$true] %s308
          %314 = dma.hbm_to_vmem [thread:$0]  %s307, 16384, %s309, [#allocation5], 256, 256, 16
        $region32: #{inference_network_forward.1} parent=11 // pred_fallthru
          _
        // Predicated region
        $region33: #{inference_network_forward.1} parent=11 // pred_check
          %p315 = pneg %p218
        $region34: #{inference_network_forward.1} parent=11 // pred_check_branch
          %317 = sbr.rel (%p315) target = $region36
        $region35: #{inference_network_forward.1} parent=11 // pred_region
          _
        $region36: #{inference_network_forward.1} parent=11 // pred_fallthru
          _
        // Predicated region
        $region37: #{inference_network_forward.1} parent=11 // pred_check
          %p318 = pneg %p239
        $region38: #{inference_network_forward.1} parent=11 // pred_check_branch
          %320 = sbr.rel (%p318) target = $region40
        $region39: #{inference_network_forward.1} parent=11 // pred_region
          _
        $region40: #{inference_network_forward.1} parent=11 // pred_fallthru
          _
      $region12: #{inference_network_forward.1} parent=5 // pred_fallthru
        _
      %p321 = scmp.lt.s32.totalorder %s26, 2
      // Predicated region
      $region41: #{inference_network_forward.1} parent=5 // pred_check
        %p322 = pneg %p321
      $region42: #{inference_network_forward.1} parent=5 // pred_check_branch
        %324 = sbr.rel (%p322) target = $region44
      $region43: #{inference_network_forward.1} parent=5 // pred_region
        // Predicated region
        $region45: #{inference_network_forward.1} parent=43 // pred_check
          %p325 = pneg %p81
        $region46: #{inference_network_forward.1} parent=43 // pred_check_branch
          %327 = sbr.rel (%p325) target = $region48
        $region47: #{inference_network_forward.1} parent=43 // pred_region
          %p328 = scmp.lt.s32.totalorder %s33, 1
          %s329 = scalar_select %p328, %s33, 1
          %p330 = scmp.lt.s32.totalorder %s34, 0
          %s331 = scalar_select %p330, %s34, 0
          %s332 = sadd.s32 %s331, %s329
          %s333 = smul.addr %s332, 4
          %s334 = scalar_lea.vmem %s2, %s333
        $region48: #{inference_network_forward.1} parent=43 // pred_fallthru
          _
        // Predicated region
        $region49: #{inference_network_forward.1} parent=43 // pred_check
          %p335 = pneg %p107
        $region50: #{inference_network_forward.1} parent=43 // pred_check_branch
          %337 = sbr.rel (%p335) target = $region52
        $region51: #{inference_network_forward.1} parent=43 // pred_region
          %p338 = scmp.lt.s32.totalorder %s33, 1
          %s339 = scalar_select %p338, %s33, 1
          %s340 = smul.addr %s339, 4
          %s341 = scalar_lea.vmem %s3, %s340
        $region52: #{inference_network_forward.1} parent=43 // pred_fallthru
          _
      $region44: #{inference_network_forward.1} parent=5 // pred_fallthru
        _
      %p342 = scmp.le.s32.totalorder 1, %s26
      %p343 = scmp.lt.s32.totalorder %s26, 3
      %p344 = pnand %p342, %p343
      %p345 = pneg %p344
      // Predicated region
      $region53: #{inference_network_forward.1} parent=5 // pred_check
        _
      $region54: #{inference_network_forward.1} parent=5 // pred_check_branch
        %347 = sbr.rel (%p344) target = $region56
      $region55: #{inference_network_forward.1} parent=5 // pred_region
        %s348 = ssub.s32 %s26, 1
        // Predicated region
        $region57: #{inference_network_forward.1} parent=55 // pred_check
          %p349 = pneg %p59
        $region58: #{inference_network_forward.1} parent=55 // pred_check_branch
          %351 = sbr.rel (%p349) target = $region60
        $region59: #{inference_network_forward.1} parent=55 // pred_region
          %353 = dma.done [#allocation6], 16
        $region60: #{inference_network_forward.1} parent=55 // pred_fallthru
          _
        // Predicated region
        $region61: #{inference_network_forward.1} parent=55 // pred_check
          %p354 = pneg %p197
        $region62: #{inference_network_forward.1} parent=55 // pred_check_branch
          %356 = sbr.rel (%p354) target = $region64
        $region63: #{inference_network_forward.1} parent=55 // pred_region
          %358 = dma.done [#allocation5], 16384
        $region64: #{inference_network_forward.1} parent=55 // pred_fallthru
          _
        %359 = sfence
        %p360 = pneg %p59
        %p361 = pneg %p56
        %p362 = scmp.lt.s32.totalorder %s35, 1
        %s363 = scalar_select %p362, %s35, 1
        %p364 = scmp.lt.s32.totalorder %s36, 0
        %s365 = scalar_select %p364, %s36, 0
        %s366 = sadd.s32 %s365, %s363
        %s367 = smul.addr %s366, 4
        %s368 = scalar_lea.vmem %s2, %s367
        %p369 = pneg %p87
        %p370 = pneg %p84
        %p371 = scmp.lt.s32.totalorder %s35, 1
        %s372 = scalar_select %p371, %s35, 1
        %s373 = smul.addr %s372, 4
        %s374 = scalar_lea.vmem %s3, %s373
        %p375 = pneg %p113
        %p376 = pneg %p110
        %p377 = pneg %p134
        %p378 = pneg %p131
        %p379 = pneg %p155
        %p380 = pneg %p152
        %p381 = pneg %p176
        %p382 = pneg %p173
        %p383 = pneg %p197
        %p384 = pneg %p194
        %p385 = pneg %p218
        %p386 = pneg %p215
        %p387 = pneg %p239
        %p388 = pneg %p236
        %p389 = pneg %p267
        %p390 = pneg %p264
        %s391 = sand.u32 %s254, 1
        %s392 = sand.u32 %s254, 1
        %s393 = smul.addr %s392, 16
        %s394 = scalar_lea.vmem [#allocation8], %s393
        %p395 = scmp.lt.s32.totalorder %s35, 1
        %s396 = scalar_select %p395, %s35, 1
        %p397 = scmp.lt.s32.totalorder %s36, 0
        %s398 = scalar_select %p397, %s36, 0
        %s399 = sadd.s32 %s398, %s396
        %s400 = smul.addr %s399, 4
        %s401 = scalar_lea.vmem %s2, %s400
        %p402 = scmp.lt.s32.totalorder %s35, 1
        %s403 = scalar_select %p402, %s35, 1
        %s404 = smul.addr %s403, 4
        %s405 = scalar_lea.vmem %s3, %s404
        %v407 = vld [vmem:[%s401] sm:$0xf]
        %v408 = vld [vmem:[%s4] sm:$0xff]
        %v409 = vld [vmem:[%s4 + $0x8] sm:$0xff]
        %v410 = vld [vmem:[%s4 + $0x10] sm:$0xff]
        %v411 = vld [vmem:[%s4 + $0x18] sm:$0xff]
        %v412 = vld [vmem:[%s4 + $0x20] sm:$0xff]
        %v413 = vld [vmem:[%s4 + $0x28] sm:$0xff]
        %v414 = vld [vmem:[%s4 + $0x30] sm:$0xff]
        %v415 = vld [vmem:[%s4 + $0x38] sm:$0xff]
        %v416 = vld [vmem:[%s6] sm:$0xf]
        %v418 = vperm.slane %v416, 0
        %v419 = vperm.slane %v416, 1
        %v420 = vperm.slane %v416, 2
        %v421 = vperm.slane %v416, 3
        %v434 = vunpack.c.l.b16 %v408
        %v435 = vunpack.c.h.b16 %v408
        %v436 = vunpack.c.l.b16 %v409
        %v437 = vunpack.c.h.b16 %v409
        %v438 = vunpack.c.l.b16 %v410
        %v439 = vunpack.c.h.b16 %v410
        %v440 = vunpack.c.l.b16 %v411
        %v441 = vunpack.c.h.b16 %v411
        %v442 = vunpack.c.l.b16 %v412
        %v443 = vunpack.c.h.b16 %v412
        %v444 = vunpack.c.l.b16 %v413
        %v445 = vunpack.c.h.b16 %v413
        %v446 = vunpack.c.l.b16 %v414
        %v447 = vunpack.c.h.b16 %v414
        %v448 = vunpack.c.l.b16 %v415
        %v449 = vunpack.c.h.b16 %v415
        %v450 = vpack.c.b16 %v438, %v434
        %v451 = vpack.c.b16 %v439, %v435
        %v452 = vpack.c.b16 %v440, %v436
        %v453 = vpack.c.b16 %v441, %v437
        %v454 = vpack.c.b16 %v446, %v442
        %v455 = vpack.c.b16 %v447, %v443
        %v456 = vpack.c.b16 %v448, %v444
        %v457 = vpack.c.b16 %v449, %v445
        %vm466 = vcmask 261120
        %v468 = vsel %vm466, %v407, 0
        %470 = vmatpush.bf16.msra.mxu0 0
        %471 = vmatpush.bf16.msra.mxu0 0
        %472 = vmatpush.bf16.msra.mxu0 0
        %473 = vmatpush.bf16.msra.mxu0 0
        %474 = vmatpush.bf16.msra.mxu0 0
        %475 = vmatpush.bf16.msra.mxu0 0
        %476 = vmatpush.bf16.msra.mxu0 %v454
        %477 = vmatpush.bf16.msra.mxu0 %v450
        %478 = vmatmul.bf16.gmra.mxu0 %v468
        %v479 = vpop.f32.mrf.mxu0
        %v480 = vadd.f32 %v418, %v479
        %v481 = vpop.f32.mrf.mxu0
        %482 = vdwg.mxu0
        %483 = vmatpush.bf16.msra.mxu0 0
        %484 = vmatpush.bf16.msra.mxu0 0
        %485 = vmatpush.bf16.msra.mxu0 0
        %486 = vmatpush.bf16.msra.mxu0 0
        %487 = vmatpush.bf16.msra.mxu0 0
        %488 = vmatpush.bf16.msra.mxu0 0
        %489 = vmatpush.bf16.msra.mxu0 %v455
        %490 = vmatpush.bf16.msra.mxu0 %v451
        %491 = vmatmul.bf16.gmra.mxu0 %v468
        %v492 = vpop.f32.mrf.mxu0
        %v493 = vadd.f32 %v419, %v492
        %v494 = vpop.f32.mrf.mxu0
        %495 = vdwg.mxu0
        %496 = vmatpush.bf16.msra.mxu0 0
        %497 = vmatpush.bf16.msra.mxu0 0
        %498 = vmatpush.bf16.msra.mxu0 0
        %499 = vmatpush.bf16.msra.mxu0 0
        %500 = vmatpush.bf16.msra.mxu0 0
        %501 = vmatpush.bf16.msra.mxu0 0
        %502 = vmatpush.bf16.msra.mxu0 %v456
        %503 = vmatpush.bf16.msra.mxu0 %v452
        %504 = vmatmul.bf16.gmra.mxu0 %v468
        %v505 = vpop.f32.mrf.mxu0
        %v506 = vadd.f32 %v420, %v505
        %v507 = vpop.f32.mrf.mxu0
        %508 = vdwg.mxu0
        %509 = vmatpush.bf16.msra.mxu0 0
        %510 = vmatpush.bf16.msra.mxu0 0
        %511 = vmatpush.bf16.msra.mxu0 0
        %512 = vmatpush.bf16.msra.mxu0 0
        %513 = vmatpush.bf16.msra.mxu0 0
        %514 = vmatpush.bf16.msra.mxu0 0
        %515 = vmatpush.bf16.msra.mxu0 %v457
        %516 = vmatpush.bf16.msra.mxu0 %v453
        %517 = vmatmul.bf16.gmra.mxu0 %v468
        %v518 = vpop.f32.mrf.mxu0
        %v519 = vadd.f32 %v421, %v518
        %v520 = vpop.f32.mrf.mxu0
        %521 = vdwg.mxu0
        %v522 = vld [vmem:[%s405] sm:$0xf]
        %v523 = vld [vmem:[%s5] sm:$0xff]
        %v524 = vld [vmem:[%s5 + $0x8] sm:$0xff]
        %v525 = vld [vmem:[%s5 + $0x10] sm:$0xff]
        %v526 = vld [vmem:[%s5 + $0x18] sm:$0xff]
        %v527 = vld [vmem:[%s5 + $0x20] sm:$0xff]
        %v528 = vld [vmem:[%s5 + $0x28] sm:$0xff]
        %v529 = vld [vmem:[%s5 + $0x30] sm:$0xff]
        %v530 = vld [vmem:[%s5 + $0x38] sm:$0xff]
        %v539 = vunpack.c.l.b16 %v523
        %v540 = vunpack.c.h.b16 %v523
        %v541 = vunpack.c.l.b16 %v524
        %v542 = vunpack.c.h.b16 %v524
        %v543 = vunpack.c.l.b16 %v525
        %v544 = vunpack.c.h.b16 %v525
        %v545 = vunpack.c.l.b16 %v526
        %v546 = vunpack.c.h.b16 %v526
        %v547 = vunpack.c.l.b16 %v527
        %v548 = vunpack.c.h.b16 %v527
        %v549 = vunpack.c.l.b16 %v528
        %v550 = vunpack.c.h.b16 %v528
        %v551 = vunpack.c.l.b16 %v529
        %v552 = vunpack.c.h.b16 %v529
        %v553 = vunpack.c.l.b16 %v530
        %v554 = vunpack.c.h.b16 %v530
        %v555 = vpack.c.b16 %v543, %v539
        %v556 = vpack.c.b16 %v544, %v540
        %v557 = vpack.c.b16 %v545, %v541
        %v558 = vpack.c.b16 %v546, %v542
        %v559 = vpack.c.b16 %v551, %v547
        %v560 = vpack.c.b16 %v552, %v548
        %v561 = vpack.c.b16 %v553, %v549
        %v562 = vpack.c.b16 %v554, %v550
        %v572 = vsel %vm466, %v522, 0
        %574 = vmatpush.bf16.msra.mxu0 0
        %575 = vmatpush.bf16.msra.mxu0 0
        %576 = vmatpush.bf16.msra.mxu0 0
        %577 = vmatpush.bf16.msra.mxu0 0
        %578 = vmatpush.bf16.msra.mxu0 0
        %579 = vmatpush.bf16.msra.mxu0 0
        %580 = vmatpush.bf16.msra.mxu0 %v559
        %581 = vmatpush.bf16.msra.mxu0 %v555
        %582 = vmatmul.bf16.gmra.mxu0 %v572
        %v583 = vpop.f32.mrf.mxu0
        %v584 = vadd.f32 0.0, %v583
        %v585 = vpop.f32.mrf.mxu0
        %586 = vdwg.mxu0
        %587 = vmatpush.bf16.msra.mxu0 0
        %588 = vmatpush.bf16.msra.mxu0 0
        %589 = vmatpush.bf16.msra.mxu0 0
        %590 = vmatpush.bf16.msra.mxu0 0
        %591 = vmatpush.bf16.msra.mxu0 0
        %592 = vmatpush.bf16.msra.mxu0 0
        %593 = vmatpush.bf16.msra.mxu0 %v560
        %594 = vmatpush.bf16.msra.mxu0 %v556
        %595 = vmatmul.bf16.gmra.mxu0 %v572
        %v596 = vpop.f32.mrf.mxu0
        %v597 = vadd.f32 0.0, %v596
        %v598 = vpop.f32.mrf.mxu0
        %599 = vdwg.mxu0
        %600 = vmatpush.bf16.msra.mxu0 0
        %601 = vmatpush.bf16.msra.mxu0 0
        %602 = vmatpush.bf16.msra.mxu0 0
        %603 = vmatpush.bf16.msra.mxu0 0
        %604 = vmatpush.bf16.msra.mxu0 0
        %605 = vmatpush.bf16.msra.mxu0 0
        %606 = vmatpush.bf16.msra.mxu0 %v561
        %607 = vmatpush.bf16.msra.mxu0 %v557
        %608 = vmatmul.bf16.gmra.mxu0 %v572
        %v609 = vpop.f32.mrf.mxu0
        %v610 = vadd.f32 0.0, %v609
        %v611 = vpop.f32.mrf.mxu0
        %612 = vdwg.mxu0
        %613 = vmatpush.bf16.msra.mxu0 0
        %614 = vmatpush.bf16.msra.mxu0 0
        %615 = vmatpush.bf16.msra.mxu0 0
        %616 = vmatpush.bf16.msra.mxu0 0
        %617 = vmatpush.bf16.msra.mxu0 0
        %618 = vmatpush.bf16.msra.mxu0 0
        %619 = vmatpush.bf16.msra.mxu0 %v562
        %620 = vmatpush.bf16.msra.mxu0 %v558
        %621 = vmatmul.bf16.gmra.mxu0 %v572
        %v622 = vpop.f32.mrf.mxu0
        %v623 = vadd.f32 0.0, %v622
        %v624 = vpop.f32.mrf.mxu0
        %625 = vdwg.mxu0
        %v630 = vrot.slane %v493, 7
        %v631 = vrot.slane %v506, 6
        %v632 = vrot.slane %v519, 5
        %vm633 = vcmask 1040384
        %v634 = vsel %vm633, %v480, %v630
        %vm635 = vcmask 1042434
        %v636 = vsel %vm635, %v631, %v632
        %vm637 = vcmask 1041408
        %v638 = vsel %vm637, %v634, %v636
        %vm639 = vcmask 1041409
        %v640 = vsel %vm639, %v480, %v630
        %vm641 = vcmask 1043459
        %v642 = vsel %vm641, %v631, %v632
        %vm643 = vcmask 1042433
        %v644 = vsel %vm643, %v640, %v642
        %v645 = vrot.slane %v644, 1
        %v646 = vsel %vm635, %v480, %v630
        %vm647 = vcmask 1044484
        %v648 = vsel %vm647, %v631, %v632
        %vm649 = vcmask 1043458
        %v650 = vsel %vm649, %v646, %v648
        %v651 = vrot.slane %v650, 2
        %v652 = vsel %vm641, %v480, %v630
        %vm653 = vcmask 1045509
        %v654 = vsel %vm653, %v631, %v632
        %vm655 = vcmask 1044483
        %v656 = vsel %vm655, %v652, %v654
        %v657 = vrot.slane %v656, 3
        %v658 = vsel %vm647, %v480, %v630
        %vm659 = vcmask 1046534
        %v660 = vsel %vm659, %v631, %v632
        %vm661 = vcmask 1045508
        %v662 = vsel %vm661, %v658, %v660
        %v663 = vrot.slane %v662, 4
        %v664 = vsel %vm653, %v480, %v630
        %vm665 = vcmask 1046528
        %v666 = vsel %vm665, %v632, %v631
        %vm667 = vcmask 1046533
        %v668 = vsel %vm667, %v664, %v666
        %v669 = vrot.slane %v668, 5
        %v670 = vsel %vm659, %v480, %v630
        %v671 = vsel %vm633, %v631, %v632
        %vm672 = vcmask 1045504
        %v673 = vsel %vm672, %v671, %v670
        %v674 = vrot.slane %v673, 6
        %v675 = vsel %vm665, %v630, %v480
        %v676 = vsel %vm639, %v631, %v632
        %vm677 = vcmask 1046529
        %v678 = vsel %vm677, %v676, %v675
        %v679 = vrot.slane %v678, 7
        %v680 = vperm.slane %v638, 0
        %v681 = vperm.slane %v638, 1
        %v682 = vperm.slane %v638, 2
        %v683 = vperm.slane %v638, 3
        %v684 = vperm.slane %v645, 0
        %v685 = vperm.slane %v645, 1
        %v686 = vperm.slane %v645, 2
        %v687 = vperm.slane %v645, 3
        %v688 = vperm.slane %v651, 0
        %v689 = vperm.slane %v651, 1
        %v690 = vperm.slane %v651, 2
        %v691 = vperm.slane %v651, 3
        %v692 = vperm.slane %v657, 0
        %v693 = vperm.slane %v657, 1
        %v694 = vperm.slane %v657, 2
        %v695 = vperm.slane %v657, 3
        %v696 = vperm.slane %v663, 0
        %v697 = vperm.slane %v663, 1
        %v698 = vperm.slane %v663, 2
        %v699 = vperm.slane %v663, 3
        %v700 = vperm.slane %v669, 0
        %v701 = vperm.slane %v669, 1
        %v702 = vperm.slane %v669, 2
        %v703 = vperm.slane %v669, 3
        %v704 = vperm.slane %v674, 0
        %v705 = vperm.slane %v674, 1
        %v706 = vperm.slane %v674, 2
        %v707 = vperm.slane %v674, 3
        %v708 = vperm.slane %v679, 0
        %v709 = vperm.slane %v679, 1
        %v710 = vperm.slane %v679, 2
        %v711 = vperm.slane %v679, 3
        %v744 = vadd.f32 %v680, %v584
        %v745 = vadd.f32 %v681, %v597
        %v746 = vadd.f32 %v682, %v610
        %v747 = vadd.f32 %v683, %v623
        %v748 = vadd.f32 %v684, %v584
        %v749 = vadd.f32 %v685, %v597
        %v750 = vadd.f32 %v686, %v610
        %v751 = vadd.f32 %v687, %v623
        %v752 = vadd.f32 %v688, %v584
        %v753 = vadd.f32 %v689, %v597
        %v754 = vadd.f32 %v690, %v610
        %v755 = vadd.f32 %v691, %v623
        %v756 = vadd.f32 %v692, %v584
        %v757 = vadd.f32 %v693, %v597
        %v758 = vadd.f32 %v694, %v610
        %v759 = vadd.f32 %v695, %v623
        %v760 = vadd.f32 %v696, %v584
        %v761 = vadd.f32 %v697, %v597
        %v762 = vadd.f32 %v698, %v610
        %v763 = vadd.f32 %v699, %v623
        %v764 = vadd.f32 %v700, %v584
        %v765 = vadd.f32 %v701, %v597
        %v766 = vadd.f32 %v702, %v610
        %v767 = vadd.f32 %v703, %v623
        %v768 = vadd.f32 %v704, %v584
        %v769 = vadd.f32 %v705, %v597
        %v770 = vadd.f32 %v706, %v610
        %v771 = vadd.f32 %v707, %v623
        %v772 = vadd.f32 %v708, %v584
        %v773 = vadd.f32 %v709, %v597
        %v774 = vadd.f32 %v710, %v610
        %v775 = vadd.f32 %v711, %v623
        %vm776 = vcmp.gt.f32.partialorder %v744, 20.0
        %vm777 = vcmp.gt.f32.partialorder %v745, 20.0
        %vm778 = vcmp.gt.f32.partialorder %v746, 20.0
        %vm779 = vcmp.gt.f32.partialorder %v747, 20.0
        %vm780 = vcmp.gt.f32.partialorder %v748, 20.0
        %vm781 = vcmp.gt.f32.partialorder %v749, 20.0
        %vm782 = vcmp.gt.f32.partialorder %v750, 20.0
        %vm783 = vcmp.gt.f32.partialorder %v751, 20.0
        %vm784 = vcmp.gt.f32.partialorder %v752, 20.0
        %vm785 = vcmp.gt.f32.partialorder %v753, 20.0
        %vm786 = vcmp.gt.f32.partialorder %v754, 20.0
        %vm787 = vcmp.gt.f32.partialorder %v755, 20.0
        %vm788 = vcmp.gt.f32.partialorder %v756, 20.0
        %vm789 = vcmp.gt.f32.partialorder %v757, 20.0
        %vm790 = vcmp.gt.f32.partialorder %v758, 20.0
        %vm791 = vcmp.gt.f32.partialorder %v759, 20.0
        %vm792 = vcmp.gt.f32.partialorder %v760, 20.0
        %vm793 = vcmp.gt.f32.partialorder %v761, 20.0
        %vm794 = vcmp.gt.f32.partialorder %v762, 20.0
        %vm795 = vcmp.gt.f32.partialorder %v763, 20.0
        %vm796 = vcmp.gt.f32.partialorder %v764, 20.0
        %vm797 = vcmp.gt.f32.partialorder %v765, 20.0
        %vm798 = vcmp.gt.f32.partialorder %v766, 20.0
        %vm799 = vcmp.gt.f32.partialorder %v767, 20.0
        %vm800 = vcmp.gt.f32.partialorder %v768, 20.0
        %vm801 = vcmp.gt.f32.partialorder %v769, 20.0
        %vm802 = vcmp.gt.f32.partialorder %v770, 20.0
        %vm803 = vcmp.gt.f32.partialorder %v771, 20.0
        %vm804 = vcmp.gt.f32.partialorder %v772, 20.0
        %vm805 = vcmp.gt.f32.partialorder %v773, 20.0
        %vm806 = vcmp.gt.f32.partialorder %v774, 20.0
        %vm807 = vcmp.gt.f32.partialorder %v775, 20.0
        %v808 = vmin.f32 %v744, 20.0
        %v809 = vmin.f32 %v745, 20.0
        %v810 = vmin.f32 %v746, 20.0
        %v811 = vmin.f32 %v747, 20.0
        %v812 = vmin.f32 %v748, 20.0
        %v813 = vmin.f32 %v749, 20.0
        %v814 = vmin.f32 %v750, 20.0
        %v815 = vmin.f32 %v751, 20.0
        %v816 = vmin.f32 %v752, 20.0
        %v817 = vmin.f32 %v753, 20.0
        %v818 = vmin.f32 %v754, 20.0
        %v819 = vmin.f32 %v755, 20.0
        %v820 = vmin.f32 %v756, 20.0
        %v821 = vmin.f32 %v757, 20.0
        %v822 = vmin.f32 %v758, 20.0
        %v823 = vmin.f32 %v759, 20.0
        %v824 = vmin.f32 %v760, 20.0
        %v825 = vmin.f32 %v761, 20.0
        %v826 = vmin.f32 %v762, 20.0
        %v827 = vmin.f32 %v763, 20.0
        %v828 = vmin.f32 %v764, 20.0
        %v829 = vmin.f32 %v765, 20.0
        %v830 = vmin.f32 %v766, 20.0
        %v831 = vmin.f32 %v767, 20.0
        %v832 = vmin.f32 %v768, 20.0
        %v833 = vmin.f32 %v769, 20.0
        %v834 = vmin.f32 %v770, 20.0
        %v835 = vmin.f32 %v771, 20.0
        %v836 = vmin.f32 %v772, 20.0
        %v837 = vmin.f32 %v773, 20.0
        %v838 = vmin.f32 %v774, 20.0
        %v839 = vmin.f32 %v775, 20.0
        %v840 = vmul.f32 %v808, 1.442695
        %v841 = vpow.pop %v840
        %v842 = vmul.f32 %v809, 1.442695
        %v843 = vpow.pop %v842
        %v844 = vmul.f32 %v810, 1.442695
        %v845 = vpow.pop %v844
        %v846 = vmul.f32 %v811, 1.442695
        %v847 = vpow.pop %v846
        %v848 = vmul.f32 %v812, 1.442695
        %v849 = vpow.pop %v848
        %v850 = vmul.f32 %v813, 1.442695
        %v851 = vpow.pop %v850
        %v852 = vmul.f32 %v814, 1.442695
        %v853 = vpow.pop %v852
        %v854 = vmul.f32 %v815, 1.442695
        %v855 = vpow.pop %v854
        %v856 = vmul.f32 %v816, 1.442695
        %v857 = vpow.pop %v856
        %v858 = vmul.f32 %v817, 1.442695
        %v859 = vpow.pop %v858
        %v860 = vmul.f32 %v818, 1.442695
        %v861 = vpow.pop %v860
        %v862 = vmul.f32 %v819, 1.442695
        %v863 = vpow.pop %v862
        %v864 = vmul.f32 %v820, 1.442695
        %v865 = vpow.pop %v864
        %v866 = vmul.f32 %v821, 1.442695
        %v867 = vpow.pop %v866
        %v868 = vmul.f32 %v822, 1.442695
        %v869 = vpow.pop %v868
        %v870 = vmul.f32 %v823, 1.442695
        %v871 = vpow.pop %v870
        %v872 = vmul.f32 %v824, 1.442695
        %v873 = vpow.pop %v872
        %v874 = vmul.f32 %v825, 1.442695
        %v875 = vpow.pop %v874
        %v876 = vmul.f32 %v826, 1.442695
        %v877 = vpow.pop %v876
        %v878 = vmul.f32 %v827, 1.442695
        %v879 = vpow.pop %v878
        %v880 = vmul.f32 %v828, 1.442695
        %v881 = vpow.pop %v880
        %v882 = vmul.f32 %v829, 1.442695
        %v883 = vpow.pop %v882
        %v884 = vmul.f32 %v830, 1.442695
        %v885 = vpow.pop %v884
        %v886 = vmul.f32 %v831, 1.442695
        %v887 = vpow.pop %v886
        %v888 = vmul.f32 %v832, 1.442695
        %v889 = vpow.pop %v888
        %v890 = vmul.f32 %v833, 1.442695
        %v891 = vpow.pop %v890
        %v892 = vmul.f32 %v834, 1.442695
        %v893 = vpow.pop %v892
        %v894 = vmul.f32 %v835, 1.442695
        %v895 = vpow.pop %v894
        %v896 = vmul.f32 %v836, 1.442695
        %v897 = vpow.pop %v896
        %v898 = vmul.f32 %v837, 1.442695
        %v899 = vpow.pop %v898
        %v900 = vmul.f32 %v838, 1.442695
        %v901 = vpow.pop %v900
        %v902 = vmul.f32 %v839, 1.442695
        %v903 = vpow.pop %v902
        %v904 = vadd.f32 %v841, 1.0
        %v905 = vlog2.pop %v904
        %v906 = vmul.f32 %v905, 0.6931472
        %v907 = vmul.f32 -0.5, %v841
        %v908 = vadd.f32 %v907, 1.0
        %v909 = vmul.f32 %v908, %v841
        %v910 = vand.u32 2147483647, %v841
        %vm911 = vcmp.lt.f32.partialorder %v910, 0.0004427343
        %v912 = vsel %vm911, %v909, %v906
        %v913 = vadd.f32 %v843, 1.0
        %v914 = vlog2.pop %v913
        %v915 = vmul.f32 %v914, 0.6931472
        %v916 = vmul.f32 -0.5, %v843
        %v917 = vadd.f32 %v916, 1.0
        %v918 = vmul.f32 %v917, %v843
        %v919 = vand.u32 2147483647, %v843
        %vm920 = vcmp.lt.f32.partialorder %v919, 0.0004427343
        %v921 = vsel %vm920, %v918, %v915
        %v922 = vadd.f32 %v845, 1.0
        %v923 = vlog2.pop %v922
        %v924 = vmul.f32 %v923, 0.6931472
        %v925 = vmul.f32 -0.5, %v845
        %v926 = vadd.f32 %v925, 1.0
        %v927 = vmul.f32 %v926, %v845
        %v928 = vand.u32 2147483647, %v845
        %vm929 = vcmp.lt.f32.partialorder %v928, 0.0004427343
        %v930 = vsel %vm929, %v927, %v924
        %v931 = vadd.f32 %v847, 1.0
        %v932 = vlog2.pop %v931
        %v933 = vmul.f32 %v932, 0.6931472
        %v934 = vmul.f32 -0.5, %v847
        %v935 = vadd.f32 %v934, 1.0
        %v936 = vmul.f32 %v935, %v847
        %v937 = vand.u32 2147483647, %v847
        %vm938 = vcmp.lt.f32.partialorder %v937, 0.0004427343
        %v939 = vsel %vm938, %v936, %v933
        %v940 = vadd.f32 %v849, 1.0
        %v941 = vlog2.pop %v940
        %v942 = vmul.f32 %v941, 0.6931472
        %v943 = vmul.f32 -0.5, %v849
        %v944 = vadd.f32 %v943, 1.0
        %v945 = vmul.f32 %v944, %v849
        %v946 = vand.u32 2147483647, %v849
        %vm947 = vcmp.lt.f32.partialorder %v946, 0.0004427343
        %v948 = vsel %vm947, %v945, %v942
        %v949 = vadd.f32 %v851, 1.0
        %v950 = vlog2.pop %v949
        %v951 = vmul.f32 %v950, 0.6931472
        %v952 = vmul.f32 -0.5, %v851
        %v953 = vadd.f32 %v952, 1.0
        %v954 = vmul.f32 %v953, %v851
        %v955 = vand.u32 2147483647, %v851
        %vm956 = vcmp.lt.f32.partialorder %v955, 0.0004427343
        %v957 = vsel %vm956, %v954, %v951
        %v958 = vadd.f32 %v853, 1.0
        %v959 = vlog2.pop %v958
        %v960 = vmul.f32 %v959, 0.6931472
        %v961 = vmul.f32 -0.5, %v853
        %v962 = vadd.f32 %v961, 1.0
        %v963 = vmul.f32 %v962, %v853
        %v964 = vand.u32 2147483647, %v853
        %vm965 = vcmp.lt.f32.partialorder %v964, 0.0004427343
        %v966 = vsel %vm965, %v963, %v960
        %v967 = vadd.f32 %v855, 1.0
        %v968 = vlog2.pop %v967
        %v969 = vmul.f32 %v968, 0.6931472
        %v970 = vmul.f32 -0.5, %v855
        %v971 = vadd.f32 %v970, 1.0
        %v972 = vmul.f32 %v971, %v855
        %v973 = vand.u32 2147483647, %v855
        %vm974 = vcmp.lt.f32.partialorder %v973, 0.0004427343
        %v975 = vsel %vm974, %v972, %v969
        %v976 = vadd.f32 %v857, 1.0
        %v977 = vlog2.pop %v976
        %v978 = vmul.f32 %v977, 0.6931472
        %v979 = vmul.f32 -0.5, %v857
        %v980 = vadd.f32 %v979, 1.0
        %v981 = vmul.f32 %v980, %v857
        %v982 = vand.u32 2147483647, %v857
        %vm983 = vcmp.lt.f32.partialorder %v982, 0.0004427343
        %v984 = vsel %vm983, %v981, %v978
        %v985 = vadd.f32 %v859, 1.0
        %v986 = vlog2.pop %v985
        %v987 = vmul.f32 %v986, 0.6931472
        %v988 = vmul.f32 -0.5, %v859
        %v989 = vadd.f32 %v988, 1.0
        %v990 = vmul.f32 %v989, %v859
        %v991 = vand.u32 2147483647, %v859
        %vm992 = vcmp.lt.f32.partialorder %v991, 0.0004427343
        %v993 = vsel %vm992, %v990, %v987
        %v994 = vadd.f32 %v861, 1.0
        %v995 = vlog2.pop %v994
        %v996 = vmul.f32 %v995, 0.6931472
        %v997 = vmul.f32 -0.5, %v861
        %v998 = vadd.f32 %v997, 1.0
        %v999 = vmul.f32 %v998, %v861
        %v1000 = vand.u32 2147483647, %v861
        %vm1001 = vcmp.lt.f32.partialorder %v1000, 0.0004427343
        %v1002 = vsel %vm1001, %v999, %v996
        %v1003 = vadd.f32 %v863, 1.0
        %v1004 = vlog2.pop %v1003
        %v1005 = vmul.f32 %v1004, 0.6931472
        %v1006 = vmul.f32 -0.5, %v863
        %v1007 = vadd.f32 %v1006, 1.0
        %v1008 = vmul.f32 %v1007, %v863
        %v1009 = vand.u32 2147483647, %v863
        %vm1010 = vcmp.lt.f32.partialorder %v1009, 0.0004427343
        %v1011 = vsel %vm1010, %v1008, %v1005
        %v1012 = vadd.f32 %v865, 1.0
        %v1013 = vlog2.pop %v1012
        %v1014 = vmul.f32 %v1013, 0.6931472
        %v1015 = vmul.f32 -0.5, %v865
        %v1016 = vadd.f32 %v1015, 1.0
        %v1017 = vmul.f32 %v1016, %v865
        %v1018 = vand.u32 2147483647, %v865
        %vm1019 = vcmp.lt.f32.partialorder %v1018, 0.0004427343
        %v1020 = vsel %vm1019, %v1017, %v1014
        %v1021 = vadd.f32 %v867, 1.0
        %v1022 = vlog2.pop %v1021
        %v1023 = vmul.f32 %v1022, 0.6931472
        %v1024 = vmul.f32 -0.5, %v867
        %v1025 = vadd.f32 %v1024, 1.0
        %v1026 = vmul.f32 %v1025, %v867
        %v1027 = vand.u32 2147483647, %v867
        %vm1028 = vcmp.lt.f32.partialorder %v1027, 0.0004427343
        %v1029 = vsel %vm1028, %v1026, %v1023
        %v1030 = vadd.f32 %v869, 1.0
        %v1031 = vlog2.pop %v1030
        %v1032 = vmul.f32 %v1031, 0.6931472
        %v1033 = vmul.f32 -0.5, %v869
        %v1034 = vadd.f32 %v1033, 1.0
        %v1035 = vmul.f32 %v1034, %v869
        %v1036 = vand.u32 2147483647, %v869
        %vm1037 = vcmp.lt.f32.partialorder %v1036, 0.0004427343
        %v1038 = vsel %vm1037, %v1035, %v1032
        %v1039 = vadd.f32 %v871, 1.0
        %v1040 = vlog2.pop %v1039
        %v1041 = vmul.f32 %v1040, 0.6931472
        %v1042 = vmul.f32 -0.5, %v871
        %v1043 = vadd.f32 %v1042, 1.0
        %v1044 = vmul.f32 %v1043, %v871
        %v1045 = vand.u32 2147483647, %v871
        %vm1046 = vcmp.lt.f32.partialorder %v1045, 0.0004427343
        %v1047 = vsel %vm1046, %v1044, %v1041
        %v1048 = vadd.f32 %v873, 1.0
        %v1049 = vlog2.pop %v1048
        %v1050 = vmul.f32 %v1049, 0.6931472
        %v1051 = vmul.f32 -0.5, %v873
        %v1052 = vadd.f32 %v1051, 1.0
        %v1053 = vmul.f32 %v1052, %v873
        %v1054 = vand.u32 2147483647, %v873
        %vm1055 = vcmp.lt.f32.partialorder %v1054, 0.0004427343
        %v1056 = vsel %vm1055, %v1053, %v1050
        %v1057 = vadd.f32 %v875, 1.0
        %v1058 = vlog2.pop %v1057
        %v1059 = vmul.f32 %v1058, 0.6931472
        %v1060 = vmul.f32 -0.5, %v875
        %v1061 = vadd.f32 %v1060, 1.0
        %v1062 = vmul.f32 %v1061, %v875
        %v1063 = vand.u32 2147483647, %v875
        %vm1064 = vcmp.lt.f32.partialorder %v1063, 0.0004427343
        %v1065 = vsel %vm1064, %v1062, %v1059
        %v1066 = vadd.f32 %v877, 1.0
        %v1067 = vlog2.pop %v1066
        %v1068 = vmul.f32 %v1067, 0.6931472
        %v1069 = vmul.f32 -0.5, %v877
        %v1070 = vadd.f32 %v1069, 1.0
        %v1071 = vmul.f32 %v1070, %v877
        %v1072 = vand.u32 2147483647, %v877
        %vm1073 = vcmp.lt.f32.partialorder %v1072, 0.0004427343
        %v1074 = vsel %vm1073, %v1071, %v1068
        %v1075 = vadd.f32 %v879, 1.0
        %v1076 = vlog2.pop %v1075
        %v1077 = vmul.f32 %v1076, 0.6931472
        %v1078 = vmul.f32 -0.5, %v879
        %v1079 = vadd.f32 %v1078, 1.0
        %v1080 = vmul.f32 %v1079, %v879
        %v1081 = vand.u32 2147483647, %v879
        %vm1082 = vcmp.lt.f32.partialorder %v1081, 0.0004427343
        %v1083 = vsel %vm1082, %v1080, %v1077
        %v1084 = vadd.f32 %v881, 1.0
        %v1085 = vlog2.pop %v1084
        %v1086 = vmul.f32 %v1085, 0.6931472
        %v1087 = vmul.f32 -0.5, %v881
        %v1088 = vadd.f32 %v1087, 1.0
        %v1089 = vmul.f32 %v1088, %v881
        %v1090 = vand.u32 2147483647, %v881
        %vm1091 = vcmp.lt.f32.partialorder %v1090, 0.0004427343
        %v1092 = vsel %vm1091, %v1089, %v1086
        %v1093 = vadd.f32 %v883, 1.0
        %v1094 = vlog2.pop %v1093
        %v1095 = vmul.f32 %v1094, 0.6931472
        %v1096 = vmul.f32 -0.5, %v883
        %v1097 = vadd.f32 %v1096, 1.0
        %v1098 = vmul.f32 %v1097, %v883
        %v1099 = vand.u32 2147483647, %v883
        %vm1100 = vcmp.lt.f32.partialorder %v1099, 0.0004427343
        %v1101 = vsel %vm1100, %v1098, %v1095
        %v1102 = vadd.f32 %v885, 1.0
        %v1103 = vlog2.pop %v1102
        %v1104 = vmul.f32 %v1103, 0.6931472
        %v1105 = vmul.f32 -0.5, %v885
        %v1106 = vadd.f32 %v1105, 1.0
        %v1107 = vmul.f32 %v1106, %v885
        %v1108 = vand.u32 2147483647, %v885
        %vm1109 = vcmp.lt.f32.partialorder %v1108, 0.0004427343
        %v1110 = vsel %vm1109, %v1107, %v1104
        %v1111 = vadd.f32 %v887, 1.0
        %v1112 = vlog2.pop %v1111
        %v1113 = vmul.f32 %v1112, 0.6931472
        %v1114 = vmul.f32 -0.5, %v887
        %v1115 = vadd.f32 %v1114, 1.0
        %v1116 = vmul.f32 %v1115, %v887
        %v1117 = vand.u32 2147483647, %v887
        %vm1118 = vcmp.lt.f32.partialorder %v1117, 0.0004427343
        %v1119 = vsel %vm1118, %v1116, %v1113
        %v1120 = vadd.f32 %v889, 1.0
        %v1121 = vlog2.pop %v1120
        %v1122 = vmul.f32 %v1121, 0.6931472
        %v1123 = vmul.f32 -0.5, %v889
        %v1124 = vadd.f32 %v1123, 1.0
        %v1125 = vmul.f32 %v1124, %v889
        %v1126 = vand.u32 2147483647, %v889
        %vm1127 = vcmp.lt.f32.partialorder %v1126, 0.0004427343
        %v1128 = vsel %vm1127, %v1125, %v1122
        %v1129 = vadd.f32 %v891, 1.0
        %v1130 = vlog2.pop %v1129
        %v1131 = vmul.f32 %v1130, 0.6931472
        %v1132 = vmul.f32 -0.5, %v891
        %v1133 = vadd.f32 %v1132, 1.0
        %v1134 = vmul.f32 %v1133, %v891
        %v1135 = vand.u32 2147483647, %v891
        %vm1136 = vcmp.lt.f32.partialorder %v1135, 0.0004427343
        %v1137 = vsel %vm1136, %v1134, %v1131
        %v1138 = vadd.f32 %v893, 1.0
        %v1139 = vlog2.pop %v1138
        %v1140 = vmul.f32 %v1139, 0.6931472
        %v1141 = vmul.f32 -0.5, %v893
        %v1142 = vadd.f32 %v1141, 1.0
        %v1143 = vmul.f32 %v1142, %v893
        %v1144 = vand.u32 2147483647, %v893
        %vm1145 = vcmp.lt.f32.partialorder %v1144, 0.0004427343
        %v1146 = vsel %vm1145, %v1143, %v1140
        %v1147 = vadd.f32 %v895, 1.0
        %v1148 = vlog2.pop %v1147
        %v1149 = vmul.f32 %v1148, 0.6931472
        %v1150 = vmul.f32 -0.5, %v895
        %v1151 = vadd.f32 %v1150, 1.0
        %v1152 = vmul.f32 %v1151, %v895
        %v1153 = vand.u32 2147483647, %v895
        %vm1154 = vcmp.lt.f32.partialorder %v1153, 0.0004427343
        %v1155 = vsel %vm1154, %v1152, %v1149
        %v1156 = vadd.f32 %v897, 1.0
        %v1157 = vlog2.pop %v1156
        %v1158 = vmul.f32 %v1157, 0.6931472
        %v1159 = vmul.f32 -0.5, %v897
        %v1160 = vadd.f32 %v1159, 1.0
        %v1161 = vmul.f32 %v1160, %v897
        %v1162 = vand.u32 2147483647, %v897
        %vm1163 = vcmp.lt.f32.partialorder %v1162, 0.0004427343
        %v1164 = vsel %vm1163, %v1161, %v1158
        %v1165 = vadd.f32 %v899, 1.0
        %v1166 = vlog2.pop %v1165
        %v1167 = vmul.f32 %v1166, 0.6931472
        %v1168 = vmul.f32 -0.5, %v899
        %v1169 = vadd.f32 %v1168, 1.0
        %v1170 = vmul.f32 %v1169, %v899
        %v1171 = vand.u32 2147483647, %v899
        %vm1172 = vcmp.lt.f32.partialorder %v1171, 0.0004427343
        %v1173 = vsel %vm1172, %v1170, %v1167
        %v1174 = vadd.f32 %v901, 1.0
        %v1175 = vlog2.pop %v1174
        %v1176 = vmul.f32 %v1175, 0.6931472
        %v1177 = vmul.f32 -0.5, %v901
        %v1178 = vadd.f32 %v1177, 1.0
        %v1179 = vmul.f32 %v1178, %v901
        %v1180 = vand.u32 2147483647, %v901
        %vm1181 = vcmp.lt.f32.partialorder %v1180, 0.0004427343
        %v1182 = vsel %vm1181, %v1179, %v1176
        %v1183 = vadd.f32 %v903, 1.0
        %v1184 = vlog2.pop %v1183
        %v1185 = vmul.f32 %v1184, 0.6931472
        %v1186 = vmul.f32 -0.5, %v903
        %v1187 = vadd.f32 %v1186, 1.0
        %v1188 = vmul.f32 %v1187, %v903
        %v1189 = vand.u32 2147483647, %v903
        %vm1190 = vcmp.lt.f32.partialorder %v1189, 0.0004427343
        %v1191 = vsel %vm1190, %v1188, %v1185
        %v1192 = vsel %vm776, %v744, %v912
        %v1193 = vsel %vm777, %v745, %v921
        %v1194 = vsel %vm778, %v746, %v930
        %v1195 = vsel %vm779, %v747, %v939
        %v1196 = vsel %vm780, %v748, %v948
        %v1197 = vsel %vm781, %v749, %v957
        %v1198 = vsel %vm782, %v750, %v966
        %v1199 = vsel %vm783, %v751, %v975
        %v1200 = vsel %vm784, %v752, %v984
        %v1201 = vsel %vm785, %v753, %v993
        %v1202 = vsel %vm786, %v754, %v1002
        %v1203 = vsel %vm787, %v755, %v1011
        %v1204 = vsel %vm788, %v756, %v1020
        %v1205 = vsel %vm789, %v757, %v1029
        %v1206 = vsel %vm790, %v758, %v1038
        %v1207 = vsel %vm791, %v759, %v1047
        %v1208 = vsel %vm792, %v760, %v1056
        %v1209 = vsel %vm793, %v761, %v1065
        %v1210 = vsel %vm794, %v762, %v1074
        %v1211 = vsel %vm795, %v763, %v1083
        %v1212 = vsel %vm796, %v764, %v1092
        %v1213 = vsel %vm797, %v765, %v1101
        %v1214 = vsel %vm798, %v766, %v1110
        %v1215 = vsel %vm799, %v767, %v1119
        %v1216 = vsel %vm800, %v768, %v1128
        %v1217 = vsel %vm801, %v769, %v1137
        %v1218 = vsel %vm802, %v770, %v1146
        %v1219 = vsel %vm803, %v771, %v1155
        %v1220 = vsel %vm804, %v772, %v1164
        %v1221 = vsel %vm805, %v773, %v1173
        %v1222 = vsel %vm806, %v774, %v1182
        %v1223 = vsel %vm807, %v775, %v1191
        %v1224 = vpack.c.bf16 %v1196, %v1192
        %v1225 = vpack.c.bf16 %v1197, %v1193
        %v1226 = vpack.c.bf16 %v1198, %v1194
        %v1227 = vpack.c.bf16 %v1199, %v1195
        %v1228 = vpack.c.bf16 %v1204, %v1200
        %v1229 = vpack.c.bf16 %v1205, %v1201
        %v1230 = vpack.c.bf16 %v1206, %v1202
        %v1231 = vpack.c.bf16 %v1207, %v1203
        %v1232 = vpack.c.bf16 %v1212, %v1208
        %v1233 = vpack.c.bf16 %v1213, %v1209
        %v1234 = vpack.c.bf16 %v1214, %v1210
        %v1235 = vpack.c.bf16 %v1215, %v1211
        %v1236 = vpack.c.bf16 %v1220, %v1216
        %v1237 = vpack.c.bf16 %v1221, %v1217
        %v1238 = vpack.c.bf16 %v1222, %v1218
        %v1239 = vpack.c.bf16 %v1223, %v1219
        %v1240 = vld [vmem:[#allocation7] sm:$0xff]
        %v1241 = vld [vmem:[#allocation7 + $0x8] sm:$0xff]
        %v1242 = vld [vmem:[#allocation7 + $0x10] sm:$0xff]
        %v1243 = vld [vmem:[#allocation7 + $0x18] sm:$0xff]
        %v1244 = vld [vmem:[#allocation7 + $0x20] sm:$0xff]
        %v1245 = vld [vmem:[#allocation7 + $0x28] sm:$0xff]
        %v1246 = vld [vmem:[#allocation7 + $0x30] sm:$0xff]
        %v1247 = vld [vmem:[#allocation7 + $0x38] sm:$0xff]
        %v1248 = vld [vmem:[#allocation7 + $0x40] sm:$0xff]
        %v1249 = vld [vmem:[#allocation7 + $0x48] sm:$0xff]
        %v1250 = vld [vmem:[#allocation7 + $0x50] sm:$0xff]
        %v1251 = vld [vmem:[#allocation7 + $0x58] sm:$0xff]
        %v1252 = vld [vmem:[#allocation7 + $0x60] sm:$0xff]
        %v1253 = vld [vmem:[#allocation7 + $0x68] sm:$0xff]
        %v1254 = vld [vmem:[#allocation7 + $0x70] sm:$0xff]
        %v1255 = vld [vmem:[#allocation7 + $0x78] sm:$0xff]
        %v1256 = vld [vmem:[#allocation7 + $0x80] sm:$0xff]
        %v1257 = vld [vmem:[#allocation7 + $0x88] sm:$0xff]
        %v1258 = vld [vmem:[#allocation7 + $0x90] sm:$0xff]
        %v1259 = vld [vmem:[#allocation7 + $0x98] sm:$0xff]
        %v1260 = vld [vmem:[#allocation7 + $0xa0] sm:$0xff]
        %v1261 = vld [vmem:[#allocation7 + $0xa8] sm:$0xff]
        %v1262 = vld [vmem:[#allocation7 + $0xb0] sm:$0xff]
        %v1263 = vld [vmem:[#allocation7 + $0xb8] sm:$0xff]
        %v1264 = vld [vmem:[#allocation7 + $0xc0] sm:$0xff]
        %v1265 = vld [vmem:[#allocation7 + $0xc8] sm:$0xff]
        %v1266 = vld [vmem:[#allocation7 + $0xd0] sm:$0xff]
        %v1267 = vld [vmem:[#allocation7 + $0xd8] sm:$0xff]
        %v1268 = vld [vmem:[#allocation7 + $0xe0] sm:$0xff]
        %v1269 = vld [vmem:[#allocation7 + $0xe8] sm:$0xff]
        %v1270 = vld [vmem:[#allocation7 + $0xf0] sm:$0xff]
        %v1271 = vld [vmem:[#allocation7 + $0xf8] sm:$0xff]
        %v1272 = vld [vmem:[#allocation7 + $0x100] sm:$0xff]
        %v1273 = vld [vmem:[#allocation7 + $0x108] sm:$0xff]
        %v1274 = vld [vmem:[#allocation7 + $0x110] sm:$0xff]
        %v1275 = vld [vmem:[#allocation7 + $0x118] sm:$0xff]
        %v1276 = vld [vmem:[#allocation7 + $0x120] sm:$0xff]
        %v1277 = vld [vmem:[#allocation7 + $0x128] sm:$0xff]
        %v1278 = vld [vmem:[#allocation7 + $0x130] sm:$0xff]
        %v1279 = vld [vmem:[#allocation7 + $0x138] sm:$0xff]
        %v1280 = vld [vmem:[#allocation7 + $0x140] sm:$0xff]
        %v1281 = vld [vmem:[#allocation7 + $0x148] sm:$0xff]
        %v1282 = vld [vmem:[#allocation7 + $0x150] sm:$0xff]
        %v1283 = vld [vmem:[#allocation7 + $0x158] sm:$0xff]
        %v1284 = vld [vmem:[#allocation7 + $0x160] sm:$0xff]
        %v1285 = vld [vmem:[#allocation7 + $0x168] sm:$0xff]
        %v1286 = vld [vmem:[#allocation7 + $0x170] sm:$0xff]
        %v1287 = vld [vmem:[#allocation7 + $0x178] sm:$0xff]
        %v1288 = vld [vmem:[#allocation7 + $0x180] sm:$0xff]
        %v1289 = vld [vmem:[#allocation7 + $0x188] sm:$0xff]
        %v1290 = vld [vmem:[#allocation7 + $0x190] sm:$0xff]
        %v1291 = vld [vmem:[#allocation7 + $0x198] sm:$0xff]
        %v1292 = vld [vmem:[#allocation7 + $0x1a0] sm:$0xff]
        %v1293 = vld [vmem:[#allocation7 + $0x1a8] sm:$0xff]
        %v1294 = vld [vmem:[#allocation7 + $0x1b0] sm:$0xff]
        %v1295 = vld [vmem:[#allocation7 + $0x1b8] sm:$0xff]
        %v1296 = vld [vmem:[#allocation7 + $0x1c0] sm:$0xff]
        %v1297 = vld [vmem:[#allocation7 + $0x1c8] sm:$0xff]
        %v1298 = vld [vmem:[#allocation7 + $0x1d0] sm:$0xff]
        %v1299 = vld [vmem:[#allocation7 + $0x1d8] sm:$0xff]
        %v1300 = vld [vmem:[#allocation7 + $0x1e0] sm:$0xff]
        %v1301 = vld [vmem:[#allocation7 + $0x1e8] sm:$0xff]
        %v1302 = vld [vmem:[#allocation7 + $0x1f0] sm:$0xff]
        %v1303 = vld [vmem:[#allocation7 + $0x1f8] sm:$0xff]
        %v1304 = vld [vmem:[#allocation7 + $0x200] sm:$0xff]
        %v1305 = vld [vmem:[#allocation7 + $0x208] sm:$0xff]
        %v1306 = vld [vmem:[#allocation7 + $0x210] sm:$0xff]
        %v1307 = vld [vmem:[#allocation7 + $0x218] sm:$0xff]
        %v1308 = vld [vmem:[#allocation7 + $0x220] sm:$0xff]
        %v1309 = vld [vmem:[#allocation7 + $0x228] sm:$0xff]
        %v1310 = vld [vmem:[#allocation7 + $0x230] sm:$0xff]
        %v1311 = vld [vmem:[#allocation7 + $0x238] sm:$0xff]
        %v1312 = vld [vmem:[#allocation7 + $0x240] sm:$0xff]
        %v1313 = vld [vmem:[#allocation7 + $0x248] sm:$0xff]
        %v1314 = vld [vmem:[#allocation7 + $0x250] sm:$0xff]
        %v1315 = vld [vmem:[#allocation7 + $0x258] sm:$0xff]
        %v1316 = vld [vmem:[#allocation7 + $0x260] sm:$0xff]
        %v1317 = vld [vmem:[#allocation7 + $0x268] sm:$0xff]
        %v1318 = vld [vmem:[#allocation7 + $0x270] sm:$0xff]
        %v1319 = vld [vmem:[#allocation7 + $0x278] sm:$0xff]
        %v1320 = vld [vmem:[#allocation7 + $0x280] sm:$0xff]
        %v1321 = vld [vmem:[#allocation7 + $0x288] sm:$0xff]
        %v1322 = vld [vmem:[#allocation7 + $0x290] sm:$0xff]
        %v1323 = vld [vmem:[#allocation7 + $0x298] sm:$0xff]
        %v1324 = vld [vmem:[#allocation7 + $0x2a0] sm:$0xff]
        %v1325 = vld [vmem:[#allocation7 + $0x2a8] sm:$0xff]
        %v1326 = vld [vmem:[#allocation7 + $0x2b0] sm:$0xff]
        %v1327 = vld [vmem:[#allocation7 + $0x2b8] sm:$0xff]
        %v1328 = vld [vmem:[#allocation7 + $0x2c0] sm:$0xff]
        %v1329 = vld [vmem:[#allocation7 + $0x2c8] sm:$0xff]
        %v1330 = vld [vmem:[#allocation7 + $0x2d0] sm:$0xff]
        %v1331 = vld [vmem:[#allocation7 + $0x2d8] sm:$0xff]
        %v1332 = vld [vmem:[#allocation7 + $0x2e0] sm:$0xff]
        %v1333 = vld [vmem:[#allocation7 + $0x2e8] sm:$0xff]
        %v1334 = vld [vmem:[#allocation7 + $0x2f0] sm:$0xff]
        %v1335 = vld [vmem:[#allocation7 + $0x2f8] sm:$0xff]
        %v1336 = vld [vmem:[#allocation7 + $0x300] sm:$0xff]
        %v1337 = vld [vmem:[#allocation7 + $0x308] sm:$0xff]
        %v1338 = vld [vmem:[#allocation7 + $0x310] sm:$0xff]
        %v1339 = vld [vmem:[#allocation7 + $0x318] sm:$0xff]
        %v1340 = vld [vmem:[#allocation7 + $0x320] sm:$0xff]
        %v1341 = vld [vmem:[#allocation7 + $0x328] sm:$0xff]
        %v1342 = vld [vmem:[#allocation7 + $0x330] sm:$0xff]
        %v1343 = vld [vmem:[#allocation7 + $0x338] sm:$0xff]
        %v1344 = vld [vmem:[#allocation7 + $0x340] sm:$0xff]
        %v1345 = vld [vmem:[#allocation7 + $0x348] sm:$0xff]
        %v1346 = vld [vmem:[#allocation7 + $0x350] sm:$0xff]
        %v1347 = vld [vmem:[#allocation7 + $0x358] sm:$0xff]
        %v1348 = vld [vmem:[#allocation7 + $0x360] sm:$0xff]
        %v1349 = vld [vmem:[#allocation7 + $0x368] sm:$0xff]
        %v1350 = vld [vmem:[#allocation7 + $0x370] sm:$0xff]
        %v1351 = vld [vmem:[#allocation7 + $0x378] sm:$0xff]
        %v1352 = vld [vmem:[#allocation7 + $0x380] sm:$0xff]
        %v1353 = vld [vmem:[#allocation7 + $0x388] sm:$0xff]
        %v1354 = vld [vmem:[#allocation7 + $0x390] sm:$0xff]
        %v1355 = vld [vmem:[#allocation7 + $0x398] sm:$0xff]
        %v1356 = vld [vmem:[#allocation7 + $0x3a0] sm:$0xff]
        %v1357 = vld [vmem:[#allocation7 + $0x3a8] sm:$0xff]
        %v1358 = vld [vmem:[#allocation7 + $0x3b0] sm:$0xff]
        %v1359 = vld [vmem:[#allocation7 + $0x3b8] sm:$0xff]
        %v1360 = vld [vmem:[#allocation7 + $0x3c0] sm:$0xff]
        %v1361 = vld [vmem:[#allocation7 + $0x3c8] sm:$0xff]
        %v1362 = vld [vmem:[#allocation7 + $0x3d0] sm:$0xff]
        %v1363 = vld [vmem:[#allocation7 + $0x3d8] sm:$0xff]
        %v1364 = vld [vmem:[#allocation7 + $0x3e0] sm:$0xff]
        %v1365 = vld [vmem:[#allocation7 + $0x3e8] sm:$0xff]
        %v1366 = vld [vmem:[#allocation7 + $0x3f0] sm:$0xff]
        %v1367 = vld [vmem:[#allocation7 + $0x3f8] sm:$0xff]
        %v1368 = vld [vmem:[%s8] sm:$0xf]
        %v1370 = vperm.slane %v1368, 0
        %v1371 = vperm.slane %v1368, 1
        %v1372 = vperm.slane %v1368, 2
        %v1373 = vperm.slane %v1368, 3
        %v1506 = vunpack.c.l.b16 %v1240
        %v1507 = vunpack.c.h.b16 %v1240
        %v1508 = vunpack.c.l.b16 %v1241
        %v1509 = vunpack.c.h.b16 %v1241
        %v1510 = vunpack.c.l.b16 %v1242
        %v1511 = vunpack.c.h.b16 %v1242
        %v1512 = vunpack.c.l.b16 %v1243
        %v1513 = vunpack.c.h.b16 %v1243
        %v1514 = vunpack.c.l.b16 %v1244
        %v1515 = vunpack.c.h.b16 %v1244
        %v1516 = vunpack.c.l.b16 %v1245
        %v1517 = vunpack.c.h.b16 %v1245
        %v1518 = vunpack.c.l.b16 %v1246
        %v1519 = vunpack.c.h.b16 %v1246
        %v1520 = vunpack.c.l.b16 %v1247
        %v1521 = vunpack.c.h.b16 %v1247
        %v1522 = vunpack.c.l.b16 %v1248
        %v1523 = vunpack.c.h.b16 %v1248
        %v1524 = vunpack.c.l.b16 %v1249
        %v1525 = vunpack.c.h.b16 %v1249
        %v1526 = vunpack.c.l.b16 %v1250
        %v1527 = vunpack.c.h.b16 %v1250
        %v1528 = vunpack.c.l.b16 %v1251
        %v1529 = vunpack.c.h.b16 %v1251
        %v1530 = vunpack.c.l.b16 %v1252
        %v1531 = vunpack.c.h.b16 %v1252
        %v1532 = vunpack.c.l.b16 %v1253
        %v1533 = vunpack.c.h.b16 %v1253
        %v1534 = vunpack.c.l.b16 %v1254
        %v1535 = vunpack.c.h.b16 %v1254
        %v1536 = vunpack.c.l.b16 %v1255
        %v1537 = vunpack.c.h.b16 %v1255
        %v1538 = vunpack.c.l.b16 %v1256
        %v1539 = vunpack.c.h.b16 %v1256
        %v1540 = vunpack.c.l.b16 %v1257
        %v1541 = vunpack.c.h.b16 %v1257
        %v1542 = vunpack.c.l.b16 %v1258
        %v1543 = vunpack.c.h.b16 %v1258
        %v1544 = vunpack.c.l.b16 %v1259
        %v1545 = vunpack.c.h.b16 %v1259
        %v1546 = vunpack.c.l.b16 %v1260
        %v1547 = vunpack.c.h.b16 %v1260
        %v1548 = vunpack.c.l.b16 %v1261
        %v1549 = vunpack.c.h.b16 %v1261
        %v1550 = vunpack.c.l.b16 %v1262
        %v1551 = vunpack.c.h.b16 %v1262
        %v1552 = vunpack.c.l.b16 %v1263
        %v1553 = vunpack.c.h.b16 %v1263
        %v1554 = vunpack.c.l.b16 %v1264
        %v1555 = vunpack.c.h.b16 %v1264
        %v1556 = vunpack.c.l.b16 %v1265
        %v1557 = vunpack.c.h.b16 %v1265
        %v1558 = vunpack.c.l.b16 %v1266
        %v1559 = vunpack.c.h.b16 %v1266
        %v1560 = vunpack.c.l.b16 %v1267
        %v1561 = vunpack.c.h.b16 %v1267
        %v1562 = vunpack.c.l.b16 %v1268
        %v1563 = vunpack.c.h.b16 %v1268
        %v1564 = vunpack.c.l.b16 %v1269
        %v1565 = vunpack.c.h.b16 %v1269
        %v1566 = vunpack.c.l.b16 %v1270
        %v1567 = vunpack.c.h.b16 %v1270
        %v1568 = vunpack.c.l.b16 %v1271
        %v1569 = vunpack.c.h.b16 %v1271
        %v1570 = vunpack.c.l.b16 %v1272
        %v1571 = vunpack.c.h.b16 %v1272
        %v1572 = vunpack.c.l.b16 %v1273
        %v1573 = vunpack.c.h.b16 %v1273
        %v1574 = vunpack.c.l.b16 %v1274
        %v1575 = vunpack.c.h.b16 %v1274
        %v1576 = vunpack.c.l.b16 %v1275
        %v1577 = vunpack.c.h.b16 %v1275
        %v1578 = vunpack.c.l.b16 %v1276
        %v1579 = vunpack.c.h.b16 %v1276
        %v1580 = vunpack.c.l.b16 %v1277
        %v1581 = vunpack.c.h.b16 %v1277
        %v1582 = vunpack.c.l.b16 %v1278
        %v1583 = vunpack.c.h.b16 %v1278
        %v1584 = vunpack.c.l.b16 %v1279
        %v1585 = vunpack.c.h.b16 %v1279
        %v1586 = vunpack.c.l.b16 %v1280
        %v1587 = vunpack.c.h.b16 %v1280
        %v1588 = vunpack.c.l.b16 %v1281
        %v1589 = vunpack.c.h.b16 %v1281
        %v1590 = vunpack.c.l.b16 %v1282
        %v1591 = vunpack.c.h.b16 %v1282
        %v1592 = vunpack.c.l.b16 %v1283
        %v1593 = vunpack.c.h.b16 %v1283
        %v1594 = vunpack.c.l.b16 %v1284
        %v1595 = vunpack.c.h.b16 %v1284
        %v1596 = vunpack.c.l.b16 %v1285
        %v1597 = vunpack.c.h.b16 %v1285
        %v1598 = vunpack.c.l.b16 %v1286
        %v1599 = vunpack.c.h.b16 %v1286
        %v1600 = vunpack.c.l.b16 %v1287
        %v1601 = vunpack.c.h.b16 %v1287
        %v1602 = vunpack.c.l.b16 %v1288
        %v1603 = vunpack.c.h.b16 %v1288
        %v1604 = vunpack.c.l.b16 %v1289
        %v1605 = vunpack.c.h.b16 %v1289
        %v1606 = vunpack.c.l.b16 %v1290
        %v1607 = vunpack.c.h.b16 %v1290
        %v1608 = vunpack.c.l.b16 %v1291
        %v1609 = vunpack.c.h.b16 %v1291
        %v1610 = vunpack.c.l.b16 %v1292
        %v1611 = vunpack.c.h.b16 %v1292
        %v1612 = vunpack.c.l.b16 %v1293
        %v1613 = vunpack.c.h.b16 %v1293
        %v1614 = vunpack.c.l.b16 %v1294
        %v1615 = vunpack.c.h.b16 %v1294
        %v1616 = vunpack.c.l.b16 %v1295
        %v1617 = vunpack.c.h.b16 %v1295
        %v1618 = vunpack.c.l.b16 %v1296
        %v1619 = vunpack.c.h.b16 %v1296
        %v1620 = vunpack.c.l.b16 %v1297
        %v1621 = vunpack.c.h.b16 %v1297
        %v1622 = vunpack.c.l.b16 %v1298
        %v1623 = vunpack.c.h.b16 %v1298
        %v1624 = vunpack.c.l.b16 %v1299
        %v1625 = vunpack.c.h.b16 %v1299
        %v1626 = vunpack.c.l.b16 %v1300
        %v1627 = vunpack.c.h.b16 %v1300
        %v1628 = vunpack.c.l.b16 %v1301
        %v1629 = vunpack.c.h.b16 %v1301
        %v1630 = vunpack.c.l.b16 %v1302
        %v1631 = vunpack.c.h.b16 %v1302
        %v1632 = vunpack.c.l.b16 %v1303
        %v1633 = vunpack.c.h.b16 %v1303
        %v1634 = vunpack.c.l.b16 %v1304
        %v1635 = vunpack.c.h.b16 %v1304
        %v1636 = vunpack.c.l.b16 %v1305
        %v1637 = vunpack.c.h.b16 %v1305
        %v1638 = vunpack.c.l.b16 %v1306
        %v1639 = vunpack.c.h.b16 %v1306
        %v1640 = vunpack.c.l.b16 %v1307
        %v1641 = vunpack.c.h.b16 %v1307
        %v1642 = vunpack.c.l.b16 %v1308
        %v1643 = vunpack.c.h.b16 %v1308
        %v1644 = vunpack.c.l.b16 %v1309
        %v1645 = vunpack.c.h.b16 %v1309
        %v1646 = vunpack.c.l.b16 %v1310
        %v1647 = vunpack.c.h.b16 %v1310
        %v1648 = vunpack.c.l.b16 %v1311
        %v1649 = vunpack.c.h.b16 %v1311
        %v1650 = vunpack.c.l.b16 %v1312
        %v1651 = vunpack.c.h.b16 %v1312
        %v1652 = vunpack.c.l.b16 %v1313
        %v1653 = vunpack.c.h.b16 %v1313
        %v1654 = vunpack.c.l.b16 %v1314
        %v1655 = vunpack.c.h.b16 %v1314
        %v1656 = vunpack.c.l.b16 %v1315
        %v1657 = vunpack.c.h.b16 %v1315
        %v1658 = vunpack.c.l.b16 %v1316
        %v1659 = vunpack.c.h.b16 %v1316
        %v1660 = vunpack.c.l.b16 %v1317
        %v1661 = vunpack.c.h.b16 %v1317
        %v1662 = vunpack.c.l.b16 %v1318
        %v1663 = vunpack.c.h.b16 %v1318
        %v1664 = vunpack.c.l.b16 %v1319
        %v1665 = vunpack.c.h.b16 %v1319
        %v1666 = vunpack.c.l.b16 %v1320
        %v1667 = vunpack.c.h.b16 %v1320
        %v1668 = vunpack.c.l.b16 %v1321
        %v1669 = vunpack.c.h.b16 %v1321
        %v1670 = vunpack.c.l.b16 %v1322
        %v1671 = vunpack.c.h.b16 %v1322
        %v1672 = vunpack.c.l.b16 %v1323
        %v1673 = vunpack.c.h.b16 %v1323
        %v1674 = vunpack.c.l.b16 %v1324
        %v1675 = vunpack.c.h.b16 %v1324
        %v1676 = vunpack.c.l.b16 %v1325
        %v1677 = vunpack.c.h.b16 %v1325
        %v1678 = vunpack.c.l.b16 %v1326
        %v1679 = vunpack.c.h.b16 %v1326
        %v1680 = vunpack.c.l.b16 %v1327
        %v1681 = vunpack.c.h.b16 %v1327
        %v1682 = vunpack.c.l.b16 %v1328
        %v1683 = vunpack.c.h.b16 %v1328
        %v1684 = vunpack.c.l.b16 %v1329
        %v1685 = vunpack.c.h.b16 %v1329
        %v1686 = vunpack.c.l.b16 %v1330
        %v1687 = vunpack.c.h.b16 %v1330
        %v1688 = vunpack.c.l.b16 %v1331
        %v1689 = vunpack.c.h.b16 %v1331
        %v1690 = vunpack.c.l.b16 %v1332
        %v1691 = vunpack.c.h.b16 %v1332
        %v1692 = vunpack.c.l.b16 %v1333
        %v1693 = vunpack.c.h.b16 %v1333
        %v1694 = vunpack.c.l.b16 %v1334
        %v1695 = vunpack.c.h.b16 %v1334
        %v1696 = vunpack.c.l.b16 %v1335
        %v1697 = vunpack.c.h.b16 %v1335
        %v1698 = vunpack.c.l.b16 %v1336
        %v1699 = vunpack.c.h.b16 %v1336
        %v1700 = vunpack.c.l.b16 %v1337
        %v1701 = vunpack.c.h.b16 %v1337
        %v1702 = vunpack.c.l.b16 %v1338
        %v1703 = vunpack.c.h.b16 %v1338
        %v1704 = vunpack.c.l.b16 %v1339
        %v1705 = vunpack.c.h.b16 %v1339
        %v1706 = vunpack.c.l.b16 %v1340
        %v1707 = vunpack.c.h.b16 %v1340
        %v1708 = vunpack.c.l.b16 %v1341
        %v1709 = vunpack.c.h.b16 %v1341
        %v1710 = vunpack.c.l.b16 %v1342
        %v1711 = vunpack.c.h.b16 %v1342
        %v1712 = vunpack.c.l.b16 %v1343
        %v1713 = vunpack.c.h.b16 %v1343
        %v1714 = vunpack.c.l.b16 %v1344
        %v1715 = vunpack.c.h.b16 %v1344
        %v1716 = vunpack.c.l.b16 %v1345
        %v1717 = vunpack.c.h.b16 %v1345
        %v1718 = vunpack.c.l.b16 %v1346
        %v1719 = vunpack.c.h.b16 %v1346
        %v1720 = vunpack.c.l.b16 %v1347
        %v1721 = vunpack.c.h.b16 %v1347
        %v1722 = vunpack.c.l.b16 %v1348
        %v1723 = vunpack.c.h.b16 %v1348
        %v1724 = vunpack.c.l.b16 %v1349
        %v1725 = vunpack.c.h.b16 %v1349
        %v1726 = vunpack.c.l.b16 %v1350
        %v1727 = vunpack.c.h.b16 %v1350
        %v1728 = vunpack.c.l.b16 %v1351
        %v1729 = vunpack.c.h.b16 %v1351
        %v1730 = vunpack.c.l.b16 %v1352
        %v1731 = vunpack.c.h.b16 %v1352
        %v1732 = vunpack.c.l.b16 %v1353
        %v1733 = vunpack.c.h.b16 %v1353
        %v1734 = vunpack.c.l.b16 %v1354
        %v1735 = vunpack.c.h.b16 %v1354
        %v1736 = vunpack.c.l.b16 %v1355
        %v1737 = vunpack.c.h.b16 %v1355
        %v1738 = vunpack.c.l.b16 %v1356
        %v1739 = vunpack.c.h.b16 %v1356
        %v1740 = vunpack.c.l.b16 %v1357
        %v1741 = vunpack.c.h.b16 %v1357
        %v1742 = vunpack.c.l.b16 %v1358
        %v1743 = vunpack.c.h.b16 %v1358
        %v1744 = vunpack.c.l.b16 %v1359
        %v1745 = vunpack.c.h.b16 %v1359
        %v1746 = vunpack.c.l.b16 %v1360
        %v1747 = vunpack.c.h.b16 %v1360
        %v1748 = vunpack.c.l.b16 %v1361
        %v1749 = vunpack.c.h.b16 %v1361
        %v1750 = vunpack.c.l.b16 %v1362
        %v1751 = vunpack.c.h.b16 %v1362
        %v1752 = vunpack.c.l.b16 %v1363
        %v1753 = vunpack.c.h.b16 %v1363
        %v1754 = vunpack.c.l.b16 %v1364
        %v1755 = vunpack.c.h.b16 %v1364
        %v1756 = vunpack.c.l.b16 %v1365
        %v1757 = vunpack.c.h.b16 %v1365
        %v1758 = vunpack.c.l.b16 %v1366
        %v1759 = vunpack.c.h.b16 %v1366
        %v1760 = vunpack.c.l.b16 %v1367
        %v1761 = vunpack.c.h.b16 %v1367
        %v1762 = vpack.c.b16 %v1510, %v1506
        %v1763 = vpack.c.b16 %v1511, %v1507
        %v1764 = vpack.c.b16 %v1512, %v1508
        %v1765 = vpack.c.b16 %v1513, %v1509
        %v1766 = vpack.c.b16 %v1518, %v1514
        %v1767 = vpack.c.b16 %v1519, %v1515
        %v1768 = vpack.c.b16 %v1520, %v1516
        %v1769 = vpack.c.b16 %v1521, %v1517
        %v1770 = vpack.c.b16 %v1526, %v1522
        %v1771 = vpack.c.b16 %v1527, %v1523
        %v1772 = vpack.c.b16 %v1528, %v1524
        %v1773 = vpack.c.b16 %v1529, %v1525
        %v1774 = vpack.c.b16 %v1534, %v1530
        %v1775 = vpack.c.b16 %v1535, %v1531
        %v1776 = vpack.c.b16 %v1536, %v1532
        %v1777 = vpack.c.b16 %v1537, %v1533
        %v1778 = vpack.c.b16 %v1542, %v1538
        %v1779 = vpack.c.b16 %v1543, %v1539
        %v1780 = vpack.c.b16 %v1544, %v1540
        %v1781 = vpack.c.b16 %v1545, %v1541
        %v1782 = vpack.c.b16 %v1550, %v1546
        %v1783 = vpack.c.b16 %v1551, %v1547
        %v1784 = vpack.c.b16 %v1552, %v1548
        %v1785 = vpack.c.b16 %v1553, %v1549
        %v1786 = vpack.c.b16 %v1558, %v1554
        %v1787 = vpack.c.b16 %v1559, %v1555
        %v1788 = vpack.c.b16 %v1560, %v1556
        %v1789 = vpack.c.b16 %v1561, %v1557
        %v1790 = vpack.c.b16 %v1566, %v1562
        %v1791 = vpack.c.b16 %v1567, %v1563
        %v1792 = vpack.c.b16 %v1568, %v1564
        %v1793 = vpack.c.b16 %v1569, %v1565
        %v1794 = vpack.c.b16 %v1574, %v1570
        %v1795 = vpack.c.b16 %v1575, %v1571
        %v1796 = vpack.c.b16 %v1576, %v1572
        %v1797 = vpack.c.b16 %v1577, %v1573
        %v1798 = vpack.c.b16 %v1582, %v1578
        %v1799 = vpack.c.b16 %v1583, %v1579
        %v1800 = vpack.c.b16 %v1584, %v1580
        %v1801 = vpack.c.b16 %v1585, %v1581
        %v1802 = vpack.c.b16 %v1590, %v1586
        %v1803 = vpack.c.b16 %v1591, %v1587
        %v1804 = vpack.c.b16 %v1592, %v1588
        %v1805 = vpack.c.b16 %v1593, %v1589
        %v1806 = vpack.c.b16 %v1598, %v1594
        %v1807 = vpack.c.b16 %v1599, %v1595
        %v1808 = vpack.c.b16 %v1600, %v1596
        %v1809 = vpack.c.b16 %v1601, %v1597
        %v1810 = vpack.c.b16 %v1606, %v1602
        %v1811 = vpack.c.b16 %v1607, %v1603
        %v1812 = vpack.c.b16 %v1608, %v1604
        %v1813 = vpack.c.b16 %v1609, %v1605
        %v1814 = vpack.c.b16 %v1614, %v1610
        %v1815 = vpack.c.b16 %v1615, %v1611
        %v1816 = vpack.c.b16 %v1616, %v1612
        %v1817 = vpack.c.b16 %v1617, %v1613
        %v1818 = vpack.c.b16 %v1622, %v1618
        %v1819 = vpack.c.b16 %v1623, %v1619
        %v1820 = vpack.c.b16 %v1624, %v1620
        %v1821 = vpack.c.b16 %v1625, %v1621
        %v1822 = vpack.c.b16 %v1630, %v1626
        %v1823 = vpack.c.b16 %v1631, %v1627
        %v1824 = vpack.c.b16 %v1632, %v1628
        %v1825 = vpack.c.b16 %v1633, %v1629
        %v1826 = vpack.c.b16 %v1638, %v1634
        %v1827 = vpack.c.b16 %v1639, %v1635
        %v1828 = vpack.c.b16 %v1640, %v1636
        %v1829 = vpack.c.b16 %v1641, %v1637
        %v1830 = vpack.c.b16 %v1646, %v1642
        %v1831 = vpack.c.b16 %v1647, %v1643
        %v1832 = vpack.c.b16 %v1648, %v1644
        %v1833 = vpack.c.b16 %v1649, %v1645
        %v1834 = vpack.c.b16 %v1654, %v1650
        %v1835 = vpack.c.b16 %v1655, %v1651
        %v1836 = vpack.c.b16 %v1656, %v1652
        %v1837 = vpack.c.b16 %v1657, %v1653
        %v1838 = vpack.c.b16 %v1662, %v1658
        %v1839 = vpack.c.b16 %v1663, %v1659
        %v1840 = vpack.c.b16 %v1664, %v1660
        %v1841 = vpack.c.b16 %v1665, %v1661
        %v1842 = vpack.c.b16 %v1670, %v1666
        %v1843 = vpack.c.b16 %v1671, %v1667
        %v1844 = vpack.c.b16 %v1672, %v1668
        %v1845 = vpack.c.b16 %v1673, %v1669
        %v1846 = vpack.c.b16 %v1678, %v1674
        %v1847 = vpack.c.b16 %v1679, %v1675
        %v1848 = vpack.c.b16 %v1680, %v1676
        %v1849 = vpack.c.b16 %v1681, %v1677
        %v1850 = vpack.c.b16 %v1686, %v1682
        %v1851 = vpack.c.b16 %v1687, %v1683
        %v1852 = vpack.c.b16 %v1688, %v1684
        %v1853 = vpack.c.b16 %v1689, %v1685
        %v1854 = vpack.c.b16 %v1694, %v1690
        %v1855 = vpack.c.b16 %v1695, %v1691
        %v1856 = vpack.c.b16 %v1696, %v1692
        %v1857 = vpack.c.b16 %v1697, %v1693
        %v1858 = vpack.c.b16 %v1702, %v1698
        %v1859 = vpack.c.b16 %v1703, %v1699
        %v1860 = vpack.c.b16 %v1704, %v1700
        %v1861 = vpack.c.b16 %v1705, %v1701
        %v1862 = vpack.c.b16 %v1710, %v1706
        %v1863 = vpack.c.b16 %v1711, %v1707
        %v1864 = vpack.c.b16 %v1712, %v1708
        %v1865 = vpack.c.b16 %v1713, %v1709
        %v1866 = vpack.c.b16 %v1718, %v1714
        %v1867 = vpack.c.b16 %v1719, %v1715
        %v1868 = vpack.c.b16 %v1720, %v1716
        %v1869 = vpack.c.b16 %v1721, %v1717
        %v1870 = vpack.c.b16 %v1726, %v1722
        %v1871 = vpack.c.b16 %v1727, %v1723
        %v1872 = vpack.c.b16 %v1728, %v1724
        %v1873 = vpack.c.b16 %v1729, %v1725
        %v1874 = vpack.c.b16 %v1734, %v1730
        %v1875 = vpack.c.b16 %v1735, %v1731
        %v1876 = vpack.c.b16 %v1736, %v1732
        %v1877 = vpack.c.b16 %v1737, %v1733
        %v1878 = vpack.c.b16 %v1742, %v1738
        %v1879 = vpack.c.b16 %v1743, %v1739
        %v1880 = vpack.c.b16 %v1744, %v1740
        %v1881 = vpack.c.b16 %v1745, %v1741
        %v1882 = vpack.c.b16 %v1750, %v1746
        %v1883 = vpack.c.b16 %v1751, %v1747
        %v1884 = vpack.c.b16 %v1752, %v1748
        %v1885 = vpack.c.b16 %v1753, %v1749
        %v1886 = vpack.c.b16 %v1758, %v1754
        %v1887 = vpack.c.b16 %v1759, %v1755
        %v1888 = vpack.c.b16 %v1760, %v1756
        %v1889 = vpack.c.b16 %v1761, %v1757
        %2018 = vmatpush.bf16.msra.mxu0 %v1790
        %2019 = vmatpush.bf16.msra.mxu0 %v1786
        %2020 = vmatpush.bf16.msra.mxu0 %v1782
        %2021 = vmatpush.bf16.msra.mxu0 %v1778
        %2022 = vmatpush.bf16.msra.mxu0 %v1774
        %2023 = vmatpush.bf16.msra.mxu0 %v1770
        %2024 = vmatpush.bf16.msra.mxu0 %v1766
        %2025 = vmatpush.bf16.msra.mxu0 %v1762
        %2026 = vmatmul.bf16.gmra.mxu0 %v1224
        %v2027 = vpop.f32.mrf.mxu0
        %v2028 = vadd.f32 %v1370, %v2027
        %v2029 = vpop.f32.mrf.mxu0
        %v2030 = vadd.f32 %v1370, %v2029
        %2031 = vmatmul.bf16.gmra.mxu0 %v1228
        %v2032 = vpop.f32.mrf.mxu0
        %v2033 = vadd.f32 %v1370, %v2032
        %v2034 = vpop.f32.mrf.mxu0
        %v2035 = vadd.f32 %v1370, %v2034
        %2036 = vmatmul.bf16.gmra.mxu0 %v1232
        %v2037 = vpop.f32.mrf.mxu0
        %v2038 = vadd.f32 %v1370, %v2037
        %v2039 = vpop.f32.mrf.mxu0
        %v2040 = vadd.f32 %v1370, %v2039
        %2041 = vmatmul.bf16.gmra.mxu0 %v1236
        %v2042 = vpop.f32.mrf.mxu0
        %v2043 = vadd.f32 %v1370, %v2042
        %v2044 = vpop.f32.mrf.mxu0
        %v2045 = vadd.f32 %v1370, %v2044
        %2046 = vdwg.mxu0
        %2047 = vmatpush.bf16.msra.mxu0 %v1822
        %2048 = vmatpush.bf16.msra.mxu0 %v1818
        %2049 = vmatpush.bf16.msra.mxu0 %v1814
        %2050 = vmatpush.bf16.msra.mxu0 %v1810
        %2051 = vmatpush.bf16.msra.mxu0 %v1806
        %2052 = vmatpush.bf16.msra.mxu0 %v1802
        %2053 = vmatpush.bf16.msra.mxu0 %v1798
        %2054 = vmatpush.bf16.msra.mxu0 %v1794
        %2055 = vmatmul.bf16.gmra.mxu0 %v1225
        %v2056 = vpop.f32.mrf.mxu0
        %v2057 = vadd.f32 %v2028, %v2056
        %v2058 = vpop.f32.mrf.mxu0
        %v2059 = vadd.f32 %v2030, %v2058
        %2060 = vmatmul.bf16.gmra.mxu0 %v1229
        %v2061 = vpop.f32.mrf.mxu0
        %v2062 = vadd.f32 %v2033, %v2061
        %v2063 = vpop.f32.mrf.mxu0
        %v2064 = vadd.f32 %v2035, %v2063
        %2065 = vmatmul.bf16.gmra.mxu0 %v1233
        %v2066 = vpop.f32.mrf.mxu0
        %v2067 = vadd.f32 %v2038, %v2066
        %v2068 = vpop.f32.mrf.mxu0
        %v2069 = vadd.f32 %v2040, %v2068
        %2070 = vmatmul.bf16.gmra.mxu0 %v1237
        %v2071 = vpop.f32.mrf.mxu0
        %v2072 = vadd.f32 %v2043, %v2071
        %v2073 = vpop.f32.mrf.mxu0
        %v2074 = vadd.f32 %v2045, %v2073
        %2075 = vdwg.mxu0
        %2076 = vmatpush.bf16.msra.mxu0 %v1854
        %2077 = vmatpush.bf16.msra.mxu0 %v1850
        %2078 = vmatpush.bf16.msra.mxu0 %v1846
        %2079 = vmatpush.bf16.msra.mxu0 %v1842
        %2080 = vmatpush.bf16.msra.mxu0 %v1838
        %2081 = vmatpush.bf16.msra.mxu0 %v1834
        %2082 = vmatpush.bf16.msra.mxu0 %v1830
        %2083 = vmatpush.bf16.msra.mxu0 %v1826
        %2084 = vmatmul.bf16.gmra.mxu0 %v1226
        %v2085 = vpop.f32.mrf.mxu0
        %v2086 = vadd.f32 %v2057, %v2085
        %v2087 = vpop.f32.mrf.mxu0
        %v2088 = vadd.f32 %v2059, %v2087
        %2089 = vmatmul.bf16.gmra.mxu0 %v1230
        %v2090 = vpop.f32.mrf.mxu0
        %v2091 = vadd.f32 %v2062, %v2090
        %v2092 = vpop.f32.mrf.mxu0
        %v2093 = vadd.f32 %v2064, %v2092
        %2094 = vmatmul.bf16.gmra.mxu0 %v1234
        %v2095 = vpop.f32.mrf.mxu0
        %v2096 = vadd.f32 %v2067, %v2095
        %v2097 = vpop.f32.mrf.mxu0
        %v2098 = vadd.f32 %v2069, %v2097
        %2099 = vmatmul.bf16.gmra.mxu0 %v1238
        %v2100 = vpop.f32.mrf.mxu0
        %v2101 = vadd.f32 %v2072, %v2100
        %v2102 = vpop.f32.mrf.mxu0
        %v2103 = vadd.f32 %v2074, %v2102
        %2104 = vdwg.mxu0
        %2105 = vmatpush.bf16.msra.mxu0 %v1886
        %2106 = vmatpush.bf16.msra.mxu0 %v1882
        %2107 = vmatpush.bf16.msra.mxu0 %v1878
        %2108 = vmatpush.bf16.msra.mxu0 %v1874
        %2109 = vmatpush.bf16.msra.mxu0 %v1870
        %2110 = vmatpush.bf16.msra.mxu0 %v1866
        %2111 = vmatpush.bf16.msra.mxu0 %v1862
        %2112 = vmatpush.bf16.msra.mxu0 %v1858
        %2113 = vmatmul.bf16.gmra.mxu0 %v1227
        %v2114 = vpop.f32.mrf.mxu0
        %v2115 = vadd.f32 %v2086, %v2114
        %v2116 = vpop.f32.mrf.mxu0
        %v2117 = vadd.f32 %v2088, %v2116
        %2118 = vmatmul.bf16.gmra.mxu0 %v1231
        %v2119 = vpop.f32.mrf.mxu0
        %v2120 = vadd.f32 %v2091, %v2119
        %v2121 = vpop.f32.mrf.mxu0
        %v2122 = vadd.f32 %v2093, %v2121
        %2123 = vmatmul.bf16.gmra.mxu0 %v1235
        %v2124 = vpop.f32.mrf.mxu0
        %v2125 = vadd.f32 %v2096, %v2124
        %v2126 = vpop.f32.mrf.mxu0
        %v2127 = vadd.f32 %v2098, %v2126
        %2128 = vmatmul.bf16.gmra.mxu0 %v1239
        %v2129 = vpop.f32.mrf.mxu0
        %v2130 = vadd.f32 %v2101, %v2129
        %v2131 = vpop.f32.mrf.mxu0
        %v2132 = vadd.f32 %v2103, %v2131
        %2133 = vdwg.mxu0
        %2134 = vmatpush.bf16.msra.mxu0 %v1791
        %2135 = vmatpush.bf16.msra.mxu0 %v1787
        %2136 = vmatpush.bf16.msra.mxu0 %v1783
        %2137 = vmatpush.bf16.msra.mxu0 %v1779
        %2138 = vmatpush.bf16.msra.mxu0 %v1775
        %2139 = vmatpush.bf16.msra.mxu0 %v1771
        %2140 = vmatpush.bf16.msra.mxu0 %v1767
        %2141 = vmatpush.bf16.msra.mxu0 %v1763
        %2142 = vmatmul.bf16.gmra.mxu0 %v1224
        %v2143 = vpop.f32.mrf.mxu0
        %v2144 = vadd.f32 %v1371, %v2143
        %v2145 = vpop.f32.mrf.mxu0
        %v2146 = vadd.f32 %v1371, %v2145
        %2147 = vmatmul.bf16.gmra.mxu0 %v1228
        %v2148 = vpop.f32.mrf.mxu0
        %v2149 = vadd.f32 %v1371, %v2148
        %v2150 = vpop.f32.mrf.mxu0
        %v2151 = vadd.f32 %v1371, %v2150
        %2152 = vmatmul.bf16.gmra.mxu0 %v1232
        %v2153 = vpop.f32.mrf.mxu0
        %v2154 = vadd.f32 %v1371, %v2153
        %v2155 = vpop.f32.mrf.mxu0
        %v2156 = vadd.f32 %v1371, %v2155
        %2157 = vmatmul.bf16.gmra.mxu0 %v1236
        %v2158 = vpop.f32.mrf.mxu0
        %v2159 = vadd.f32 %v1371, %v2158
        %v2160 = vpop.f32.mrf.mxu0
        %v2161 = vadd.f32 %v1371, %v2160
        %2162 = vdwg.mxu0
        %2163 = vmatpush.bf16.msra.mxu0 %v1823
        %2164 = vmatpush.bf16.msra.mxu0 %v1819
        %2165 = vmatpush.bf16.msra.mxu0 %v1815
        %2166 = vmatpush.bf16.msra.mxu0 %v1811
        %2167 = vmatpush.bf16.msra.mxu0 %v1807
        %2168 = vmatpush.bf16.msra.mxu0 %v1803
        %2169 = vmatpush.bf16.msra.mxu0 %v1799
        %2170 = vmatpush.bf16.msra.mxu0 %v1795
        %2171 = vmatmul.bf16.gmra.mxu0 %v1225
        %v2172 = vpop.f32.mrf.mxu0
        %v2173 = vadd.f32 %v2144, %v2172
        %v2174 = vpop.f32.mrf.mxu0
        %v2175 = vadd.f32 %v2146, %v2174
        %2176 = vmatmul.bf16.gmra.mxu0 %v1229
        %v2177 = vpop.f32.mrf.mxu0
        %v2178 = vadd.f32 %v2149, %v2177
        %v2179 = vpop.f32.mrf.mxu0
        %v2180 = vadd.f32 %v2151, %v2179
        %2181 = vmatmul.bf16.gmra.mxu0 %v1233
        %v2182 = vpop.f32.mrf.mxu0
        %v2183 = vadd.f32 %v2154, %v2182
        %v2184 = vpop.f32.mrf.mxu0
        %v2185 = vadd.f32 %v2156, %v2184
        %2186 = vmatmul.bf16.gmra.mxu0 %v1237
        %v2187 = vpop.f32.mrf.mxu0
        %v2188 = vadd.f32 %v2159, %v2187
        %v2189 = vpop.f32.mrf.mxu0
        %v2190 = vadd.f32 %v2161, %v2189
        %2191 = vdwg.mxu0
        %2192 = vmatpush.bf16.msra.mxu0 %v1855
        %2193 = vmatpush.bf16.msra.mxu0 %v1851
        %2194 = vmatpush.bf16.msra.mxu0 %v1847
        %2195 = vmatpush.bf16.msra.mxu0 %v1843
        %2196 = vmatpush.bf16.msra.mxu0 %v1839
        %2197 = vmatpush.bf16.msra.mxu0 %v1835
        %2198 = vmatpush.bf16.msra.mxu0 %v1831
        %2199 = vmatpush.bf16.msra.mxu0 %v1827
        %2200 = vmatmul.bf16.gmra.mxu0 %v1226
        %v2201 = vpop.f32.mrf.mxu0
        %v2202 = vadd.f32 %v2173, %v2201
        %v2203 = vpop.f32.mrf.mxu0
        %v2204 = vadd.f32 %v2175, %v2203
        %2205 = vmatmul.bf16.gmra.mxu0 %v1230
        %v2206 = vpop.f32.mrf.mxu0
        %v2207 = vadd.f32 %v2178, %v2206
        %v2208 = vpop.f32.mrf.mxu0
        %v2209 = vadd.f32 %v2180, %v2208
        %2210 = vmatmul.bf16.gmra.mxu0 %v1234
        %v2211 = vpop.f32.mrf.mxu0
        %v2212 = vadd.f32 %v2183, %v2211
        %v2213 = vpop.f32.mrf.mxu0
        %v2214 = vadd.f32 %v2185, %v2213
        %2215 = vmatmul.bf16.gmra.mxu0 %v1238
        %v2216 = vpop.f32.mrf.mxu0
        %v2217 = vadd.f32 %v2188, %v2216
        %v2218 = vpop.f32.mrf.mxu0
        %v2219 = vadd.f32 %v2190, %v2218
        %2220 = vdwg.mxu0
        %2221 = vmatpush.bf16.msra.mxu0 %v1887
        %2222 = vmatpush.bf16.msra.mxu0 %v1883
        %2223 = vmatpush.bf16.msra.mxu0 %v1879
        %2224 = vmatpush.bf16.msra.mxu0 %v1875
        %2225 = vmatpush.bf16.msra.mxu0 %v1871
        %2226 = vmatpush.bf16.msra.mxu0 %v1867
        %2227 = vmatpush.bf16.msra.mxu0 %v1863
        %2228 = vmatpush.bf16.msra.mxu0 %v1859
        %2229 = vmatmul.bf16.gmra.mxu0 %v1227
        %v2230 = vpop.f32.mrf.mxu0
        %v2231 = vadd.f32 %v2202, %v2230
        %v2232 = vpop.f32.mrf.mxu0
        %v2233 = vadd.f32 %v2204, %v2232
        %2234 = vmatmul.bf16.gmra.mxu0 %v1231
        %v2235 = vpop.f32.mrf.mxu0
        %v2236 = vadd.f32 %v2207, %v2235
        %v2237 = vpop.f32.mrf.mxu0
        %v2238 = vadd.f32 %v2209, %v2237
        %2239 = vmatmul.bf16.gmra.mxu0 %v1235
        %v2240 = vpop.f32.mrf.mxu0
        %v2241 = vadd.f32 %v2212, %v2240
        %v2242 = vpop.f32.mrf.mxu0
        %v2243 = vadd.f32 %v2214, %v2242
        %2244 = vmatmul.bf16.gmra.mxu0 %v1239
        %v2245 = vpop.f32.mrf.mxu0
        %v2246 = vadd.f32 %v2217, %v2245
        %v2247 = vpop.f32.mrf.mxu0
        %v2248 = vadd.f32 %v2219, %v2247
        %2249 = vdwg.mxu0
        %2250 = vmatpush.bf16.msra.mxu0 %v1792
        %2251 = vmatpush.bf16.msra.mxu0 %v1788
        %2252 = vmatpush.bf16.msra.mxu0 %v1784
        %2253 = vmatpush.bf16.msra.mxu0 %v1780
        %2254 = vmatpush.bf16.msra.mxu0 %v1776
        %2255 = vmatpush.bf16.msra.mxu0 %v1772
        %2256 = vmatpush.bf16.msra.mxu0 %v1768
        %2257 = vmatpush.bf16.msra.mxu0 %v1764
        %2258 = vmatmul.bf16.gmra.mxu0 %v1224
        %v2259 = vpop.f32.mrf.mxu0
        %v2260 = vadd.f32 %v1372, %v2259
        %v2261 = vpop.f32.mrf.mxu0
        %v2262 = vadd.f32 %v1372, %v2261
        %2263 = vmatmul.bf16.gmra.mxu0 %v1228
        %v2264 = vpop.f32.mrf.mxu0
        %v2265 = vadd.f32 %v1372, %v2264
        %v2266 = vpop.f32.mrf.mxu0
        %v2267 = vadd.f32 %v1372, %v2266
        %2268 = vmatmul.bf16.gmra.mxu0 %v1232
        %v2269 = vpop.f32.mrf.mxu0
        %v2270 = vadd.f32 %v1372, %v2269
        %v2271 = vpop.f32.mrf.mxu0
        %v2272 = vadd.f32 %v1372, %v2271
        %2273 = vmatmul.bf16.gmra.mxu0 %v1236
        %v2274 = vpop.f32.mrf.mxu0
        %v2275 = vadd.f32 %v1372, %v2274
        %v2276 = vpop.f32.mrf.mxu0
        %v2277 = vadd.f32 %v1372, %v2276
        %2278 = vdwg.mxu0
        %2279 = vmatpush.bf16.msra.mxu0 %v1824
        %2280 = vmatpush.bf16.msra.mxu0 %v1820
        %2281 = vmatpush.bf16.msra.mxu0 %v1816
        %2282 = vmatpush.bf16.msra.mxu0 %v1812
        %2283 = vmatpush.bf16.msra.mxu0 %v1808
        %2284 = vmatpush.bf16.msra.mxu0 %v1804
        %2285 = vmatpush.bf16.msra.mxu0 %v1800
        %2286 = vmatpush.bf16.msra.mxu0 %v1796
        %2287 = vmatmul.bf16.gmra.mxu0 %v1225
        %v2288 = vpop.f32.mrf.mxu0
        %v2289 = vadd.f32 %v2260, %v2288
        %v2290 = vpop.f32.mrf.mxu0
        %v2291 = vadd.f32 %v2262, %v2290
        %2292 = vmatmul.bf16.gmra.mxu0 %v1229
        %v2293 = vpop.f32.mrf.mxu0
        %v2294 = vadd.f32 %v2265, %v2293
        %v2295 = vpop.f32.mrf.mxu0
        %v2296 = vadd.f32 %v2267, %v2295
        %2297 = vmatmul.bf16.gmra.mxu0 %v1233
        %v2298 = vpop.f32.mrf.mxu0
        %v2299 = vadd.f32 %v2270, %v2298
        %v2300 = vpop.f32.mrf.mxu0
        %v2301 = vadd.f32 %v2272, %v2300
        %2302 = vmatmul.bf16.gmra.mxu0 %v1237
        %v2303 = vpop.f32.mrf.mxu0
        %v2304 = vadd.f32 %v2275, %v2303
        %v2305 = vpop.f32.mrf.mxu0
        %v2306 = vadd.f32 %v2277, %v2305
        %2307 = vdwg.mxu0
        %2308 = vmatpush.bf16.msra.mxu0 %v1856
        %2309 = vmatpush.bf16.msra.mxu0 %v1852
        %2310 = vmatpush.bf16.msra.mxu0 %v1848
        %2311 = vmatpush.bf16.msra.mxu0 %v1844
        %2312 = vmatpush.bf16.msra.mxu0 %v1840
        %2313 = vmatpush.bf16.msra.mxu0 %v1836
        %2314 = vmatpush.bf16.msra.mxu0 %v1832
        %2315 = vmatpush.bf16.msra.mxu0 %v1828
        %2316 = vmatmul.bf16.gmra.mxu0 %v1226
        %v2317 = vpop.f32.mrf.mxu0
        %v2318 = vadd.f32 %v2289, %v2317
        %v2319 = vpop.f32.mrf.mxu0
        %v2320 = vadd.f32 %v2291, %v2319
        %2321 = vmatmul.bf16.gmra.mxu0 %v1230
        %v2322 = vpop.f32.mrf.mxu0
        %v2323 = vadd.f32 %v2294, %v2322
        %v2324 = vpop.f32.mrf.mxu0
        %v2325 = vadd.f32 %v2296, %v2324
        %2326 = vmatmul.bf16.gmra.mxu0 %v1234
        %v2327 = vpop.f32.mrf.mxu0
        %v2328 = vadd.f32 %v2299, %v2327
        %v2329 = vpop.f32.mrf.mxu0
        %v2330 = vadd.f32 %v2301, %v2329
        %2331 = vmatmul.bf16.gmra.mxu0 %v1238
        %v2332 = vpop.f32.mrf.mxu0
        %v2333 = vadd.f32 %v2304, %v2332
        %v2334 = vpop.f32.mrf.mxu0
        %v2335 = vadd.f32 %v2306, %v2334
        %2336 = vdwg.mxu0
        %2337 = vmatpush.bf16.msra.mxu0 %v1888
        %2338 = vmatpush.bf16.msra.mxu0 %v1884
        %2339 = vmatpush.bf16.msra.mxu0 %v1880
        %2340 = vmatpush.bf16.msra.mxu0 %v1876
        %2341 = vmatpush.bf16.msra.mxu0 %v1872
        %2342 = vmatpush.bf16.msra.mxu0 %v1868
        %2343 = vmatpush.bf16.msra.mxu0 %v1864
        %2344 = vmatpush.bf16.msra.mxu0 %v1860
        %2345 = vmatmul.bf16.gmra.mxu0 %v1227
        %v2346 = vpop.f32.mrf.mxu0
        %v2347 = vadd.f32 %v2318, %v2346
        %v2348 = vpop.f32.mrf.mxu0
        %v2349 = vadd.f32 %v2320, %v2348
        %2350 = vmatmul.bf16.gmra.mxu0 %v1231
        %v2351 = vpop.f32.mrf.mxu0
        %v2352 = vadd.f32 %v2323, %v2351
        %v2353 = vpop.f32.mrf.mxu0
        %v2354 = vadd.f32 %v2325, %v2353
        %2355 = vmatmul.bf16.gmra.mxu0 %v1235
        %v2356 = vpop.f32.mrf.mxu0
        %v2357 = vadd.f32 %v2328, %v2356
        %v2358 = vpop.f32.mrf.mxu0
        %v2359 = vadd.f32 %v2330, %v2358
        %2360 = vmatmul.bf16.gmra.mxu0 %v1239
        %v2361 = vpop.f32.mrf.mxu0
        %v2362 = vadd.f32 %v2333, %v2361
        %v2363 = vpop.f32.mrf.mxu0
        %v2364 = vadd.f32 %v2335, %v2363
        %2365 = vdwg.mxu0
        %2366 = vmatpush.bf16.msra.mxu0 %v1793
        %2367 = vmatpush.bf16.msra.mxu0 %v1789
        %2368 = vmatpush.bf16.msra.mxu0 %v1785
        %2369 = vmatpush.bf16.msra.mxu0 %v1781
        %2370 = vmatpush.bf16.msra.mxu0 %v1777
        %2371 = vmatpush.bf16.msra.mxu0 %v1773
        %2372 = vmatpush.bf16.msra.mxu0 %v1769
        %2373 = vmatpush.bf16.msra.mxu0 %v1765
        %2374 = vmatmul.bf16.gmra.mxu0 %v1224
        %v2375 = vpop.f32.mrf.mxu0
        %v2376 = vadd.f32 %v1373, %v2375
        %v2377 = vpop.f32.mrf.mxu0
        %v2378 = vadd.f32 %v1373, %v2377
        %2379 = vmatmul.bf16.gmra.mxu0 %v1228
        %v2380 = vpop.f32.mrf.mxu0
        %v2381 = vadd.f32 %v1373, %v2380
        %v2382 = vpop.f32.mrf.mxu0
        %v2383 = vadd.f32 %v1373, %v2382
        %2384 = vmatmul.bf16.gmra.mxu0 %v1232
        %v2385 = vpop.f32.mrf.mxu0
        %v2386 = vadd.f32 %v1373, %v2385
        %v2387 = vpop.f32.mrf.mxu0
        %v2388 = vadd.f32 %v1373, %v2387
        %2389 = vmatmul.bf16.gmra.mxu0 %v1236
        %v2390 = vpop.f32.mrf.mxu0
        %v2391 = vadd.f32 %v1373, %v2390
        %v2392 = vpop.f32.mrf.mxu0
        %v2393 = vadd.f32 %v1373, %v2392
        %2394 = vdwg.mxu0
        %2395 = vmatpush.bf16.msra.mxu0 %v1825
        %2396 = vmatpush.bf16.msra.mxu0 %v1821
        %2397 = vmatpush.bf16.msra.mxu0 %v1817
        %2398 = vmatpush.bf16.msra.mxu0 %v1813
        %2399 = vmatpush.bf16.msra.mxu0 %v1809
        %2400 = vmatpush.bf16.msra.mxu0 %v1805
        %2401 = vmatpush.bf16.msra.mxu0 %v1801
        %2402 = vmatpush.bf16.msra.mxu0 %v1797
        %2403 = vmatmul.bf16.gmra.mxu0 %v1225
        %v2404 = vpop.f32.mrf.mxu0
        %v2405 = vadd.f32 %v2376, %v2404
        %v2406 = vpop.f32.mrf.mxu0
        %v2407 = vadd.f32 %v2378, %v2406
        %2408 = vmatmul.bf16.gmra.mxu0 %v1229
        %v2409 = vpop.f32.mrf.mxu0
        %v2410 = vadd.f32 %v2381, %v2409
        %v2411 = vpop.f32.mrf.mxu0
        %v2412 = vadd.f32 %v2383, %v2411
        %2413 = vmatmul.bf16.gmra.mxu0 %v1233
        %v2414 = vpop.f32.mrf.mxu0
        %v2415 = vadd.f32 %v2386, %v2414
        %v2416 = vpop.f32.mrf.mxu0
        %v2417 = vadd.f32 %v2388, %v2416
        %2418 = vmatmul.bf16.gmra.mxu0 %v1237
        %v2419 = vpop.f32.mrf.mxu0
        %v2420 = vadd.f32 %v2391, %v2419
        %v2421 = vpop.f32.mrf.mxu0
        %v2422 = vadd.f32 %v2393, %v2421
        %2423 = vdwg.mxu0
        %2424 = vmatpush.bf16.msra.mxu0 %v1857
        %2425 = vmatpush.bf16.msra.mxu0 %v1853
        %2426 = vmatpush.bf16.msra.mxu0 %v1849
        %2427 = vmatpush.bf16.msra.mxu0 %v1845
        %2428 = vmatpush.bf16.msra.mxu0 %v1841
        %2429 = vmatpush.bf16.msra.mxu0 %v1837
        %2430 = vmatpush.bf16.msra.mxu0 %v1833
        %2431 = vmatpush.bf16.msra.mxu0 %v1829
        %2432 = vmatmul.bf16.gmra.mxu0 %v1226
        %v2433 = vpop.f32.mrf.mxu0
        %v2434 = vadd.f32 %v2405, %v2433
        %v2435 = vpop.f32.mrf.mxu0
        %v2436 = vadd.f32 %v2407, %v2435
        %2437 = vmatmul.bf16.gmra.mxu0 %v1230
        %v2438 = vpop.f32.mrf.mxu0
        %v2439 = vadd.f32 %v2410, %v2438
        %v2440 = vpop.f32.mrf.mxu0
        %v2441 = vadd.f32 %v2412, %v2440
        %2442 = vmatmul.bf16.gmra.mxu0 %v1234
        %v2443 = vpop.f32.mrf.mxu0
        %v2444 = vadd.f32 %v2415, %v2443
        %v2445 = vpop.f32.mrf.mxu0
        %v2446 = vadd.f32 %v2417, %v2445
        %2447 = vmatmul.bf16.gmra.mxu0 %v1238
        %v2448 = vpop.f32.mrf.mxu0
        %v2449 = vadd.f32 %v2420, %v2448
        %v2450 = vpop.f32.mrf.mxu0
        %v2451 = vadd.f32 %v2422, %v2450
        %2452 = vdwg.mxu0
        %2453 = vmatpush.bf16.msra.mxu0 %v1889
        %2454 = vmatpush.bf16.msra.mxu0 %v1885
        %2455 = vmatpush.bf16.msra.mxu0 %v1881
        %2456 = vmatpush.bf16.msra.mxu0 %v1877
        %2457 = vmatpush.bf16.msra.mxu0 %v1873
        %2458 = vmatpush.bf16.msra.mxu0 %v1869
        %2459 = vmatpush.bf16.msra.mxu0 %v1865
        %2460 = vmatpush.bf16.msra.mxu0 %v1861
        %2461 = vmatmul.bf16.gmra.mxu0 %v1227
        %v2462 = vpop.f32.mrf.mxu0
        %v2463 = vadd.f32 %v2434, %v2462
        %v2464 = vpop.f32.mrf.mxu0
        %v2465 = vadd.f32 %v2436, %v2464
        %2466 = vmatmul.bf16.gmra.mxu0 %v1231
        %v2467 = vpop.f32.mrf.mxu0
        %v2468 = vadd.f32 %v2439, %v2467
        %v2469 = vpop.f32.mrf.mxu0
        %v2470 = vadd.f32 %v2441, %v2469
        %2471 = vmatmul.bf16.gmra.mxu0 %v1235
        %v2472 = vpop.f32.mrf.mxu0
        %v2473 = vadd.f32 %v2444, %v2472
        %v2474 = vpop.f32.mrf.mxu0
        %v2475 = vadd.f32 %v2446, %v2474
        %2476 = vmatmul.bf16.gmra.mxu0 %v1239
        %v2477 = vpop.f32.mrf.mxu0
        %v2478 = vadd.f32 %v2449, %v2477
        %v2479 = vpop.f32.mrf.mxu0
        %v2480 = vadd.f32 %v2451, %v2479
        %2481 = vdwg.mxu0
        %vm2482 = vcmp.gt.f32.partialorder %v2115, 20.0
        %vm2483 = vcmp.gt.f32.partialorder %v2231, 20.0
        %vm2484 = vcmp.gt.f32.partialorder %v2347, 20.0
        %vm2485 = vcmp.gt.f32.partialorder %v2463, 20.0
        %vm2486 = vcmp.gt.f32.partialorder %v2117, 20.0
        %vm2487 = vcmp.gt.f32.partialorder %v2233, 20.0
        %vm2488 = vcmp.gt.f32.partialorder %v2349, 20.0
        %vm2489 = vcmp.gt.f32.partialorder %v2465, 20.0
        %vm2490 = vcmp.gt.f32.partialorder %v2120, 20.0
        %vm2491 = vcmp.gt.f32.partialorder %v2236, 20.0
        %vm2492 = vcmp.gt.f32.partialorder %v2352, 20.0
        %vm2493 = vcmp.gt.f32.partialorder %v2468, 20.0
        %vm2494 = vcmp.gt.f32.partialorder %v2122, 20.0
        %vm2495 = vcmp.gt.f32.partialorder %v2238, 20.0
        %vm2496 = vcmp.gt.f32.partialorder %v2354, 20.0
        %vm2497 = vcmp.gt.f32.partialorder %v2470, 20.0
        %vm2498 = vcmp.gt.f32.partialorder %v2125, 20.0
        %vm2499 = vcmp.gt.f32.partialorder %v2241, 20.0
        %vm2500 = vcmp.gt.f32.partialorder %v2357, 20.0
        %vm2501 = vcmp.gt.f32.partialorder %v2473, 20.0
        %vm2502 = vcmp.gt.f32.partialorder %v2127, 20.0
        %vm2503 = vcmp.gt.f32.partialorder %v2243, 20.0
        %vm2504 = vcmp.gt.f32.partialorder %v2359, 20.0
        %vm2505 = vcmp.gt.f32.partialorder %v2475, 20.0
        %vm2506 = vcmp.gt.f32.partialorder %v2130, 20.0
        %vm2507 = vcmp.gt.f32.partialorder %v2246, 20.0
        %vm2508 = vcmp.gt.f32.partialorder %v2362, 20.0
        %vm2509 = vcmp.gt.f32.partialorder %v2478, 20.0
        %vm2510 = vcmp.gt.f32.partialorder %v2132, 20.0
        %vm2511 = vcmp.gt.f32.partialorder %v2248, 20.0
        %vm2512 = vcmp.gt.f32.partialorder %v2364, 20.0
        %vm2513 = vcmp.gt.f32.partialorder %v2480, 20.0
        %v2514 = vmin.f32 %v2115, 20.0
        %v2515 = vmin.f32 %v2231, 20.0
        %v2516 = vmin.f32 %v2347, 20.0
        %v2517 = vmin.f32 %v2463, 20.0
        %v2518 = vmin.f32 %v2117, 20.0
        %v2519 = vmin.f32 %v2233, 20.0
        %v2520 = vmin.f32 %v2349, 20.0
        %v2521 = vmin.f32 %v2465, 20.0
        %v2522 = vmin.f32 %v2120, 20.0
        %v2523 = vmin.f32 %v2236, 20.0
        %v2524 = vmin.f32 %v2352, 20.0
        %v2525 = vmin.f32 %v2468, 20.0
        %v2526 = vmin.f32 %v2122, 20.0
        %v2527 = vmin.f32 %v2238, 20.0
        %v2528 = vmin.f32 %v2354, 20.0
        %v2529 = vmin.f32 %v2470, 20.0
        %v2530 = vmin.f32 %v2125, 20.0
        %v2531 = vmin.f32 %v2241, 20.0
        %v2532 = vmin.f32 %v2357, 20.0
        %v2533 = vmin.f32 %v2473, 20.0
        %v2534 = vmin.f32 %v2127, 20.0
        %v2535 = vmin.f32 %v2243, 20.0
        %v2536 = vmin.f32 %v2359, 20.0
        %v2537 = vmin.f32 %v2475, 20.0
        %v2538 = vmin.f32 %v2130, 20.0
        %v2539 = vmin.f32 %v2246, 20.0
        %v2540 = vmin.f32 %v2362, 20.0
        %v2541 = vmin.f32 %v2478, 20.0
        %v2542 = vmin.f32 %v2132, 20.0
        %v2543 = vmin.f32 %v2248, 20.0
        %v2544 = vmin.f32 %v2364, 20.0
        %v2545 = vmin.f32 %v2480, 20.0
        %v2546 = vmul.f32 %v2514, 1.442695
        %v2547 = vpow.pop %v2546
        %v2548 = vmul.f32 %v2515, 1.442695
        %v2549 = vpow.pop %v2548
        %v2550 = vmul.f32 %v2516, 1.442695
        %v2551 = vpow.pop %v2550
        %v2552 = vmul.f32 %v2517, 1.442695
        %v2553 = vpow.pop %v2552
        %v2554 = vmul.f32 %v2518, 1.442695
        %v2555 = vpow.pop %v2554
        %v2556 = vmul.f32 %v2519, 1.442695
        %v2557 = vpow.pop %v2556
        %v2558 = vmul.f32 %v2520, 1.442695
        %v2559 = vpow.pop %v2558
        %v2560 = vmul.f32 %v2521, 1.442695
        %v2561 = vpow.pop %v2560
        %v2562 = vmul.f32 %v2522, 1.442695
        %v2563 = vpow.pop %v2562
        %v2564 = vmul.f32 %v2523, 1.442695
        %v2565 = vpow.pop %v2564
        %v2566 = vmul.f32 %v2524, 1.442695
        %v2567 = vpow.pop %v2566
        %v2568 = vmul.f32 %v2525, 1.442695
        %v2569 = vpow.pop %v2568
        %v2570 = vmul.f32 %v2526, 1.442695
        %v2571 = vpow.pop %v2570
        %v2572 = vmul.f32 %v2527, 1.442695
        %v2573 = vpow.pop %v2572
        %v2574 = vmul.f32 %v2528, 1.442695
        %v2575 = vpow.pop %v2574
        %v2576 = vmul.f32 %v2529, 1.442695
        %v2577 = vpow.pop %v2576
        %v2578 = vmul.f32 %v2530, 1.442695
        %v2579 = vpow.pop %v2578
        %v2580 = vmul.f32 %v2531, 1.442695
        %v2581 = vpow.pop %v2580
        %v2582 = vmul.f32 %v2532, 1.442695
        %v2583 = vpow.pop %v2582
        %v2584 = vmul.f32 %v2533, 1.442695
        %v2585 = vpow.pop %v2584
        %v2586 = vmul.f32 %v2534, 1.442695
        %v2587 = vpow.pop %v2586
        %v2588 = vmul.f32 %v2535, 1.442695
        %v2589 = vpow.pop %v2588
        %v2590 = vmul.f32 %v2536, 1.442695
        %v2591 = vpow.pop %v2590
        %v2592 = vmul.f32 %v2537, 1.442695
        %v2593 = vpow.pop %v2592
        %v2594 = vmul.f32 %v2538, 1.442695
        %v2595 = vpow.pop %v2594
        %v2596 = vmul.f32 %v2539, 1.442695
        %v2597 = vpow.pop %v2596
        %v2598 = vmul.f32 %v2540, 1.442695
        %v2599 = vpow.pop %v2598
        %v2600 = vmul.f32 %v2541, 1.442695
        %v2601 = vpow.pop %v2600
        %v2602 = vmul.f32 %v2542, 1.442695
        %v2603 = vpow.pop %v2602
        %v2604 = vmul.f32 %v2543, 1.442695
        %v2605 = vpow.pop %v2604
        %v2606 = vmul.f32 %v2544, 1.442695
        %v2607 = vpow.pop %v2606
        %v2608 = vmul.f32 %v2545, 1.442695
        %v2609 = vpow.pop %v2608
        %v2610 = vadd.f32 %v2547, 1.0
        %v2611 = vlog2.pop %v2610
        %v2612 = vmul.f32 %v2611, 0.6931472
        %v2613 = vmul.f32 -0.5, %v2547
        %v2614 = vadd.f32 %v2613, 1.0
        %v2615 = vmul.f32 %v2614, %v2547
        %v2616 = vand.u32 2147483647, %v2547
        %vm2617 = vcmp.lt.f32.partialorder %v2616, 0.0004427343
        %v2618 = vsel %vm2617, %v2615, %v2612
        %v2619 = vadd.f32 %v2549, 1.0
        %v2620 = vlog2.pop %v2619
        %v2621 = vmul.f32 %v2620, 0.6931472
        %v2622 = vmul.f32 -0.5, %v2549
        %v2623 = vadd.f32 %v2622, 1.0
        %v2624 = vmul.f32 %v2623, %v2549
        %v2625 = vand.u32 2147483647, %v2549
        %vm2626 = vcmp.lt.f32.partialorder %v2625, 0.0004427343
        %v2627 = vsel %vm2626, %v2624, %v2621
        %v2628 = vadd.f32 %v2551, 1.0
        %v2629 = vlog2.pop %v2628
        %v2630 = vmul.f32 %v2629, 0.6931472
        %v2631 = vmul.f32 -0.5, %v2551
        %v2632 = vadd.f32 %v2631, 1.0
        %v2633 = vmul.f32 %v2632, %v2551
        %v2634 = vand.u32 2147483647, %v2551
        %vm2635 = vcmp.lt.f32.partialorder %v2634, 0.0004427343
        %v2636 = vsel %vm2635, %v2633, %v2630
        %v2637 = vadd.f32 %v2553, 1.0
        %v2638 = vlog2.pop %v2637
        %v2639 = vmul.f32 %v2638, 0.6931472
        %v2640 = vmul.f32 -0.5, %v2553
        %v2641 = vadd.f32 %v2640, 1.0
        %v2642 = vmul.f32 %v2641, %v2553
        %v2643 = vand.u32 2147483647, %v2553
        %vm2644 = vcmp.lt.f32.partialorder %v2643, 0.0004427343
        %v2645 = vsel %vm2644, %v2642, %v2639
        %v2646 = vadd.f32 %v2555, 1.0
        %v2647 = vlog2.pop %v2646
        %v2648 = vmul.f32 %v2647, 0.6931472
        %v2649 = vmul.f32 -0.5, %v2555
        %v2650 = vadd.f32 %v2649, 1.0
        %v2651 = vmul.f32 %v2650, %v2555
        %v2652 = vand.u32 2147483647, %v2555
        %vm2653 = vcmp.lt.f32.partialorder %v2652, 0.0004427343
        %v2654 = vsel %vm2653, %v2651, %v2648
        %v2655 = vadd.f32 %v2557, 1.0
        %v2656 = vlog2.pop %v2655
        %v2657 = vmul.f32 %v2656, 0.6931472
        %v2658 = vmul.f32 -0.5, %v2557
        %v2659 = vadd.f32 %v2658, 1.0
        %v2660 = vmul.f32 %v2659, %v2557
        %v2661 = vand.u32 2147483647, %v2557
        %vm2662 = vcmp.lt.f32.partialorder %v2661, 0.0004427343
        %v2663 = vsel %vm2662, %v2660, %v2657
        %v2664 = vadd.f32 %v2559, 1.0
        %v2665 = vlog2.pop %v2664
        %v2666 = vmul.f32 %v2665, 0.6931472
        %v2667 = vmul.f32 -0.5, %v2559
        %v2668 = vadd.f32 %v2667, 1.0
        %v2669 = vmul.f32 %v2668, %v2559
        %v2670 = vand.u32 2147483647, %v2559
        %vm2671 = vcmp.lt.f32.partialorder %v2670, 0.0004427343
        %v2672 = vsel %vm2671, %v2669, %v2666
        %v2673 = vadd.f32 %v2561, 1.0
        %v2674 = vlog2.pop %v2673
        %v2675 = vmul.f32 %v2674, 0.6931472
        %v2676 = vmul.f32 -0.5, %v2561
        %v2677 = vadd.f32 %v2676, 1.0
        %v2678 = vmul.f32 %v2677, %v2561
        %v2679 = vand.u32 2147483647, %v2561
        %vm2680 = vcmp.lt.f32.partialorder %v2679, 0.0004427343
        %v2681 = vsel %vm2680, %v2678, %v2675
        %v2682 = vadd.f32 %v2563, 1.0
        %v2683 = vlog2.pop %v2682
        %v2684 = vmul.f32 %v2683, 0.6931472
        %v2685 = vmul.f32 -0.5, %v2563
        %v2686 = vadd.f32 %v2685, 1.0
        %v2687 = vmul.f32 %v2686, %v2563
        %v2688 = vand.u32 2147483647, %v2563
        %vm2689 = vcmp.lt.f32.partialorder %v2688, 0.0004427343
        %v2690 = vsel %vm2689, %v2687, %v2684
        %v2691 = vadd.f32 %v2565, 1.0
        %v2692 = vlog2.pop %v2691
        %v2693 = vmul.f32 %v2692, 0.6931472
        %v2694 = vmul.f32 -0.5, %v2565
        %v2695 = vadd.f32 %v2694, 1.0
        %v2696 = vmul.f32 %v2695, %v2565
        %v2697 = vand.u32 2147483647, %v2565
        %vm2698 = vcmp.lt.f32.partialorder %v2697, 0.0004427343
        %v2699 = vsel %vm2698, %v2696, %v2693
        %v2700 = vadd.f32 %v2567, 1.0
        %v2701 = vlog2.pop %v2700
        %v2702 = vmul.f32 %v2701, 0.6931472
        %v2703 = vmul.f32 -0.5, %v2567
        %v2704 = vadd.f32 %v2703, 1.0
        %v2705 = vmul.f32 %v2704, %v2567
        %v2706 = vand.u32 2147483647, %v2567
        %vm2707 = vcmp.lt.f32.partialorder %v2706, 0.0004427343
        %v2708 = vsel %vm2707, %v2705, %v2702
        %v2709 = vadd.f32 %v2569, 1.0
        %v2710 = vlog2.pop %v2709
        %v2711 = vmul.f32 %v2710, 0.6931472
        %v2712 = vmul.f32 -0.5, %v2569
        %v2713 = vadd.f32 %v2712, 1.0
        %v2714 = vmul.f32 %v2713, %v2569
        %v2715 = vand.u32 2147483647, %v2569
        %vm2716 = vcmp.lt.f32.partialorder %v2715, 0.0004427343
        %v2717 = vsel %vm2716, %v2714, %v2711
        %v2718 = vadd.f32 %v2571, 1.0
        %v2719 = vlog2.pop %v2718
        %v2720 = vmul.f32 %v2719, 0.6931472
        %v2721 = vmul.f32 -0.5, %v2571
        %v2722 = vadd.f32 %v2721, 1.0
        %v2723 = vmul.f32 %v2722, %v2571
        %v2724 = vand.u32 2147483647, %v2571
        %vm2725 = vcmp.lt.f32.partialorder %v2724, 0.0004427343
        %v2726 = vsel %vm2725, %v2723, %v2720
        %v2727 = vadd.f32 %v2573, 1.0
        %v2728 = vlog2.pop %v2727
        %v2729 = vmul.f32 %v2728, 0.6931472
        %v2730 = vmul.f32 -0.5, %v2573
        %v2731 = vadd.f32 %v2730, 1.0
        %v2732 = vmul.f32 %v2731, %v2573
        %v2733 = vand.u32 2147483647, %v2573
        %vm2734 = vcmp.lt.f32.partialorder %v2733, 0.0004427343
        %v2735 = vsel %vm2734, %v2732, %v2729
        %v2736 = vadd.f32 %v2575, 1.0
        %v2737 = vlog2.pop %v2736
        %v2738 = vmul.f32 %v2737, 0.6931472
        %v2739 = vmul.f32 -0.5, %v2575
        %v2740 = vadd.f32 %v2739, 1.0
        %v2741 = vmul.f32 %v2740, %v2575
        %v2742 = vand.u32 2147483647, %v2575
        %vm2743 = vcmp.lt.f32.partialorder %v2742, 0.0004427343
        %v2744 = vsel %vm2743, %v2741, %v2738
        %v2745 = vadd.f32 %v2577, 1.0
        %v2746 = vlog2.pop %v2745
        %v2747 = vmul.f32 %v2746, 0.6931472
        %v2748 = vmul.f32 -0.5, %v2577
        %v2749 = vadd.f32 %v2748, 1.0
        %v2750 = vmul.f32 %v2749, %v2577
        %v2751 = vand.u32 2147483647, %v2577
        %vm2752 = vcmp.lt.f32.partialorder %v2751, 0.0004427343
        %v2753 = vsel %vm2752, %v2750, %v2747
        %v2754 = vadd.f32 %v2579, 1.0
        %v2755 = vlog2.pop %v2754
        %v2756 = vmul.f32 %v2755, 0.6931472
        %v2757 = vmul.f32 -0.5, %v2579
        %v2758 = vadd.f32 %v2757, 1.0
        %v2759 = vmul.f32 %v2758, %v2579
        %v2760 = vand.u32 2147483647, %v2579
        %vm2761 = vcmp.lt.f32.partialorder %v2760, 0.0004427343
        %v2762 = vsel %vm2761, %v2759, %v2756
        %v2763 = vadd.f32 %v2581, 1.0
        %v2764 = vlog2.pop %v2763
        %v2765 = vmul.f32 %v2764, 0.6931472
        %v2766 = vmul.f32 -0.5, %v2581
        %v2767 = vadd.f32 %v2766, 1.0
        %v2768 = vmul.f32 %v2767, %v2581
        %v2769 = vand.u32 2147483647, %v2581
        %vm2770 = vcmp.lt.f32.partialorder %v2769, 0.0004427343
        %v2771 = vsel %vm2770, %v2768, %v2765
        %v2772 = vadd.f32 %v2583, 1.0
        %v2773 = vlog2.pop %v2772
        %v2774 = vmul.f32 %v2773, 0.6931472
        %v2775 = vmul.f32 -0.5, %v2583
        %v2776 = vadd.f32 %v2775, 1.0
        %v2777 = vmul.f32 %v2776, %v2583
        %v2778 = vand.u32 2147483647, %v2583
        %vm2779 = vcmp.lt.f32.partialorder %v2778, 0.0004427343
        %v2780 = vsel %vm2779, %v2777, %v2774
        %v2781 = vadd.f32 %v2585, 1.0
        %v2782 = vlog2.pop %v2781
        %v2783 = vmul.f32 %v2782, 0.6931472
        %v2784 = vmul.f32 -0.5, %v2585
        %v2785 = vadd.f32 %v2784, 1.0
        %v2786 = vmul.f32 %v2785, %v2585
        %v2787 = vand.u32 2147483647, %v2585
        %vm2788 = vcmp.lt.f32.partialorder %v2787, 0.0004427343
        %v2789 = vsel %vm2788, %v2786, %v2783
        %v2790 = vadd.f32 %v2587, 1.0
        %v2791 = vlog2.pop %v2790
        %v2792 = vmul.f32 %v2791, 0.6931472
        %v2793 = vmul.f32 -0.5, %v2587
        %v2794 = vadd.f32 %v2793, 1.0
        %v2795 = vmul.f32 %v2794, %v2587
        %v2796 = vand.u32 2147483647, %v2587
        %vm2797 = vcmp.lt.f32.partialorder %v2796, 0.0004427343
        %v2798 = vsel %vm2797, %v2795, %v2792
        %v2799 = vadd.f32 %v2589, 1.0
        %v2800 = vlog2.pop %v2799
        %v2801 = vmul.f32 %v2800, 0.6931472
        %v2802 = vmul.f32 -0.5, %v2589
        %v2803 = vadd.f32 %v2802, 1.0
        %v2804 = vmul.f32 %v2803, %v2589
        %v2805 = vand.u32 2147483647, %v2589
        %vm2806 = vcmp.lt.f32.partialorder %v2805, 0.0004427343
        %v2807 = vsel %vm2806, %v2804, %v2801
        %v2808 = vadd.f32 %v2591, 1.0
        %v2809 = vlog2.pop %v2808
        %v2810 = vmul.f32 %v2809, 0.6931472
        %v2811 = vmul.f32 -0.5, %v2591
        %v2812 = vadd.f32 %v2811, 1.0
        %v2813 = vmul.f32 %v2812, %v2591
        %v2814 = vand.u32 2147483647, %v2591
        %vm2815 = vcmp.lt.f32.partialorder %v2814, 0.0004427343
        %v2816 = vsel %vm2815, %v2813, %v2810
        %v2817 = vadd.f32 %v2593, 1.0
        %v2818 = vlog2.pop %v2817
        %v2819 = vmul.f32 %v2818, 0.6931472
        %v2820 = vmul.f32 -0.5, %v2593
        %v2821 = vadd.f32 %v2820, 1.0
        %v2822 = vmul.f32 %v2821, %v2593
        %v2823 = vand.u32 2147483647, %v2593
        %vm2824 = vcmp.lt.f32.partialorder %v2823, 0.0004427343
        %v2825 = vsel %vm2824, %v2822, %v2819
        %v2826 = vadd.f32 %v2595, 1.0
        %v2827 = vlog2.pop %v2826
        %v2828 = vmul.f32 %v2827, 0.6931472
        %v2829 = vmul.f32 -0.5, %v2595
        %v2830 = vadd.f32 %v2829, 1.0
        %v2831 = vmul.f32 %v2830, %v2595
        %v2832 = vand.u32 2147483647, %v2595
        %vm2833 = vcmp.lt.f32.partialorder %v2832, 0.0004427343
        %v2834 = vsel %vm2833, %v2831, %v2828
        %v2835 = vadd.f32 %v2597, 1.0
        %v2836 = vlog2.pop %v2835
        %v2837 = vmul.f32 %v2836, 0.6931472
        %v2838 = vmul.f32 -0.5, %v2597
        %v2839 = vadd.f32 %v2838, 1.0
        %v2840 = vmul.f32 %v2839, %v2597
        %v2841 = vand.u32 2147483647, %v2597
        %vm2842 = vcmp.lt.f32.partialorder %v2841, 0.0004427343
        %v2843 = vsel %vm2842, %v2840, %v2837
        %v2844 = vadd.f32 %v2599, 1.0
        %v2845 = vlog2.pop %v2844
        %v2846 = vmul.f32 %v2845, 0.6931472
        %v2847 = vmul.f32 -0.5, %v2599
        %v2848 = vadd.f32 %v2847, 1.0
        %v2849 = vmul.f32 %v2848, %v2599
        %v2850 = vand.u32 2147483647, %v2599
        %vm2851 = vcmp.lt.f32.partialorder %v2850, 0.0004427343
        %v2852 = vsel %vm2851, %v2849, %v2846
        %v2853 = vadd.f32 %v2601, 1.0
        %v2854 = vlog2.pop %v2853
        %v2855 = vmul.f32 %v2854, 0.6931472
        %v2856 = vmul.f32 -0.5, %v2601
        %v2857 = vadd.f32 %v2856, 1.0
        %v2858 = vmul.f32 %v2857, %v2601
        %v2859 = vand.u32 2147483647, %v2601
        %vm2860 = vcmp.lt.f32.partialorder %v2859, 0.0004427343
        %v2861 = vsel %vm2860, %v2858, %v2855
        %v2862 = vadd.f32 %v2603, 1.0
        %v2863 = vlog2.pop %v2862
        %v2864 = vmul.f32 %v2863, 0.6931472
        %v2865 = vmul.f32 -0.5, %v2603
        %v2866 = vadd.f32 %v2865, 1.0
        %v2867 = vmul.f32 %v2866, %v2603
        %v2868 = vand.u32 2147483647, %v2603
        %vm2869 = vcmp.lt.f32.partialorder %v2868, 0.0004427343
        %v2870 = vsel %vm2869, %v2867, %v2864
        %v2871 = vadd.f32 %v2605, 1.0
        %v2872 = vlog2.pop %v2871
        %v2873 = vmul.f32 %v2872, 0.6931472
        %v2874 = vmul.f32 -0.5, %v2605
        %v2875 = vadd.f32 %v2874, 1.0
        %v2876 = vmul.f32 %v2875, %v2605
        %v2877 = vand.u32 2147483647, %v2605
        %vm2878 = vcmp.lt.f32.partialorder %v2877, 0.0004427343
        %v2879 = vsel %vm2878, %v2876, %v2873
        %v2880 = vadd.f32 %v2607, 1.0
        %v2881 = vlog2.pop %v2880
        %v2882 = vmul.f32 %v2881, 0.6931472
        %v2883 = vmul.f32 -0.5, %v2607
        %v2884 = vadd.f32 %v2883, 1.0
        %v2885 = vmul.f32 %v2884, %v2607
        %v2886 = vand.u32 2147483647, %v2607
        %vm2887 = vcmp.lt.f32.partialorder %v2886, 0.0004427343
        %v2888 = vsel %vm2887, %v2885, %v2882
        %v2889 = vadd.f32 %v2609, 1.0
        %v2890 = vlog2.pop %v2889
        %v2891 = vmul.f32 %v2890, 0.6931472
        %v2892 = vmul.f32 -0.5, %v2609
        %v2893 = vadd.f32 %v2892, 1.0
        %v2894 = vmul.f32 %v2893, %v2609
        %v2895 = vand.u32 2147483647, %v2609
        %vm2896 = vcmp.lt.f32.partialorder %v2895, 0.0004427343
        %v2897 = vsel %vm2896, %v2894, %v2891
        %v2898 = vsel %vm2482, %v2115, %v2618
        %v2899 = vsel %vm2483, %v2231, %v2627
        %v2900 = vsel %vm2484, %v2347, %v2636
        %v2901 = vsel %vm2485, %v2463, %v2645
        %v2902 = vsel %vm2486, %v2117, %v2654
        %v2903 = vsel %vm2487, %v2233, %v2663
        %v2904 = vsel %vm2488, %v2349, %v2672
        %v2905 = vsel %vm2489, %v2465, %v2681
        %v2906 = vsel %vm2490, %v2120, %v2690
        %v2907 = vsel %vm2491, %v2236, %v2699
        %v2908 = vsel %vm2492, %v2352, %v2708
        %v2909 = vsel %vm2493, %v2468, %v2717
        %v2910 = vsel %vm2494, %v2122, %v2726
        %v2911 = vsel %vm2495, %v2238, %v2735
        %v2912 = vsel %vm2496, %v2354, %v2744
        %v2913 = vsel %vm2497, %v2470, %v2753
        %v2914 = vsel %vm2498, %v2125, %v2762
        %v2915 = vsel %vm2499, %v2241, %v2771
        %v2916 = vsel %vm2500, %v2357, %v2780
        %v2917 = vsel %vm2501, %v2473, %v2789
        %v2918 = vsel %vm2502, %v2127, %v2798
        %v2919 = vsel %vm2503, %v2243, %v2807
        %v2920 = vsel %vm2504, %v2359, %v2816
        %v2921 = vsel %vm2505, %v2475, %v2825
        %v2922 = vsel %vm2506, %v2130, %v2834
        %v2923 = vsel %vm2507, %v2246, %v2843
        %v2924 = vsel %vm2508, %v2362, %v2852
        %v2925 = vsel %vm2509, %v2478, %v2861
        %v2926 = vsel %vm2510, %v2132, %v2870
        %v2927 = vsel %vm2511, %v2248, %v2879
        %v2928 = vsel %vm2512, %v2364, %v2888
        %v2929 = vsel %vm2513, %v2480, %v2897
        %v2930 = vld [vmem:[%s9] ss:$2 sm:$0xf]
        %s2931 = scalar_lea.vmem %s9, 1
        %v2932 = vld [vmem:[%s2931] ss:$2 sm:$0xf]
        %v2934 = vperm.slane %v2930, 0
        %v2935 = vperm.slane %v2930, 1
        %v2936 = vperm.slane %v2930, 2
        %v2937 = vperm.slane %v2930, 3
        %v2942 = vmul.f32 %v2898, %v2934
        %v2943 = vmul.f32 %v2899, %v2935
        %v2944 = vmul.f32 %v2900, %v2936
        %v2945 = vmul.f32 %v2901, %v2937
        %v2946 = vmul.f32 %v2902, %v2934
        %v2947 = vmul.f32 %v2903, %v2935
        %v2948 = vmul.f32 %v2904, %v2936
        %v2949 = vmul.f32 %v2905, %v2937
        %v2950 = vmul.f32 %v2906, %v2934
        %v2951 = vmul.f32 %v2907, %v2935
        %v2952 = vmul.f32 %v2908, %v2936
        %v2953 = vmul.f32 %v2909, %v2937
        %v2954 = vmul.f32 %v2910, %v2934
        %v2955 = vmul.f32 %v2911, %v2935
        %v2956 = vmul.f32 %v2912, %v2936
        %v2957 = vmul.f32 %v2913, %v2937
        %v2958 = vmul.f32 %v2914, %v2934
        %v2959 = vmul.f32 %v2915, %v2935
        %v2960 = vmul.f32 %v2916, %v2936
        %v2961 = vmul.f32 %v2917, %v2937
        %v2962 = vmul.f32 %v2918, %v2934
        %v2963 = vmul.f32 %v2919, %v2935
        %v2964 = vmul.f32 %v2920, %v2936
        %v2965 = vmul.f32 %v2921, %v2937
        %v2966 = vmul.f32 %v2922, %v2934
        %v2967 = vmul.f32 %v2923, %v2935
        %v2968 = vmul.f32 %v2924, %v2936
        %v2969 = vmul.f32 %v2925, %v2937
        %v2970 = vmul.f32 %v2926, %v2934
        %v2971 = vmul.f32 %v2927, %v2935
        %v2972 = vmul.f32 %v2928, %v2936
        %v2973 = vmul.f32 %v2929, %v2937
        %v2974 = vadd.f32 %v2942, %v2943
        %v2975 = vadd.f32 %v2974, %v2944
        %v2976 = vadd.f32 %v2975, %v2945
        %2977 = vadd.xlane.f32.xlu0 %v2976
        %v2978 = vpop.xlane.xlu0 %2977
        %v2979 = vadd.f32 %v2946, %v2947
        %v2980 = vadd.f32 %v2979, %v2948
        %v2981 = vadd.f32 %v2980, %v2949
        %2982 = vadd.xlane.f32.xlu0 %v2981
        %v2983 = vpop.xlane.xlu0 %2982
        %v2984 = vadd.f32 %v2950, %v2951
        %v2985 = vadd.f32 %v2984, %v2952
        %v2986 = vadd.f32 %v2985, %v2953
        %2987 = vadd.xlane.f32.xlu0 %v2986
        %v2988 = vpop.xlane.xlu0 %2987
        %v2989 = vadd.f32 %v2954, %v2955
        %v2990 = vadd.f32 %v2989, %v2956
        %v2991 = vadd.f32 %v2990, %v2957
        %2992 = vadd.xlane.f32.xlu0 %v2991
        %v2993 = vpop.xlane.xlu0 %2992
        %v2994 = vadd.f32 %v2958, %v2959
        %v2995 = vadd.f32 %v2994, %v2960
        %v2996 = vadd.f32 %v2995, %v2961
        %2997 = vadd.xlane.f32.xlu0 %v2996
        %v2998 = vpop.xlane.xlu0 %2997
        %v2999 = vadd.f32 %v2962, %v2963
        %v3000 = vadd.f32 %v2999, %v2964
        %v3001 = vadd.f32 %v3000, %v2965
        %3002 = vadd.xlane.f32.xlu0 %v3001
        %v3003 = vpop.xlane.xlu0 %3002
        %v3004 = vadd.f32 %v2966, %v2967
        %v3005 = vadd.f32 %v3004, %v2968
        %v3006 = vadd.f32 %v3005, %v2969
        %3007 = vadd.xlane.f32.xlu0 %v3006
        %v3008 = vpop.xlane.xlu0 %3007
        %v3009 = vadd.f32 %v2970, %v2971
        %v3010 = vadd.f32 %v3009, %v2972
        %v3011 = vadd.f32 %v3010, %v2973
        %3012 = vadd.xlane.f32.xlu0 %v3011
        %v3013 = vpop.xlane.xlu0 %3012
        %s3014 = sld [smem:[#allocation4 + $0x4]]
        %v3015 = vstv %s3014
        %v3016 = vadd.f32 %v2978, %v3015
        %v3017 = vadd.f32 %v2983, %v3015
        %v3018 = vadd.f32 %v2988, %v3015
        %v3019 = vadd.f32 %v2993, %v3015
        %v3020 = vadd.f32 %v2998, %v3015
        %v3021 = vadd.f32 %v3003, %v3015
        %v3022 = vadd.f32 %v3008, %v3015
        %v3023 = vadd.f32 %v3013, %v3015
        %v3025 = vperm.slane %v2932, 0
        %v3026 = vperm.slane %v2932, 1
        %v3027 = vperm.slane %v2932, 2
        %v3028 = vperm.slane %v2932, 3
        %v3033 = vmul.f32 %v2898, %v3025
        %v3034 = vmul.f32 %v2899, %v3026
        %v3035 = vmul.f32 %v2900, %v3027
        %v3036 = vmul.f32 %v2901, %v3028
        %v3037 = vmul.f32 %v2902, %v3025
        %v3038 = vmul.f32 %v2903, %v3026
        %v3039 = vmul.f32 %v2904, %v3027
        %v3040 = vmul.f32 %v2905, %v3028
        %v3041 = vmul.f32 %v2906, %v3025
        %v3042 = vmul.f32 %v2907, %v3026
        %v3043 = vmul.f32 %v2908, %v3027
        %v3044 = vmul.f32 %v2909, %v3028
        %v3045 = vmul.f32 %v2910, %v3025
        %v3046 = vmul.f32 %v2911, %v3026
        %v3047 = vmul.f32 %v2912, %v3027
        %v3048 = vmul.f32 %v2913, %v3028
        %v3049 = vmul.f32 %v2914, %v3025
        %v3050 = vmul.f32 %v2915, %v3026
        %v3051 = vmul.f32 %v2916, %v3027
        %v3052 = vmul.f32 %v2917, %v3028
        %v3053 = vmul.f32 %v2918, %v3025
        %v3054 = vmul.f32 %v2919, %v3026
        %v3055 = vmul.f32 %v2920, %v3027
        %v3056 = vmul.f32 %v2921, %v3028
        %v3057 = vmul.f32 %v2922, %v3025
        %v3058 = vmul.f32 %v2923, %v3026
        %v3059 = vmul.f32 %v2924, %v3027
        %v3060 = vmul.f32 %v2925, %v3028
        %v3061 = vmul.f32 %v2926, %v3025
        %v3062 = vmul.f32 %v2927, %v3026
        %v3063 = vmul.f32 %v2928, %v3027
        %v3064 = vmul.f32 %v2929, %v3028
        %v3065 = vadd.f32 %v3033, %v3034
        %v3066 = vadd.f32 %v3065, %v3035
        %v3067 = vadd.f32 %v3066, %v3036
        %3068 = vadd.xlane.f32.xlu0 %v3067
        %v3069 = vpop.xlane.xlu0 %3068
        %v3070 = vadd.f32 %v3037, %v3038
        %v3071 = vadd.f32 %v3070, %v3039
        %v3072 = vadd.f32 %v3071, %v3040
        %3073 = vadd.xlane.f32.xlu0 %v3072
        %v3074 = vpop.xlane.xlu0 %3073
        %v3075 = vadd.f32 %v3041, %v3042
        %v3076 = vadd.f32 %v3075, %v3043
        %v3077 = vadd.f32 %v3076, %v3044
        %3078 = vadd.xlane.f32.xlu0 %v3077
        %v3079 = vpop.xlane.xlu0 %3078
        %v3080 = vadd.f32 %v3045, %v3046
        %v3081 = vadd.f32 %v3080, %v3047
        %v3082 = vadd.f32 %v3081, %v3048
        %3083 = vadd.xlane.f32.xlu0 %v3082
        %v3084 = vpop.xlane.xlu0 %3083
        %v3085 = vadd.f32 %v3049, %v3050
        %v3086 = vadd.f32 %v3085, %v3051
        %v3087 = vadd.f32 %v3086, %v3052
        %3088 = vadd.xlane.f32.xlu0 %v3087
        %v3089 = vpop.xlane.xlu0 %3088
        %v3090 = vadd.f32 %v3053, %v3054
        %v3091 = vadd.f32 %v3090, %v3055
        %v3092 = vadd.f32 %v3091, %v3056
        %3093 = vadd.xlane.f32.xlu0 %v3092
        %v3094 = vpop.xlane.xlu0 %3093
        %v3095 = vadd.f32 %v3057, %v3058
        %v3096 = vadd.f32 %v3095, %v3059
        %v3097 = vadd.f32 %v3096, %v3060
        %3098 = vadd.xlane.f32.xlu0 %v3097
        %v3099 = vpop.xlane.xlu0 %3098
        %v3100 = vadd.f32 %v3061, %v3062
        %v3101 = vadd.f32 %v3100, %v3063
        %v3102 = vadd.f32 %v3101, %v3064
        %3103 = vadd.xlane.f32.xlu0 %v3102
        %v3104 = vpop.xlane.xlu0 %3103
        %s3105 = sld [smem:[#allocation4 + $0x5]]
        %v3106 = vstv %s3105
        %v3107 = vadd.f32 %v3069, %v3106
        %v3108 = vadd.f32 %v3074, %v3106
        %v3109 = vadd.f32 %v3079, %v3106
        %v3110 = vadd.f32 %v3084, %v3106
        %v3111 = vadd.f32 %v3089, %v3106
        %v3112 = vadd.f32 %v3094, %v3106
        %v3113 = vadd.f32 %v3099, %v3106
        %v3114 = vadd.f32 %v3104, %v3106
        %s3115 = sld [smem:[#allocation4]]
        %s3116 = sld [smem:[#allocation4 + $0x1]]
        %v3125 = vlaneseq
        %v3126 = vand.u32 %v3125, 127
        %v3127 = vperm.slane %v3016, %v3126
        %v3128 = vperm.slane %v3017, %v3126
        %v3129 = vperm.slane %v3018, %v3126
        %v3130 = vperm.slane %v3019, %v3126
        %v3131 = vperm.slane %v3020, %v3126
        %v3132 = vperm.slane %v3021, %v3126
        %v3133 = vperm.slane %v3022, %v3126
        %v3134 = vperm.slane %v3023, %v3126
        %v3135 = vsel %vm639, %v3128, %v3127
        %v3136 = vsel %vm635, %v3129, %v3135
        %v3137 = vsel %vm641, %v3130, %v3136
        %v3138 = vsel %vm647, %v3131, %v3137
        %v3139 = vsel %vm653, %v3132, %v3138
        %v3140 = vsel %vm659, %v3133, %v3139
        %vm3141 = vcmask 1047559
        %v3142 = vsel %vm3141, %v3134, %v3140
        %vm3144 = vcmask 64512
        %v3145 = vsel %vm3144, %v3142, 0.0
        %3146 = vadd.xlane.f32.xlu0 %v3145
        %v3147 = vpop.xlane.xlu0 %3146
        %v3148 = vrcp.pop 8.0
        %v3149 = vmul.f32 8.0, %v3148
        %v3150 = vsub.f32 1.0, %v3149
        %v3151 = vmul.f32 %v3148, %v3150
        %v3152 = vadd.f32 %v3148, %v3151
        %vm3153 = vweird.f32 %v3148
        %v3154 = vsel %vm3153, %v3148, %v3152
        %v3155 = vmul.f32 %v3147, %v3154
        %v3157 = vperm.slane %v3155, 0
        %v3158 = vperm.slane %v3155, 1
        %v3159 = vperm.slane %v3155, 2
        %v3160 = vperm.slane %v3155, 3
        %v3161 = vperm.slane %v3155, 4
        %v3162 = vperm.slane %v3155, 5
        %v3163 = vperm.slane %v3155, 6
        %v3164 = vperm.slane %v3155, 7
        %v3173 = vsub.f32 %v3016, %v3157
        %v3174 = vsub.f32 %v3017, %v3158
        %v3175 = vsub.f32 %v3018, %v3159
        %v3176 = vsub.f32 %v3019, %v3160
        %v3177 = vsub.f32 %v3020, %v3161
        %v3178 = vsub.f32 %v3021, %v3162
        %v3179 = vsub.f32 %v3022, %v3163
        %v3180 = vsub.f32 %v3023, %v3164
        %v3181 = vmul.f32 %v3173, %v3173
        %v3182 = vmul.f32 %v3174, %v3174
        %v3183 = vmul.f32 %v3175, %v3175
        %v3184 = vmul.f32 %v3176, %v3176
        %v3185 = vmul.f32 %v3177, %v3177
        %v3186 = vmul.f32 %v3178, %v3178
        %v3187 = vmul.f32 %v3179, %v3179
        %v3188 = vmul.f32 %v3180, %v3180
        %3197 = vset.pattern.permute.xlu0 0
        %3198 = vperm.xlu0 %3197, %v3181
        %v3199 = vpop.permute.xlu0 %3198
        %3200 = vset.pattern.permute.xlu0 0
        %3201 = vperm.xlu0 %3200, %v3182
        %v3202 = vpop.permute.xlu0 %3201
        %3203 = vset.pattern.permute.xlu0 0
        %3204 = vperm.xlu0 %3203, %v3183
        %v3205 = vpop.permute.xlu0 %3204
        %3206 = vset.pattern.permute.xlu0 0
        %3207 = vperm.xlu0 %3206, %v3184
        %v3208 = vpop.permute.xlu0 %3207
        %3209 = vset.pattern.permute.xlu0 0
        %3210 = vperm.xlu0 %3209, %v3185
        %v3211 = vpop.permute.xlu0 %3210
        %3212 = vset.pattern.permute.xlu0 0
        %3213 = vperm.xlu0 %3212, %v3186
        %v3214 = vpop.permute.xlu0 %3213
        %3215 = vset.pattern.permute.xlu0 0
        %3216 = vperm.xlu0 %3215, %v3187
        %v3217 = vpop.permute.xlu0 %3216
        %3218 = vset.pattern.permute.xlu0 0
        %3219 = vperm.xlu0 %3218, %v3188
        %v3220 = vpop.permute.xlu0 %3219
        %v3221 = vperm.slane %v3199, %v3126
        %v3222 = vperm.slane %v3202, %v3126
        %v3223 = vperm.slane %v3205, %v3126
        %v3224 = vperm.slane %v3208, %v3126
        %v3225 = vperm.slane %v3211, %v3126
        %v3226 = vperm.slane %v3214, %v3126
        %v3227 = vperm.slane %v3217, %v3126
        %v3228 = vperm.slane %v3220, %v3126
        %v3229 = vsel %vm639, %v3222, %v3221
        %v3230 = vsel %vm635, %v3223, %v3229
        %v3231 = vsel %vm641, %v3224, %v3230
        %v3232 = vsel %vm647, %v3225, %v3231
        %v3233 = vsel %vm653, %v3226, %v3232
        %v3234 = vsel %vm659, %v3227, %v3233
        %v3235 = vsel %vm3141, %v3228, %v3234
        %v3237 = vsel %vm3144, %v3235, 0.0
        %3238 = vadd.xlane.f32.xlu0 %v3237
        %v3239 = vpop.xlane.xlu0 %3238
        %v3240 = vrcp.pop 7.0
        %v3241 = vmul.f32 7.0, %v3240
        %v3242 = vsub.f32 1.0, %v3241
        %v3243 = vmul.f32 %v3240, %v3242
        %v3244 = vadd.f32 %v3240, %v3243
        %vm3245 = vweird.f32 %v3240
        %v3246 = vsel %vm3245, %v3240, %v3244
        %v3247 = vmul.f32 %v3239, %v3246
        %v3248 = vstv %s3115
        %v3249 = vmul.f32 %v3248, %v3173
        %v3250 = vmul.f32 %v3248, %v3174
        %v3251 = vmul.f32 %v3248, %v3175
        %v3252 = vmul.f32 %v3248, %v3176
        %v3253 = vmul.f32 %v3248, %v3177
        %v3254 = vmul.f32 %v3248, %v3178
        %v3255 = vmul.f32 %v3248, %v3179
        %v3256 = vmul.f32 %v3248, %v3180
        %v3257 = vrsqrt.pop %v3247
        %v3258 = vmul.f32 %v3257, %v3247
        %v3259 = vmul.f32 %v3258, %v3257
        %v3260 = vmul.f32 0.5, %v3259
        %v3261 = vsub.f32 1.5, %v3260
        %v3262 = vmul.f32 %v3257, %v3261
        %vm3263 = vweird.f32 %v3247
        %vm3264 = vweird.f32 %v3257
        %vm3265 = vmor %vm3263, %vm3264
        %v3266 = vsel %vm3265, %v3257, %v3262
        %v3268 = vperm.slane %v3266, 0
        %v3269 = vperm.slane %v3266, 1
        %v3270 = vperm.slane %v3266, 2
        %v3271 = vperm.slane %v3266, 3
        %v3272 = vperm.slane %v3266, 4
        %v3273 = vperm.slane %v3266, 5
        %v3274 = vperm.slane %v3266, 6
        %v3275 = vperm.slane %v3266, 7
        %v3284 = vmul.f32 %v3249, %v3268
        %v3285 = vmul.f32 %v3250, %v3269
        %v3286 = vmul.f32 %v3251, %v3270
        %v3287 = vmul.f32 %v3252, %v3271
        %v3288 = vmul.f32 %v3253, %v3272
        %v3289 = vmul.f32 %v3254, %v3273
        %v3290 = vmul.f32 %v3255, %v3274
        %v3291 = vmul.f32 %v3256, %v3275
        %v3292 = vstv %s3116
        %v3293 = vadd.f32 %v3284, %v3292
        %v3294 = vadd.f32 %v3285, %v3292
        %v3295 = vadd.f32 %v3286, %v3292
        %v3296 = vadd.f32 %v3287, %v3292
        %v3297 = vadd.f32 %v3288, %v3292
        %v3298 = vadd.f32 %v3289, %v3292
        %v3299 = vadd.f32 %v3290, %v3292
        %v3300 = vadd.f32 %v3291, %v3292
        %s3301 = sld [smem:[#allocation4 + $0x2]]
        %s3302 = sld [smem:[#allocation4 + $0x3]]
        %v3311 = vperm.slane %v3107, %v3126
        %v3312 = vperm.slane %v3108, %v3126
        %v3313 = vperm.slane %v3109, %v3126
        %v3314 = vperm.slane %v3110, %v3126
        %v3315 = vperm.slane %v3111, %v3126
        %v3316 = vperm.slane %v3112, %v3126
        %v3317 = vperm.slane %v3113, %v3126
        %v3318 = vperm.slane %v3114, %v3126
        %v3319 = vsel %vm639, %v3312, %v3311
        %v3320 = vsel %vm635, %v3313, %v3319
        %v3321 = vsel %vm641, %v3314, %v3320
        %v3322 = vsel %vm647, %v3315, %v3321
        %v3323 = vsel %vm653, %v3316, %v3322
        %v3324 = vsel %vm659, %v3317, %v3323
        %v3325 = vsel %vm3141, %v3318, %v3324
        %v3327 = vsel %vm3144, %v3325, 0.0
        %3328 = vadd.xlane.f32.xlu0 %v3327
        %v3329 = vpop.xlane.xlu0 %3328
        %v3330 = vmul.f32 %v3329, %v3154
        %v3332 = vperm.slane %v3330, 0
        %v3333 = vperm.slane %v3330, 1
        %v3334 = vperm.slane %v3330, 2
        %v3335 = vperm.slane %v3330, 3
        %v3336 = vperm.slane %v3330, 4
        %v3337 = vperm.slane %v3330, 5
        %v3338 = vperm.slane %v3330, 6
        %v3339 = vperm.slane %v3330, 7
        %v3348 = vsub.f32 %v3107, %v3332
        %v3349 = vsub.f32 %v3108, %v3333
        %v3350 = vsub.f32 %v3109, %v3334
        %v3351 = vsub.f32 %v3110, %v3335
        %v3352 = vsub.f32 %v3111, %v3336
        %v3353 = vsub.f32 %v3112, %v3337
        %v3354 = vsub.f32 %v3113, %v3338
        %v3355 = vsub.f32 %v3114, %v3339
        %v3356 = vmul.f32 %v3348, %v3348
        %v3357 = vmul.f32 %v3349, %v3349
        %v3358 = vmul.f32 %v3350, %v3350
        %v3359 = vmul.f32 %v3351, %v3351
        %v3360 = vmul.f32 %v3352, %v3352
        %v3361 = vmul.f32 %v3353, %v3353
        %v3362 = vmul.f32 %v3354, %v3354
        %v3363 = vmul.f32 %v3355, %v3355
        %3372 = vset.pattern.permute.xlu0 0
        %3373 = vperm.xlu0 %3372, %v3356
        %v3374 = vpop.permute.xlu0 %3373
        %3375 = vset.pattern.permute.xlu0 0
        %3376 = vperm.xlu0 %3375, %v3357
        %v3377 = vpop.permute.xlu0 %3376
        %3378 = vset.pattern.permute.xlu0 0
        %3379 = vperm.xlu0 %3378, %v3358
        %v3380 = vpop.permute.xlu0 %3379
        %3381 = vset.pattern.permute.xlu0 0
        %3382 = vperm.xlu0 %3381, %v3359
        %v3383 = vpop.permute.xlu0 %3382
        %3384 = vset.pattern.permute.xlu0 0
        %3385 = vperm.xlu0 %3384, %v3360
        %v3386 = vpop.permute.xlu0 %3385
        %3387 = vset.pattern.permute.xlu0 0
        %3388 = vperm.xlu0 %3387, %v3361
        %v3389 = vpop.permute.xlu0 %3388
        %3390 = vset.pattern.permute.xlu0 0
        %3391 = vperm.xlu0 %3390, %v3362
        %v3392 = vpop.permute.xlu0 %3391
        %3393 = vset.pattern.permute.xlu0 0
        %3394 = vperm.xlu0 %3393, %v3363
        %v3395 = vpop.permute.xlu0 %3394
        %v3396 = vperm.slane %v3374, %v3126
        %v3397 = vperm.slane %v3377, %v3126
        %v3398 = vperm.slane %v3380, %v3126
        %v3399 = vperm.slane %v3383, %v3126
        %v3400 = vperm.slane %v3386, %v3126
        %v3401 = vperm.slane %v3389, %v3126
        %v3402 = vperm.slane %v3392, %v3126
        %v3403 = vperm.slane %v3395, %v3126
        %v3404 = vsel %vm639, %v3397, %v3396
        %v3405 = vsel %vm635, %v3398, %v3404
        %v3406 = vsel %vm641, %v3399, %v3405
        %v3407 = vsel %vm647, %v3400, %v3406
        %v3408 = vsel %vm653, %v3401, %v3407
        %v3409 = vsel %vm659, %v3402, %v3408
        %v3410 = vsel %vm3141, %v3403, %v3409
        %v3412 = vsel %vm3144, %v3410, 0.0
        %3413 = vadd.xlane.f32.xlu0 %v3412
        %v3414 = vpop.xlane.xlu0 %3413
        %v3415 = vmul.f32 %v3414, %v3246
        %v3416 = vstv %s3301
        %v3417 = vmul.f32 %v3416, %v3348
        %v3418 = vmul.f32 %v3416, %v3349
        %v3419 = vmul.f32 %v3416, %v3350
        %v3420 = vmul.f32 %v3416, %v3351
        %v3421 = vmul.f32 %v3416, %v3352
        %v3422 = vmul.f32 %v3416, %v3353
        %v3423 = vmul.f32 %v3416, %v3354
        %v3424 = vmul.f32 %v3416, %v3355
        %v3425 = vrsqrt.pop %v3415
        %v3426 = vmul.f32 %v3425, %v3415
        %v3427 = vmul.f32 %v3426, %v3425
        %v3428 = vmul.f32 0.5, %v3427
        %v3429 = vsub.f32 1.5, %v3428
        %v3430 = vmul.f32 %v3425, %v3429
        %vm3431 = vweird.f32 %v3415
        %vm3432 = vweird.f32 %v3425
        %vm3433 = vmor %vm3431, %vm3432
        %v3434 = vsel %vm3433, %v3425, %v3430
        %v3436 = vperm.slane %v3434, 0
        %v3437 = vperm.slane %v3434, 1
        %v3438 = vperm.slane %v3434, 2
        %v3439 = vperm.slane %v3434, 3
        %v3440 = vperm.slane %v3434, 4
        %v3441 = vperm.slane %v3434, 5
        %v3442 = vperm.slane %v3434, 6
        %v3443 = vperm.slane %v3434, 7
        %v3452 = vmul.f32 %v3417, %v3436
        %v3453 = vmul.f32 %v3418, %v3437
        %v3454 = vmul.f32 %v3419, %v3438
        %v3455 = vmul.f32 %v3420, %v3439
        %v3456 = vmul.f32 %v3421, %v3440
        %v3457 = vmul.f32 %v3422, %v3441
        %v3458 = vmul.f32 %v3423, %v3442
        %v3459 = vmul.f32 %v3424, %v3443
        %v3460 = vstv %s3302
        %v3461 = vadd.f32 %v3452, %v3460
        %v3462 = vadd.f32 %v3453, %v3460
        %v3463 = vadd.f32 %v3454, %v3460
        %v3464 = vadd.f32 %v3455, %v3460
        %v3465 = vadd.f32 %v3456, %v3460
        %v3466 = vadd.f32 %v3457, %v3460
        %v3467 = vadd.f32 %v3458, %v3460
        %v3468 = vadd.f32 %v3459, %v3460
        %vm3469 = vcmp.gt.f32.partialorder %v3461, 20.0
        %vm3470 = vcmp.gt.f32.partialorder %v3462, 20.0
        %vm3471 = vcmp.gt.f32.partialorder %v3463, 20.0
        %vm3472 = vcmp.gt.f32.partialorder %v3464, 20.0
        %vm3473 = vcmp.gt.f32.partialorder %v3465, 20.0
        %vm3474 = vcmp.gt.f32.partialorder %v3466, 20.0
        %vm3475 = vcmp.gt.f32.partialorder %v3467, 20.0
        %vm3476 = vcmp.gt.f32.partialorder %v3468, 20.0
        %v3477 = vmin.f32 %v3461, 20.0
        %v3478 = vmin.f32 %v3462, 20.0
        %v3479 = vmin.f32 %v3463, 20.0
        %v3480 = vmin.f32 %v3464, 20.0
        %v3481 = vmin.f32 %v3465, 20.0
        %v3482 = vmin.f32 %v3466, 20.0
        %v3483 = vmin.f32 %v3467, 20.0
        %v3484 = vmin.f32 %v3468, 20.0
        %v3485 = vmul.f32 %v3477, 1.442695
        %v3486 = vpow.pop %v3485
        %v3487 = vmul.f32 %v3478, 1.442695
        %v3488 = vpow.pop %v3487
        %v3489 = vmul.f32 %v3479, 1.442695
        %v3490 = vpow.pop %v3489
        %v3491 = vmul.f32 %v3480, 1.442695
        %v3492 = vpow.pop %v3491
        %v3493 = vmul.f32 %v3481, 1.442695
        %v3494 = vpow.pop %v3493
        %v3495 = vmul.f32 %v3482, 1.442695
        %v3496 = vpow.pop %v3495
        %v3497 = vmul.f32 %v3483, 1.442695
        %v3498 = vpow.pop %v3497
        %v3499 = vmul.f32 %v3484, 1.442695
        %v3500 = vpow.pop %v3499
        %v3501 = vadd.f32 %v3486, 1.0
        %v3502 = vlog2.pop %v3501
        %v3503 = vmul.f32 %v3502, 0.6931472
        %v3504 = vmul.f32 -0.5, %v3486
        %v3505 = vadd.f32 %v3504, 1.0
        %v3506 = vmul.f32 %v3505, %v3486
        %v3507 = vand.u32 2147483647, %v3486
        %vm3508 = vcmp.lt.f32.partialorder %v3507, 0.0004427343
        %v3509 = vsel %vm3508, %v3506, %v3503
        %v3510 = vadd.f32 %v3488, 1.0
        %v3511 = vlog2.pop %v3510
        %v3512 = vmul.f32 %v3511, 0.6931472
        %v3513 = vmul.f32 -0.5, %v3488
        %v3514 = vadd.f32 %v3513, 1.0
        %v3515 = vmul.f32 %v3514, %v3488
        %v3516 = vand.u32 2147483647, %v3488
        %vm3517 = vcmp.lt.f32.partialorder %v3516, 0.0004427343
        %v3518 = vsel %vm3517, %v3515, %v3512
        %v3519 = vadd.f32 %v3490, 1.0
        %v3520 = vlog2.pop %v3519
        %v3521 = vmul.f32 %v3520, 0.6931472
        %v3522 = vmul.f32 -0.5, %v3490
        %v3523 = vadd.f32 %v3522, 1.0
        %v3524 = vmul.f32 %v3523, %v3490
        %v3525 = vand.u32 2147483647, %v3490
        %vm3526 = vcmp.lt.f32.partialorder %v3525, 0.0004427343
        %v3527 = vsel %vm3526, %v3524, %v3521
        %v3528 = vadd.f32 %v3492, 1.0
        %v3529 = vlog2.pop %v3528
        %v3530 = vmul.f32 %v3529, 0.6931472
        %v3531 = vmul.f32 -0.5, %v3492
        %v3532 = vadd.f32 %v3531, 1.0
        %v3533 = vmul.f32 %v3532, %v3492
        %v3534 = vand.u32 2147483647, %v3492
        %vm3535 = vcmp.lt.f32.partialorder %v3534, 0.0004427343
        %v3536 = vsel %vm3535, %v3533, %v3530
        %v3537 = vadd.f32 %v3494, 1.0
        %v3538 = vlog2.pop %v3537
        %v3539 = vmul.f32 %v3538, 0.6931472
        %v3540 = vmul.f32 -0.5, %v3494
        %v3541 = vadd.f32 %v3540, 1.0
        %v3542 = vmul.f32 %v3541, %v3494
        %v3543 = vand.u32 2147483647, %v3494
        %vm3544 = vcmp.lt.f32.partialorder %v3543, 0.0004427343
        %v3545 = vsel %vm3544, %v3542, %v3539
        %v3546 = vadd.f32 %v3496, 1.0
        %v3547 = vlog2.pop %v3546
        %v3548 = vmul.f32 %v3547, 0.6931472
        %v3549 = vmul.f32 -0.5, %v3496
        %v3550 = vadd.f32 %v3549, 1.0
        %v3551 = vmul.f32 %v3550, %v3496
        %v3552 = vand.u32 2147483647, %v3496
        %vm3553 = vcmp.lt.f32.partialorder %v3552, 0.0004427343
        %v3554 = vsel %vm3553, %v3551, %v3548
        %v3555 = vadd.f32 %v3498, 1.0
        %v3556 = vlog2.pop %v3555
        %v3557 = vmul.f32 %v3556, 0.6931472
        %v3558 = vmul.f32 -0.5, %v3498
        %v3559 = vadd.f32 %v3558, 1.0
        %v3560 = vmul.f32 %v3559, %v3498
        %v3561 = vand.u32 2147483647, %v3498
        %vm3562 = vcmp.lt.f32.partialorder %v3561, 0.0004427343
        %v3563 = vsel %vm3562, %v3560, %v3557
        %v3564 = vadd.f32 %v3500, 1.0
        %v3565 = vlog2.pop %v3564
        %v3566 = vmul.f32 %v3565, 0.6931472
        %v3567 = vmul.f32 -0.5, %v3500
        %v3568 = vadd.f32 %v3567, 1.0
        %v3569 = vmul.f32 %v3568, %v3500
        %v3570 = vand.u32 2147483647, %v3500
        %vm3571 = vcmp.lt.f32.partialorder %v3570, 0.0004427343
        %v3572 = vsel %vm3571, %v3569, %v3566
        %v3573 = vsel %vm3469, %v3461, %v3509
        %v3574 = vsel %vm3470, %v3462, %v3518
        %v3575 = vsel %vm3471, %v3463, %v3527
        %v3576 = vsel %vm3472, %v3464, %v3536
        %v3577 = vsel %vm3473, %v3465, %v3545
        %v3578 = vsel %vm3474, %v3466, %v3554
        %v3579 = vsel %vm3475, %v3467, %v3563
        %v3580 = vsel %vm3476, %v3468, %v3572
        %3589 = vset.pattern.permute.xlu0 0
        %3590 = vperm.xlu0 %3589, %v3293
        %v3591 = vpop.permute.xlu0 %3590
        %3592 = vset.pattern.permute.xlu0 0
        %3593 = vperm.xlu0 %3592, %v3294
        %v3594 = vpop.permute.xlu0 %3593
        %3595 = vset.pattern.permute.xlu0 0
        %3596 = vperm.xlu0 %3595, %v3295
        %v3597 = vpop.permute.xlu0 %3596
        %3598 = vset.pattern.permute.xlu0 0
        %3599 = vperm.xlu0 %3598, %v3296
        %v3600 = vpop.permute.xlu0 %3599
        %3601 = vset.pattern.permute.xlu0 0
        %3602 = vperm.xlu0 %3601, %v3297
        %v3603 = vpop.permute.xlu0 %3602
        %3604 = vset.pattern.permute.xlu0 0
        %3605 = vperm.xlu0 %3604, %v3298
        %v3606 = vpop.permute.xlu0 %3605
        %3607 = vset.pattern.permute.xlu0 0
        %3608 = vperm.xlu0 %3607, %v3299
        %v3609 = vpop.permute.xlu0 %3608
        %3610 = vset.pattern.permute.xlu0 0
        %3611 = vperm.xlu0 %3610, %v3300
        %v3612 = vpop.permute.xlu0 %3611
        %v3613 = vperm.slane %v3591, %v3126
        %v3614 = vperm.slane %v3594, %v3126
        %v3615 = vperm.slane %v3597, %v3126
        %v3616 = vperm.slane %v3600, %v3126
        %v3617 = vperm.slane %v3603, %v3126
        %v3618 = vperm.slane %v3606, %v3126
        %v3619 = vperm.slane %v3609, %v3126
        %v3620 = vperm.slane %v3612, %v3126
        %v3621 = vsel %vm639, %v3614, %v3613
        %v3622 = vsel %vm635, %v3615, %v3621
        %v3623 = vsel %vm641, %v3616, %v3622
        %v3624 = vsel %vm647, %v3617, %v3623
        %v3625 = vsel %vm653, %v3618, %v3624
        %v3626 = vsel %vm659, %v3619, %v3625
        %v3627 = vsel %vm3141, %v3620, %v3626
        %v3629 = vsel %vm3144, %v3627, 0.0
        %3638 = vset.pattern.permute.xlu0 0
        %3639 = vperm.xlu0 %3638, %v3573
        %v3640 = vpop.permute.xlu0 %3639
        %3641 = vset.pattern.permute.xlu0 0
        %3642 = vperm.xlu0 %3641, %v3574
        %v3643 = vpop.permute.xlu0 %3642
        %3644 = vset.pattern.permute.xlu0 0
        %3645 = vperm.xlu0 %3644, %v3575
        %v3646 = vpop.permute.xlu0 %3645
        %3647 = vset.pattern.permute.xlu0 0
        %3648 = vperm.xlu0 %3647, %v3576
        %v3649 = vpop.permute.xlu0 %3648
        %3650 = vset.pattern.permute.xlu0 0
        %3651 = vperm.xlu0 %3650, %v3577
        %v3652 = vpop.permute.xlu0 %3651
        %3653 = vset.pattern.permute.xlu0 0
        %3654 = vperm.xlu0 %3653, %v3578
        %v3655 = vpop.permute.xlu0 %3654
        %3656 = vset.pattern.permute.xlu0 0
        %3657 = vperm.xlu0 %3656, %v3579
        %v3658 = vpop.permute.xlu0 %3657
        %3659 = vset.pattern.permute.xlu0 0
        %3660 = vperm.xlu0 %3659, %v3580
        %v3661 = vpop.permute.xlu0 %3660
        %v3662 = vperm.slane %v3640, %v3126
        %v3663 = vperm.slane %v3643, %v3126
        %v3664 = vperm.slane %v3646, %v3126
        %v3665 = vperm.slane %v3649, %v3126
        %v3666 = vperm.slane %v3652, %v3126
        %v3667 = vperm.slane %v3655, %v3126
        %v3668 = vperm.slane %v3658, %v3126
        %v3669 = vperm.slane %v3661, %v3126
        %v3670 = vsel %vm639, %v3663, %v3662
        %v3671 = vsel %vm635, %v3664, %v3670
        %v3672 = vsel %vm641, %v3665, %v3671
        %v3673 = vsel %vm647, %v3666, %v3672
        %v3674 = vsel %vm653, %v3667, %v3673
        %v3675 = vsel %vm659, %v3668, %v3674
        %v3676 = vsel %vm3141, %v3669, %v3675
        %v3678 = vsel %vm3144, %v3676, 0.0
        %s3679 = sld [smem:[#allocation3 + %s35]]
        %v3680 = vstv %s3679
        %vm3681 = vcmp.lt.s32.totalorder %v3126, %v3680
        %v3682 = vsel %vm3681, %v3629, -999.0
        %v3683 = vsel %vm3681, %v3678, 0.001
        %3684 = vst [vmem:[%s394] sm:$0xff] %v3682
        %3685 = vst [vmem:[%s394 + $0x8] sm:$0xff] %v3683
        %s3686 = sand.u32 %s254, 1
        %s3687 = sand.u32 %s254, 1
        %s3688 = smul.addr %s3687, 16
        %s3689 = scalar_lea.vmem [#allocation8], %s3688
        // Predicated region
        $region65: #{inference_network_forward.1} parent=55 // pred_check
          %p3690 = pneg %p264
        $region66: #{inference_network_forward.1} parent=55 // pred_check_branch
          %3692 = sbr.rel (%p3690) target = $region68
        $region67: #{inference_network_forward.1} parent=55 // pred_region
          %s3693 = sadd.s32 %s36, %s35
          %s3694 = smul.addr %s3693, 8
          %s3695 = scalar_lea.vmem %s10, %s3694
          // Predicated region
          $region69: #{inference_network_forward.1} parent=67 // pred_check
            _
          $region70: #{inference_network_forward.1} parent=67 // pred_check_branch
            %3697 = sbr.rel (0) target = $region72
          $region71: #{inference_network_forward.1} parent=67 // pred_region
            // Predicated region
            $region73: #{inference_network_forward.1} parent=71 // pred_check
              _
            $region74: #{inference_network_forward.1} parent=71 // pred_check_branch
              %3699 = sbr.rel (0) target = $region76
            $region75: #{inference_network_forward.1} parent=71 // pred_region
              // Predicated region
              $region88: #{inference_network_forward.1} parent=75 // pred_check
                _
              $region89: #{inference_network_forward.1} parent=75 // pred_check_branch
                %3717 = sbr.rel (0) target = $region91
              $region90: #{inference_network_forward.1} parent=75 // pred_region
                loop: start=0, step=1, limit=1
                $region92: #{inference_network_forward.1} parent=90 // loop_pre_header
                  _
                $region93: #{inference_network_forward.1} parent=90 // loop_header
                  %s3719 = sphi 0, %s3723
                  %p3720 = scmp.ge.s32.totalorder %s3719, 1
                  %s3724 = sphi %s3689, %s3689
                  %s3725 = sphi %s3695, %s3695
                $region94: #{inference_network_forward.1} parent=90 // loop_header_branch
                  %3722 = sbr.rel (%p3720) target = $region98
                $region95: #{inference_network_forward.1} parent=90 // loop_body
                  %v3726 = vld [vmem:[%s3724] sm:$0xff]
                  %3727 = vst [vmem:[%s3725] sm:$0xff] %v3726
                  %v3728 = vld [vmem:[%s3724 + $0x8] sm:$0xff]
                  %3729 = vst [vmem:[%s3725 + $0x10] sm:$0xff] %v3728
                $region96: #{inference_network_forward.1} parent=90 // loop_footer
                  %s3723 = sadd.s32 1, %s3719
                $region97: #{inference_network_forward.1} parent=90 // loop_footer_branch
                  %3718 = sbr.rel target = $region93
                $region98: #{inference_network_forward.1} parent=90 // loop_exit
                  _
              $region91: #{inference_network_forward.1} parent=75 // pred_fallthru
                _
              // Predicated region
              $region99: #{inference_network_forward.1} parent=75 // pred_check
                _
              $region100: #{inference_network_forward.1} parent=75 // pred_check_branch
                %3731 = sbr.rel target = $region102
              $region101: #{inference_network_forward.1} parent=75 // pred_region
                _
              $region102: #{inference_network_forward.1} parent=75 // pred_fallthru
                _
            $region76: #{inference_network_forward.1} parent=71 // pred_fallthru
              _
            // Predicated region
            $region77: #{inference_network_forward.1} parent=71 // pred_check
              _
            $region78: #{inference_network_forward.1} parent=71 // pred_check_branch
              %3701 = sbr.rel target = $region80
            $region79: #{inference_network_forward.1} parent=71 // pred_region
              %s3703 = ssub.s32 256, 1
              loop: start=0, step=1, limit=1
              $region81: #{inference_network_forward.1} parent=79 // loop_pre_header
                _
              $region82: #{inference_network_forward.1} parent=79 // loop_header
                %s3705 = sphi 0, %s3709
                %p3706 = scmp.ge.s32.totalorder %s3705, 1
                %s3710 = sphi %s3689, %s3689
                %s3711 = sphi %s3695, %s3695
              $region83: #{inference_network_forward.1} parent=79 // loop_header_branch
                %3708 = sbr.rel (%p3706) target = $region87
              $region84: #{inference_network_forward.1} parent=79 // loop_body
                %v3712 = vld [vmem:[%s3710] sm:%s3703]
                %3713 = vst [vmem:[%s3711] sm:%s3703] %v3712
                %v3714 = vld [vmem:[%s3710 + $0x8] sm:%s3703]
                %3715 = vst [vmem:[%s3711 + $0x10] sm:%s3703] %v3714
              $region85: #{inference_network_forward.1} parent=79 // loop_footer
                %s3709 = sadd.s32 1, %s3705
              $region86: #{inference_network_forward.1} parent=79 // loop_footer_branch
                %3704 = sbr.rel target = $region82
              $region87: #{inference_network_forward.1} parent=79 // loop_exit
                _
            $region80: #{inference_network_forward.1} parent=71 // pred_fallthru
              _
          $region72: #{inference_network_forward.1} parent=67 // pred_fallthru
            _
          %3732 = vnop
        $region68: #{inference_network_forward.1} parent=55 // pred_fallthru
          _
      $region56: #{inference_network_forward.1} parent=5 // pred_fallthru
        _
      %p3733 = scmp.le.s32.totalorder 2, %s26
      // Predicated region
      $region103: #{inference_network_forward.1} parent=5 // pred_check
        %p3734 = pneg %p3733
      $region104: #{inference_network_forward.1} parent=5 // pred_check_branch
        %3736 = sbr.rel (%p3734) target = $region106
      $region105: #{inference_network_forward.1} parent=5 // pred_region
        %s3737 = ssub.s32 %s26, 2
        // Predicated region
        $region107: #{inference_network_forward.1} parent=105 // pred_check
          %p3738 = pneg %p270
        $region108: #{inference_network_forward.1} parent=105 // pred_check_branch
          %3740 = sbr.rel (%p3738) target = $region110
        $region109: #{inference_network_forward.1} parent=105 // pred_region
          %s3741 = sand.u32 %s255, 1
          %s3742 = sand.u32 %s255, 1
          %s3743 = smul.addr %s3742, 16
          %s3744 = scalar_lea.vmem [#allocation8], %s3743
        $region110: #{inference_network_forward.1} parent=105 // pred_fallthru
          _
      $region106: #{inference_network_forward.1} parent=5 // pred_fallthru
        _
    $region6: #{inference_network_forward.1} parent=1 // loop_footer
      %s30 = sadd.s32 1, %s26
    $region7: #{inference_network_forward.1} parent=1 // loop_footer_branch
      %25 = sbr.rel target = $region3
    $region8: #{inference_network_forward.1} parent=1 // loop_exit
      _
    %3745 = vsyncpa [#allocation5], 1
    %s3746 = scalar_lea.sflag [#allocation5], 1
    %3747 = vsyncpa %s3746, 1
    %3748 = vsyncpa [#allocation6], 1
    %s3749 = scalar_lea.sflag [#allocation6], 1
    %3750 = vsyncpa %s3749, 1

</llo_original>
